<compile_context>
chip_gen: v7x
topology: tpu7x:2x2x1
jax: 0.10.0
libtpu: 0.0.40
codegen_flags: <defaults>
</compile_context>

<pallas_src>
import math
import functools

import jax
import jax.numpy as jnp
from jax.experimental import pallas as pl
from jax.experimental.pallas import tpu as pltpu


def mha_layer_kernel(x_ref, wqkv_ref, wo_ref, ln_ref, w1_ref, b1_ref, w2_ref,
                     b2_ref, out_ref, *, n_heads, key_dim, eps, bt, seq):
    D = x_ref.shape[-1]
    HK = n_heads * key_dim
    rows = bt * seq
    bf16 = jnp.bfloat16

    x = x_ref[...].reshape(rows, D)                        # (rows, D) f32

    lnp = ln_ref[...]                                      # (4, D) f32
    g1, be1, g2, be2 = lnp[0:1], lnp[1:2], lnp[2:3], lnp[3:4]

    def layer_norm(z, g, b):
        # Single-pass stats: two independent XLU reductions, centered value
        # computed once (var = E[z^2] - E[z]^2).
        mu = jnp.mean(z, axis=-1, keepdims=True)
        msq = jnp.mean(z * z, axis=-1, keepdims=True)
        var = msq - mu * mu
        return (z - mu) * jax.lax.rsqrt(var + eps) * g + b

    # ---- LN1 + fused Q/K/V projection (one full-lane-width MXU matmul) ----
    # norm_factor is already folded into the Q columns of wqkv (wrapper).
    y1 = layer_norm(x, g1, be1)                            # f32
    qkv = jnp.dot(y1.astype(bf16), wqkv_ref[...],
                  preferred_element_type=jnp.float32)      # (rows, 3*HK) f32
    q_all = qkv[:, 0 * HK:1 * HK]
    k_all = qkv[:, 1 * HK:2 * HK]
    v_all = qkv[:, 2 * HK:3 * HK]

    # ---- per-head attention, batched over the batch tile (single path) ----
    head_outs = []
    for h in range(n_heads):
        sl = slice(h * key_dim, (h + 1) * key_dim)
        q3 = q_all[:, sl].astype(bf16).reshape(bt, seq, key_dim)
        k3 = k_all[:, sl].astype(bf16).reshape(bt, seq, key_dim)
        v3 = v_all[:, sl].astype(bf16).reshape(bt, seq, key_dim)
        s = jnp.einsum('bqk,btk->bqt', q3, k3,
                       preferred_element_type=jnp.float32)     # (bt, seq, seq)
        s = s - jnp.max(s, axis=-1, keepdims=True)
        e = jnp.exp(s)
        a = e * pl.reciprocal(jnp.sum(e, axis=-1, keepdims=True), approx=True)
        ho = jnp.einsum('bqt,btk->bqk', a.astype(bf16), v3,
                        preferred_element_type=jnp.float32)    # (bt, seq, kd)
        head_outs.append(ho.reshape(rows, key_dim))

    heads_cat = jnp.concatenate(head_outs, axis=-1)        # (rows, HK) f32
    mha = jnp.dot(heads_cat.astype(bf16), wo_ref[...],
                  preferred_element_type=jnp.float32)      # (rows, D)

    x1 = x + mha                                           # skip connection 1

    # ---- LN2 + FFN (Linear(D,512) -> ReLU -> Linear(512,D)) ----
    y2 = layer_norm(x1, g2, be2)
    hdn = jnp.dot(y2.astype(bf16), w1_ref[...],
                  preferred_element_type=jnp.float32) + b1_ref[...]
    hdn = jnp.maximum(hdn, 0.0)
    ffn = jnp.dot(hdn.astype(bf16), w2_ref[...],
                  preferred_element_type=jnp.float32) + b2_ref[...]

    out_ref[...] = (x1 + ffn).reshape(bt, seq, D)          # skip connection 2


def _pick_batch_tile(B, N, target_rows=256, min_rows_per_step=128):
    """Largest divisor Bt of B with Bt*N <= target_rows.  Keep >= 2 grid steps
    (v7x megacore) only when each step still has >= min_rows_per_step rows;
    otherwise run everything in a single grid step (saves ~0.35us/step and
    keeps MXU row occupancy high on the single-TC v5e/v6e)."""
    divisors = [bt for bt in range(1, B + 1) if B % bt == 0]
    fits = [bt for bt in divisors if bt * N <= max(target_rows, N)]
    split = [bt for bt in fits if (B // bt) >= 2 and bt * N >= min_rows_per_step]
    if split:
        return max(split)
    return max(fits)


def pack_params(params, *, n_heads):
    """One-time weight packing (call OUTSIDE the per-step jitted forward)."""
    (wq, wk, wv, wo, ln1g, ln1b, ln2g, ln2b, w1, b1, w2, b2) = params
    _, D, kd = wq.shape
    HK = n_heads * kd
    norm_factor = 1.0 / math.sqrt(kd)

    pack_proj = lambda w: jnp.transpose(w, (1, 0, 2)).reshape(D, HK)
    # Fold the score scale into the Q columns (power-of-two for kd=16 -> exact).
    wqkv = jnp.concatenate([pack_proj(wq) * norm_factor,
                            pack_proj(wk),
                            pack_proj(wv)], axis=1).astype(jnp.bfloat16)  # (D, 3*HK)
    wo_p = wo.reshape(HK, D).astype(jnp.bfloat16)                         # (HK, D)
    lnp = jnp.concatenate([ln1g, ln1b, ln2g, ln2b], axis=0)               # (4, D) f32
    w1b = w1.astype(jnp.bfloat16)                                         # (D, 512)
    w2b = w2.astype(jnp.bfloat16)                                         # (512, D)
    return (wqkv, wo_p, lnp, w1b, b1, w2b, b2)


def multi_head_attention_layer(x, packed, *, n_heads, batch_tile=None,
                               target_rows=256):
    (wqkv, wo_p, lnp, w1b, b1, w2b, b2) = packed
    B, N, D = x.shape
    key_dim = D // n_heads
    eps = 1e-5

    if batch_tile is None:
        batch_tile = _pick_batch_tile(B, N, target_rows=target_rows)
    assert B % batch_tile == 0, "batch_tile must divide the batch size"
    grid = (B // batch_tile,)

    full = lambda a: pl.BlockSpec(a.shape, lambda b: (0,) * a.ndim)

    kernel = functools.partial(
        mha_layer_kernel, n_heads=n_heads, key_dim=key_dim, eps=eps,
        bt=batch_tile, seq=N)

    # NOTE(v7x): if target_rows is pushed past ~1-2K rows the f32 intermediates
    # (qkv rows*3HK, hdn rows*512, per-head scores) approach the 32 MiB default
    # scoped VMEM on v7x (64 MiB physical) -- raise vmem_limit_bytes then.
    # TODO(synk): optional bf16 output/input would halve the only per-step HBM
    # DMA; kept f32 to match the PyTorch module's dtype.
    return pl.pallas_call(
        kernel,
        out_shape=jax.ShapeDtypeStruct((B, N, D), jnp.float32),
        grid_spec=pltpu.PrefetchScalarGridSpec(
            num_scalar_prefetch=0,
            grid=grid,
            in_specs=[
                pl.BlockSpec((batch_tile, N, D), lambda b: (b, 0, 0)),  # x tile
                full(wqkv), full(wo_p), full(lnp),
                full(w1b), full(b1), full(w2b), full(b2),
            ],
            out_specs=pl.BlockSpec((batch_tile, N, D), lambda b: (b, 0, 0)),
        ),
        compiler_params=pltpu.CompilerParams(
            dimension_semantics=("parallel",)),
    )(x, wqkv, wo_p, lnp, w1b, b1, w2b, b2)


def init_params(key, embedding_dim, n_heads, ffn_hidden=512):
    """Deterministic init mirroring the PyTorch module's __init__."""
    D = embedding_dim
    kd = D // n_heads
    ks = jax.random.split(key, 8)
    u = lambda k, shp, bound: jax.random.uniform(k, shp, jnp.float32, -bound, bound)

    wq = u(ks[0], (n_heads, D, kd), 1.0 / math.sqrt(kd))
    wk = u(ks[1], (n_heads, D, kd), 1.0 / math.sqrt(kd))
    wv = u(ks[2], (n_heads, D, kd), 1.0 / math.sqrt(kd))
    wo = u(ks[3], (n_heads, kd, D), 1.0 / math.sqrt(D))

    # LayerNorm defaults: weight=1, bias=0
    ln1g = jnp.ones((1, D), jnp.float32)
    ln1b = jnp.zeros((1, D), jnp.float32)
    ln2g = jnp.ones((1, D), jnp.float32)
    ln2b = jnp.zeros((1, D), jnp.float32)

    # nn.Linear init: U(-1/sqrt(fan_in), 1/sqrt(fan_in)); stored as (in, out)
    w1 = u(ks[4], (D, ffn_hidden), 1.0 / math.sqrt(D))
    b1 = u(ks[5], (1, ffn_hidden), 1.0 / math.sqrt(D))
    w2 = u(ks[6], (ffn_hidden, D), 1.0 / math.sqrt(ffn_hidden))
    b2 = u(ks[7], (1, D), 1.0 / math.sqrt(ffn_hidden))

    return (wq, wk, wv, wo, ln1g, ln1b, ln2g, ln2b, w1, b1, w2, b2)


def reference_forward(x, params, *, n_heads, eps=1e-5):
    """Pure-JAX f32 mirror of the PyTorch forward (semantic ground truth)."""
    (wq, wk, wv, wo, ln1g, ln1b, ln2g, ln2b, w1, b1, w2, b2) = params
    B, N, D = x.shape
    kd = D // n_heads
    nf = 1.0 / math.sqrt(kd)

    def ln(z, g, b):
        m = jnp.mean(z, -1, keepdims=True)
        v = jnp.mean((z - m) ** 2, -1, keepdims=True)
        return (z - m) / jnp.sqrt(v + eps) * g + b

    y = ln(x, ln1g[0], ln1b[0])
    yf = y.reshape(-1, D)
    Q = jnp.einsum('nd,hdk->hnk', yf, wq).reshape(n_heads, B, N, kd)
    K = jnp.einsum('nd,hdk->hnk', yf, wk).reshape(n_heads, B, N, kd)
    V = jnp.einsum('nd,hdk->hnk', yf, wv).reshape(n_heads, B, N, kd)
    U = nf * jnp.einsum('hbqk,hbtk->hbqt', Q, K)
    A = jax.nn.softmax(U, axis=-1)
    heads = jnp.einsum('hbqt,hbtk->hbqk', A, V)
    heads = jnp.transpose(heads, (1, 2, 0, 3)).reshape(-1, n_heads * kd)
    mha = (heads @ wo.reshape(n_heads * kd, D)).reshape(B, N, D)

    x1 = x + mha
    y2 = ln(x1, ln2g[0], ln2b[0])
    f = jnp.maximum(y2 @ w1 + b1[0], 0.0) @ w2 + b2[0]
    return x1 + f


def reference_forward_bf16(x, packed, *, n_heads, eps=1e-5):
    """Pure-JAX mirror of the kernel's numerics: same packed bf16 weights,
    f32 accumulation.  (Softmax uses exact division; the kernel's approx
    reciprocal differs only at the ~1e-4 relative level, within tolerance.)"""
    (wqkv, wo_p, lnp, w1b, b1, w2b, b2) = packed
    B, N, D = x.shape
    HK = wo_p.shape[0]
    kd = HK // n_heads
    bf = jnp.bfloat16
    g1, be1, g2, be2 = lnp[0:1], lnp[1:2], lnp[2:3], lnp[3:4]

    def ln(z, g, b):
        mu = jnp.mean(z, -1, keepdims=True)
        msq = jnp.mean(z * z, -1, keepdims=True)
        var = msq - mu * mu
        return (z - mu) * jax.lax.rsqrt(var + eps) * g + b

    xf = x.reshape(B * N, D)
    y1 = ln(xf, g1, be1)
    qkv = jnp.dot(y1.astype(bf), wqkv, preferred_element_type=jnp.float32)
    q = qkv[:, :HK].reshape(B, N, n_heads, kd)
    k = qkv[:, HK:2 * HK].reshape(B, N, n_heads, kd)
    v = qkv[:, 2 * HK:].reshape(B, N, n_heads, kd)
    s = jnp.einsum('bqhk,bthk->bhqt', q.astype(bf), k.astype(bf),
                   preferred_element_type=jnp.float32)
    s = s - jnp.max(s, -1, keepdims=True)
    e = jnp.exp(s)
    a = e / jnp.sum(e, -1, keepdims=True)
    heads = jnp.einsum('bhqt,bthk->bqhk', a.astype(bf), v.astype(bf),
                       preferred_element_type=jnp.float32)
    heads = heads.reshape(B * N, HK)
    mha = jnp.dot(heads.astype(bf), wo_p, preferred_element_type=jnp.float32)
    x1 = xf + mha
    y2 = ln(x1, g2, be2)
    hdn = jnp.maximum(
        jnp.dot(y2.astype(bf), w1b, preferred_element_type=jnp.float32) + b1, 0.0)
    ffn = jnp.dot(hdn.astype(bf), w2b, preferred_element_type=jnp.float32) + b2
    return (x1 + ffn).reshape(B, N, D)


if __name__ == "__main__":
    B, N, D, H = 2, 8, 128, 8   # batch, graph size, embedding_dim, n_heads

    key = jax.random.PRNGKey(0)
    kx, kp = jax.random.split(key)
    x = jax.random.normal(kx, (B, N, D), jnp.float32)
    params = init_params(kp, D, H)

    # Pack / cast weights once, outside the jitted per-step forward.
    packed = pack_params(params, n_heads=H)

    fwd = jax.jit(functools.partial(multi_head_attention_layer, n_heads=H))
    out = jax.block_until_ready(fwd(x, packed))
    assert out.shape == (B, N, D)

    ref_bf16 = reference_forward_bf16(x, packed, n_heads=H)
    ref_f32 = reference_forward(x, params, n_heads=H)

    # Tight check vs a reference that mirrors the kernel's bf16-MXU numerics.
    assert jnp.allclose(out, ref_bf16, atol=1e-2, rtol=1e-2), \
        "mismatch vs bf16-mirror reference"
    # Loose sanity check vs the full-f32 reference of the PyTorch module.
    assert jnp.allclose(out, ref_f32, atol=1e-1, rtol=1e-1), \
        "mismatch vs f32 reference"

    print("KERNEL_OK")
</pallas_src>

<mosaic_0001>
module attributes {stable_mosaic.version = 11 : i64} {
  func.func @mha_layer_kernel(%arg0: i32, %arg1: memref<2x8x128xf32, #tpu.memory_space<vmem>>, %arg2: memref<128x384xbf16, #tpu.memory_space<vmem>>, %arg3: memref<128x128xbf16, #tpu.memory_space<vmem>>, %arg4: memref<4x128xf32, #tpu.memory_space<vmem>>, %arg5: memref<128x512xbf16, #tpu.memory_space<vmem>>, %arg6: memref<1x512xf32, #tpu.memory_space<vmem>>, %arg7: memref<512x128xbf16, #tpu.memory_space<vmem>>, %arg8: memref<1x128xf32, #tpu.memory_space<vmem>>, %arg9: memref<2x8x128xf32, #tpu.memory_space<vmem>>) attributes {dimension_semantics = [#tpu.dimension_semantics<parallel>], iteration_bounds = array<i64: 1>, scalar_prefetch = 0 : i64, scratch_operands = 0 : i64, tpu.core_type = #tpu.core_type<tc>, window_params = [{transform_indices = @transform_0, window_bounds = array<i64: 2, 8, 128>}, {pipeline_mode = #tpu.pipeline_mode<synchronous>, transform_indices = @transform_1, window_bounds = array<i64: 128, 384>}, {pipeline_mode = #tpu.pipeline_mode<synchronous>, transform_indices = @transform_2, window_bounds = array<i64: 128, 128>}, {pipeline_mode = #tpu.pipeline_mode<synchronous>, transform_indices = @transform_3, window_bounds = array<i64: 4, 128>}, {pipeline_mode = #tpu.pipeline_mode<synchronous>, transform_indices = @transform_4, window_bounds = array<i64: 128, 512>}, {pipeline_mode = #tpu.pipeline_mode<synchronous>, transform_indices = @transform_5, window_bounds = array<i64: 1, 512>}, {pipeline_mode = #tpu.pipeline_mode<synchronous>, transform_indices = @transform_6, window_bounds = array<i64: 512, 128>}, {pipeline_mode = #tpu.pipeline_mode<synchronous>, transform_indices = @transform_7, window_bounds = array<i64: 1, 128>}, {transform_indices = @transform_8, window_bounds = array<i64: 2, 8, 128>}]} {
    %c0 = arith.constant 0 : index
    %c0_0 = arith.constant 0 : index
    %c0_1 = arith.constant 0 : index
    %0 = vector.load %arg1[%c0, %c0_0, %c0_1] : memref<2x8x128xf32, #tpu.memory_space<vmem>>, vector<2x8x128xf32>
    %1 = vector.shape_cast %0 : vector<2x8x128xf32> to vector<16x128xf32>
    %c0_2 = arith.constant 0 : index
    %c0_3 = arith.constant 0 : index
    %2 = vector.load %arg4[%c0_2, %c0_3] : memref<4x128xf32, #tpu.memory_space<vmem>>, vector<4x128xf32>
    %3 = vector.extract_strided_slice %2 {offsets = [0, 0], sizes = [1, 128], strides = [1, 1]} : vector<4x128xf32> to vector<1x128xf32>
    %4 = vector.extract_strided_slice %2 {offsets = [1, 0], sizes = [1, 128], strides = [1, 1]} : vector<4x128xf32> to vector<1x128xf32>
    %5 = vector.extract_strided_slice %2 {offsets = [2, 0], sizes = [1, 128], strides = [1, 1]} : vector<4x128xf32> to vector<1x128xf32>
    %6 = vector.extract_strided_slice %2 {offsets = [3, 0], sizes = [1, 128], strides = [1, 1]} : vector<4x128xf32> to vector<1x128xf32>
    %cst = arith.constant dense<0.000000e+00> : vector<16xf32>
    %7 = vector.multi_reduction <add>, %1, %cst [1] : vector<16x128xf32> to vector<16xf32>
    %8 = vector.shape_cast %7 : vector<16xf32> to vector<16x1xf32>
    %cst_4 = arith.constant 1.280000e+02 : f32
    %9 = vector.broadcast %cst_4 : f32 to vector<16x1xf32>
    %10 = arith.divf %8, %9 : vector<16x1xf32>
    %11 = arith.mulf %1, %1 : vector<16x128xf32>
    %cst_5 = arith.constant dense<0.000000e+00> : vector<16xf32>
    %12 = vector.multi_reduction <add>, %11, %cst_5 [1] : vector<16x128xf32> to vector<16xf32>
    %13 = vector.shape_cast %12 : vector<16xf32> to vector<16x1xf32>
    %cst_6 = arith.constant 1.280000e+02 : f32
    %14 = vector.broadcast %cst_6 : f32 to vector<16x1xf32>
    %15 = arith.divf %13, %14 : vector<16x1xf32>
    %16 = arith.mulf %10, %10 : vector<16x1xf32>
    %17 = arith.subf %15, %16 : vector<16x1xf32>
    %18 = vector.broadcast %10 : vector<16x1xf32> to vector<16x128xf32>
    %19 = arith.subf %1, %18 : vector<16x128xf32>
    %cst_7 = arith.constant 9.99999974E-6 : f32
    %20 = vector.broadcast %cst_7 : f32 to vector<16x1xf32>
    %21 = arith.addf %17, %20 : vector<16x1xf32>
    %22 = math.rsqrt %21 : vector<16x1xf32>
    %23 = vector.broadcast %22 : vector<16x1xf32> to vector<16x128xf32>
    %24 = arith.mulf %19, %23 : vector<16x128xf32>
    %25 = vector.broadcast %3 : vector<1x128xf32> to vector<16x128xf32>
    %26 = arith.mulf %24, %25 : vector<16x128xf32>
    %27 = vector.broadcast %4 : vector<1x128xf32> to vector<16x128xf32>
    %28 = arith.addf %26, %27 : vector<16x128xf32>
    %29 = arith.truncf %28 : vector<16x128xf32> to vector<16x128xbf16>
    %c0_8 = arith.constant 0 : index
    %c0_9 = arith.constant 0 : index
    %30 = vector.load %arg2[%c0_8, %c0_9] : memref<128x384xbf16, #tpu.memory_space<vmem>>, vector<128x384xbf16>
    %cst_10 = arith.constant dense<0.000000e+00> : vector<16x384xf32>
    %31 = tpu.matmul %29, %30, %cst_10 {dimension_numbers = #tpu.dot_dimension_numbers<[1], [0], [0], [1], [0, 0, 1, 1], [], []>} : vector<16x128xbf16>, vector<128x384xbf16>, vector<16x384xf32> -> vector<16x384xf32>
    %32 = vector.extract_strided_slice %31 {offsets = [0, 0], sizes = [16, 128], strides = [1, 1]} : vector<16x384xf32> to vector<16x128xf32>
    %33 = vector.extract_strided_slice %31 {offsets = [0, 128], sizes = [16, 128], strides = [1, 1]} : vector<16x384xf32> to vector<16x128xf32>
    %34 = vector.extract_strided_slice %31 {offsets = [0, 256], sizes = [16, 128], strides = [1, 1]} : vector<16x384xf32> to vector<16x128xf32>
    %35 = vector.extract_strided_slice %32 {offsets = [0, 0], sizes = [16, 16], strides = [1, 1]} : vector<16x128xf32> to vector<16x16xf32>
    %36 = arith.truncf %35 : vector<16x16xf32> to vector<16x16xbf16>
    %37 = vector.shape_cast %36 : vector<16x16xbf16> to vector<2x8x16xbf16>
    %38 = vector.extract_strided_slice %33 {offsets = [0, 0], sizes = [16, 16], strides = [1, 1]} : vector<16x128xf32> to vector<16x16xf32>
    %39 = arith.truncf %38 : vector<16x16xf32> to vector<16x16xbf16>
    %40 = vector.shape_cast %39 : vector<16x16xbf16> to vector<2x8x16xbf16>
    %41 = vector.extract_strided_slice %34 {offsets = [0, 0], sizes = [16, 16], strides = [1, 1]} : vector<16x128xf32> to vector<16x16xf32>
    %42 = arith.truncf %41 : vector<16x16xf32> to vector<16x16xbf16>
    %43 = vector.shape_cast %42 : vector<16x16xbf16> to vector<2x8x16xbf16>
    "tpu.trace_start"() <{level = 10 : i32, message = "bqk,btk->bqt"}> : () -> ()
    %cst_11 = arith.constant dense<0.000000e+00> : vector<2x8x8xf32>
    %44 = tpu.matmul %37, %40, %cst_11 {dimension_numbers = #tpu.dot_dimension_numbers<[2], [2], [1], [1], [0, 0, 0, 1, 1, 1], [0], [0]>} : vector<2x8x16xbf16>, vector<2x8x16xbf16>, vector<2x8x8xf32> -> vector<2x8x8xf32>
    "tpu.trace_stop"() : () -> ()
    %cst_12 = arith.constant dense<0xFF800000> : vector<2x8xf32>
    %45 = vector.multi_reduction <maximumf>, %44, %cst_12 [2] : vector<2x8x8xf32> to vector<2x8xf32>
    %46 = vector.shape_cast %45 : vector<2x8xf32> to vector<2x8x1xf32>
    %47 = vector.broadcast %46 : vector<2x8x1xf32> to vector<2x8x8xf32>
    %48 = arith.subf %44, %47 : vector<2x8x8xf32>
    %49 = math.exp %48 : vector<2x8x8xf32>
    %cst_13 = arith.constant dense<0.000000e+00> : vector<2x8xf32>
    %50 = vector.multi_reduction <add>, %49, %cst_13 [2] : vector<2x8x8xf32> to vector<2x8xf32>
    %51 = vector.shape_cast %50 : vector<2x8xf32> to vector<2x8x1xf32>
    %52 = tpu.reciprocal %51 {approx = true} : vector<2x8x1xf32> -> vector<2x8x1xf32>
    %53 = vector.broadcast %52 : vector<2x8x1xf32> to vector<2x8x8xf32>
    %54 = arith.mulf %49, %53 : vector<2x8x8xf32>
    %55 = arith.truncf %54 : vector<2x8x8xf32> to vector<2x8x8xbf16>
    "tpu.trace_start"() <{level = 10 : i32, message = "bqt,btk->bqk"}> : () -> ()
    %cst_14 = arith.constant dense<0.000000e+00> : vector<2x8x16xf32>
    %56 = tpu.matmul %55, %43, %cst_14 {dimension_numbers = #tpu.dot_dimension_numbers<[2], [1], [1], [2], [0, 0, 0, 1, 1, 2], [0], [0]>} : vector<2x8x8xbf16>, vector<2x8x16xbf16>, vector<2x8x16xf32> -> vector<2x8x16xf32>
    "tpu.trace_stop"() : () -> ()
    %57 = vector.shape_cast %56 : vector<2x8x16xf32> to vector<16x16xf32>
    %58 = vector.extract_strided_slice %32 {offsets = [0, 16], sizes = [16, 16], strides = [1, 1]} : vector<16x128xf32> to vector<16x16xf32>
    %59 = arith.truncf %58 : vector<16x16xf32> to vector<16x16xbf16>
    %60 = vector.shape_cast %59 : vector<16x16xbf16> to vector<2x8x16xbf16>
    %61 = vector.extract_strided_slice %33 {offsets = [0, 16], sizes = [16, 16], strides = [1, 1]} : vector<16x128xf32> to vector<16x16xf32>
    %62 = arith.truncf %61 : vector<16x16xf32> to vector<16x16xbf16>
    %63 = vector.shape_cast %62 : vector<16x16xbf16> to vector<2x8x16xbf16>
    %64 = vector.extract_strided_slice %34 {offsets = [0, 16], sizes = [16, 16], strides = [1, 1]} : vector<16x128xf32> to vector<16x16xf32>
    %65 = arith.truncf %64 : vector<16x16xf32> to vector<16x16xbf16>
    %66 = vector.shape_cast %65 : vector<16x16xbf16> to vector<2x8x16xbf16>
    "tpu.trace_start"() <{level = 10 : i32, message = "bqk,btk->bqt"}> : () -> ()
    %cst_15 = arith.constant dense<0.000000e+00> : vector<2x8x8xf32>
    %67 = tpu.matmul %60, %63, %cst_15 {dimension_numbers = #tpu.dot_dimension_numbers<[2], [2], [1], [1], [0, 0, 0, 1, 1, 1], [0], [0]>} : vector<2x8x16xbf16>, vector<2x8x16xbf16>, vector<2x8x8xf32> -> vector<2x8x8xf32>
    "tpu.trace_stop"() : () -> ()
    %cst_16 = arith.constant dense<0xFF800000> : vector<2x8xf32>
    %68 = vector.multi_reduction <maximumf>, %67, %cst_16 [2] : vector<2x8x8xf32> to vector<2x8xf32>
    %69 = vector.shape_cast %68 : vector<2x8xf32> to vector<2x8x1xf32>
    %70 = vector.broadcast %69 : vector<2x8x1xf32> to vector<2x8x8xf32>
    %71 = arith.subf %67, %70 : vector<2x8x8xf32>
    %72 = math.exp %71 : vector<2x8x8xf32>
    %cst_17 = arith.constant dense<0.000000e+00> : vector<2x8xf32>
    %73 = vector.multi_reduction <add>, %72, %cst_17 [2] : vector<2x8x8xf32> to vector<2x8xf32>
    %74 = vector.shape_cast %73 : vector<2x8xf32> to vector<2x8x1xf32>
    %75 = tpu.reciprocal %74 {approx = true} : vector<2x8x1xf32> -> vector<2x8x1xf32>
    %76 = vector.broadcast %75 : vector<2x8x1xf32> to vector<2x8x8xf32>
    %77 = arith.mulf %72, %76 : vector<2x8x8xf32>
    %78 = arith.truncf %77 : vector<2x8x8xf32> to vector<2x8x8xbf16>
    "tpu.trace_start"() <{level = 10 : i32, message = "bqt,btk->bqk"}> : () -> ()
    %cst_18 = arith.constant dense<0.000000e+00> : vector<2x8x16xf32>
    %79 = tpu.matmul %78, %66, %cst_18 {dimension_numbers = #tpu.dot_dimension_numbers<[2], [1], [1], [2], [0, 0, 0, 1, 1, 2], [0], [0]>} : vector<2x8x8xbf16>, vector<2x8x16xbf16>, vector<2x8x16xf32> -> vector<2x8x16xf32>
    "tpu.trace_stop"() : () -> ()
    %80 = vector.shape_cast %79 : vector<2x8x16xf32> to vector<16x16xf32>
    %81 = vector.extract_strided_slice %32 {offsets = [0, 32], sizes = [16, 16], strides = [1, 1]} : vector<16x128xf32> to vector<16x16xf32>
    %82 = arith.truncf %81 : vector<16x16xf32> to vector<16x16xbf16>
    %83 = vector.shape_cast %82 : vector<16x16xbf16> to vector<2x8x16xbf16>
    %84 = vector.extract_strided_slice %33 {offsets = [0, 32], sizes = [16, 16], strides = [1, 1]} : vector<16x128xf32> to vector<16x16xf32>
    %85 = arith.truncf %84 : vector<16x16xf32> to vector<16x16xbf16>
    %86 = vector.shape_cast %85 : vector<16x16xbf16> to vector<2x8x16xbf16>
    %87 = vector.extract_strided_slice %34 {offsets = [0, 32], sizes = [16, 16], strides = [1, 1]} : vector<16x128xf32> to vector<16x16xf32>
    %88 = arith.truncf %87 : vector<16x16xf32> to vector<16x16xbf16>
    %89 = vector.shape_cast %88 : vector<16x16xbf16> to vector<2x8x16xbf16>
    "tpu.trace_start"() <{level = 10 : i32, message = "bqk,btk->bqt"}> : () -> ()
    %cst_19 = arith.constant dense<0.000000e+00> : vector<2x8x8xf32>
    %90 = tpu.matmul %83, %86, %cst_19 {dimension_numbers = #tpu.dot_dimension_numbers<[2], [2], [1], [1], [0, 0, 0, 1, 1, 1], [0], [0]>} : vector<2x8x16xbf16>, vector<2x8x16xbf16>, vector<2x8x8xf32> -> vector<2x8x8xf32>
    "tpu.trace_stop"() : () -> ()
    %cst_20 = arith.constant dense<0xFF800000> : vector<2x8xf32>
    %91 = vector.multi_reduction <maximumf>, %90, %cst_20 [2] : vector<2x8x8xf32> to vector<2x8xf32>
    %92 = vector.shape_cast %91 : vector<2x8xf32> to vector<2x8x1xf32>
    %93 = vector.broadcast %92 : vector<2x8x1xf32> to vector<2x8x8xf32>
    %94 = arith.subf %90, %93 : vector<2x8x8xf32>
    %95 = math.exp %94 : vector<2x8x8xf32>
    %cst_21 = arith.constant dense<0.000000e+00> : vector<2x8xf32>
    %96 = vector.multi_reduction <add>, %95, %cst_21 [2] : vector<2x8x8xf32> to vector<2x8xf32>
    %97 = vector.shape_cast %96 : vector<2x8xf32> to vector<2x8x1xf32>
    %98 = tpu.reciprocal %97 {approx = true} : vector<2x8x1xf32> -> vector<2x8x1xf32>
    %99 = vector.broadcast %98 : vector<2x8x1xf32> to vector<2x8x8xf32>
    %100 = arith.mulf %95, %99 : vector<2x8x8xf32>
    %101 = arith.truncf %100 : vector<2x8x8xf32> to vector<2x8x8xbf16>
    "tpu.trace_start"() <{level = 10 : i32, message = "bqt,btk->bqk"}> : () -> ()
    %cst_22 = arith.constant dense<0.000000e+00> : vector<2x8x16xf32>
    %102 = tpu.matmul %101, %89, %cst_22 {dimension_numbers = #tpu.dot_dimension_numbers<[2], [1], [1], [2], [0, 0, 0, 1, 1, 2], [0], [0]>} : vector<2x8x8xbf16>, vector<2x8x16xbf16>, vector<2x8x16xf32> -> vector<2x8x16xf32>
    "tpu.trace_stop"() : () -> ()
    %103 = vector.shape_cast %102 : vector<2x8x16xf32> to vector<16x16xf32>
    %104 = vector.extract_strided_slice %32 {offsets = [0, 48], sizes = [16, 16], strides = [1, 1]} : vector<16x128xf32> to vector<16x16xf32>
    %105 = arith.truncf %104 : vector<16x16xf32> to vector<16x16xbf16>
    %106 = vector.shape_cast %105 : vector<16x16xbf16> to vector<2x8x16xbf16>
    %107 = vector.extract_strided_slice %33 {offsets = [0, 48], sizes = [16, 16], strides = [1, 1]} : vector<16x128xf32> to vector<16x16xf32>
    %108 = arith.truncf %107 : vector<16x16xf32> to vector<16x16xbf16>
    %109 = vector.shape_cast %108 : vector<16x16xbf16> to vector<2x8x16xbf16>
    %110 = vector.extract_strided_slice %34 {offsets = [0, 48], sizes = [16, 16], strides = [1, 1]} : vector<16x128xf32> to vector<16x16xf32>
    %111 = arith.truncf %110 : vector<16x16xf32> to vector<16x16xbf16>
    %112 = vector.shape_cast %111 : vector<16x16xbf16> to vector<2x8x16xbf16>
    "tpu.trace_start"() <{level = 10 : i32, message = "bqk,btk->bqt"}> : () -> ()
    %cst_23 = arith.constant dense<0.000000e+00> : vector<2x8x8xf32>
    %113 = tpu.matmul %106, %109, %cst_23 {dimension_numbers = #tpu.dot_dimension_numbers<[2], [2], [1], [1], [0, 0, 0, 1, 1, 1], [0], [0]>} : vector<2x8x16xbf16>, vector<2x8x16xbf16>, vector<2x8x8xf32> -> vector<2x8x8xf32>
    "tpu.trace_stop"() : () -> ()
    %cst_24 = arith.constant dense<0xFF800000> : vector<2x8xf32>
    %114 = vector.multi_reduction <maximumf>, %113, %cst_24 [2] : vector<2x8x8xf32> to vector<2x8xf32>
    %115 = vector.shape_cast %114 : vector<2x8xf32> to vector<2x8x1xf32>
    %116 = vector.broadcast %115 : vector<2x8x1xf32> to vector<2x8x8xf32>
    %117 = arith.subf %113, %116 : vector<2x8x8xf32>
    %118 = math.exp %117 : vector<2x8x8xf32>
    %cst_25 = arith.constant dense<0.000000e+00> : vector<2x8xf32>
    %119 = vector.multi_reduction <add>, %118, %cst_25 [2] : vector<2x8x8xf32> to vector<2x8xf32>
    %120 = vector.shape_cast %119 : vector<2x8xf32> to vector<2x8x1xf32>
    %121 = tpu.reciprocal %120 {approx = true} : vector<2x8x1xf32> -> vector<2x8x1xf32>
    %122 = vector.broadcast %121 : vector<2x8x1xf32> to vector<2x8x8xf32>
    %123 = arith.mulf %118, %122 : vector<2x8x8xf32>
    %124 = arith.truncf %123 : vector<2x8x8xf32> to vector<2x8x8xbf16>
    "tpu.trace_start"() <{level = 10 : i32, message = "bqt,btk->bqk"}> : () -> ()
    %cst_26 = arith.constant dense<0.000000e+00> : vector<2x8x16xf32>
    %125 = tpu.matmul %124, %112, %cst_26 {dimension_numbers = #tpu.dot_dimension_numbers<[2], [1], [1], [2], [0, 0, 0, 1, 1, 2], [0], [0]>} : vector<2x8x8xbf16>, vector<2x8x16xbf16>, vector<2x8x16xf32> -> vector<2x8x16xf32>
    "tpu.trace_stop"() : () -> ()
    %126 = vector.shape_cast %125 : vector<2x8x16xf32> to vector<16x16xf32>
    %127 = vector.extract_strided_slice %32 {offsets = [0, 64], sizes = [16, 16], strides = [1, 1]} : vector<16x128xf32> to vector<16x16xf32>
    %128 = arith.truncf %127 : vector<16x16xf32> to vector<16x16xbf16>
    %129 = vector.shape_cast %128 : vector<16x16xbf16> to vector<2x8x16xbf16>
    %130 = vector.extract_strided_slice %33 {offsets = [0, 64], sizes = [16, 16], strides = [1, 1]} : vector<16x128xf32> to vector<16x16xf32>
    %131 = arith.truncf %130 : vector<16x16xf32> to vector<16x16xbf16>
    %132 = vector.shape_cast %131 : vector<16x16xbf16> to vector<2x8x16xbf16>
    %133 = vector.extract_strided_slice %34 {offsets = [0, 64], sizes = [16, 16], strides = [1, 1]} : vector<16x128xf32> to vector<16x16xf32>
    %134 = arith.truncf %133 : vector<16x16xf32> to vector<16x16xbf16>
    %135 = vector.shape_cast %134 : vector<16x16xbf16> to vector<2x8x16xbf16>
    "tpu.trace_start"() <{level = 10 : i32, message = "bqk,btk->bqt"}> : () -> ()
    %cst_27 = arith.constant dense<0.000000e+00> : vector<2x8x8xf32>
    %136 = tpu.matmul %129, %132, %cst_27 {dimension_numbers = #tpu.dot_dimension_numbers<[2], [2], [1], [1], [0, 0, 0, 1, 1, 1], [0], [0]>} : vector<2x8x16xbf16>, vector<2x8x16xbf16>, vector<2x8x8xf32> -> vector<2x8x8xf32>
    "tpu.trace_stop"() : () -> ()
    %cst_28 = arith.constant dense<0xFF800000> : vector<2x8xf32>
    %137 = vector.multi_reduction <maximumf>, %136, %cst_28 [2] : vector<2x8x8xf32> to vector<2x8xf32>
    %138 = vector.shape_cast %137 : vector<2x8xf32> to vector<2x8x1xf32>
    %139 = vector.broadcast %138 : vector<2x8x1xf32> to vector<2x8x8xf32>
    %140 = arith.subf %136, %139 : vector<2x8x8xf32>
    %141 = math.exp %140 : vector<2x8x8xf32>
    %cst_29 = arith.constant dense<0.000000e+00> : vector<2x8xf32>
    %142 = vector.multi_reduction <add>, %141, %cst_29 [2] : vector<2x8x8xf32> to vector<2x8xf32>
    %143 = vector.shape_cast %142 : vector<2x8xf32> to vector<2x8x1xf32>
    %144 = tpu.reciprocal %143 {approx = true} : vector<2x8x1xf32> -> vector<2x8x1xf32>
    %145 = vector.broadcast %144 : vector<2x8x1xf32> to vector<2x8x8xf32>
    %146 = arith.mulf %141, %145 : vector<2x8x8xf32>
    %147 = arith.truncf %146 : vector<2x8x8xf32> to vector<2x8x8xbf16>
    "tpu.trace_start"() <{level = 10 : i32, message = "bqt,btk->bqk"}> : () -> ()
    %cst_30 = arith.constant dense<0.000000e+00> : vector<2x8x16xf32>
    %148 = tpu.matmul %147, %135, %cst_30 {dimension_numbers = #tpu.dot_dimension_numbers<[2], [1], [1], [2], [0, 0, 0, 1, 1, 2], [0], [0]>} : vector<2x8x8xbf16>, vector<2x8x16xbf16>, vector<2x8x16xf32> -> vector<2x8x16xf32>
    "tpu.trace_stop"() : () -> ()
    %149 = vector.shape_cast %148 : vector<2x8x16xf32> to vector<16x16xf32>
    %150 = vector.extract_strided_slice %32 {offsets = [0, 80], sizes = [16, 16], strides = [1, 1]} : vector<16x128xf32> to vector<16x16xf32>
    %151 = arith.truncf %150 : vector<16x16xf32> to vector<16x16xbf16>
    %152 = vector.shape_cast %151 : vector<16x16xbf16> to vector<2x8x16xbf16>
    %153 = vector.extract_strided_slice %33 {offsets = [0, 80], sizes = [16, 16], strides = [1, 1]} : vector<16x128xf32> to vector<16x16xf32>
    %154 = arith.truncf %153 : vector<16x16xf32> to vector<16x16xbf16>
    %155 = vector.shape_cast %154 : vector<16x16xbf16> to vector<2x8x16xbf16>
    %156 = vector.extract_strided_slice %34 {offsets = [0, 80], sizes = [16, 16], strides = [1, 1]} : vector<16x128xf32> to vector<16x16xf32>
    %157 = arith.truncf %156 : vector<16x16xf32> to vector<16x16xbf16>
    %158 = vector.shape_cast %157 : vector<16x16xbf16> to vector<2x8x16xbf16>
    "tpu.trace_start"() <{level = 10 : i32, message = "bqk,btk->bqt"}> : () -> ()
    %cst_31 = arith.constant dense<0.000000e+00> : vector<2x8x8xf32>
    %159 = tpu.matmul %152, %155, %cst_31 {dimension_numbers = #tpu.dot_dimension_numbers<[2], [2], [1], [1], [0, 0, 0, 1, 1, 1], [0], [0]>} : vector<2x8x16xbf16>, vector<2x8x16xbf16>, vector<2x8x8xf32> -> vector<2x8x8xf32>
    "tpu.trace_stop"() : () -> ()
    %cst_32 = arith.constant dense<0xFF800000> : vector<2x8xf32>
    %160 = vector.multi_reduction <maximumf>, %159, %cst_32 [2] : vector<2x8x8xf32> to vector<2x8xf32>
    %161 = vector.shape_cast %160 : vector<2x8xf32> to vector<2x8x1xf32>
    %162 = vector.broadcast %161 : vector<2x8x1xf32> to vector<2x8x8xf32>
    %163 = arith.subf %159, %162 : vector<2x8x8xf32>
    %164 = math.exp %163 : vector<2x8x8xf32>
    %cst_33 = arith.constant dense<0.000000e+00> : vector<2x8xf32>
    %165 = vector.multi_reduction <add>, %164, %cst_33 [2] : vector<2x8x8xf32> to vector<2x8xf32>
    %166 = vector.shape_cast %165 : vector<2x8xf32> to vector<2x8x1xf32>
    %167 = tpu.reciprocal %166 {approx = true} : vector<2x8x1xf32> -> vector<2x8x1xf32>
    %168 = vector.broadcast %167 : vector<2x8x1xf32> to vector<2x8x8xf32>
    %169 = arith.mulf %164, %168 : vector<2x8x8xf32>
    %170 = arith.truncf %169 : vector<2x8x8xf32> to vector<2x8x8xbf16>
    "tpu.trace_start"() <{level = 10 : i32, message = "bqt,btk->bqk"}> : () -> ()
    %cst_34 = arith.constant dense<0.000000e+00> : vector<2x8x16xf32>
    %171 = tpu.matmul %170, %158, %cst_34 {dimension_numbers = #tpu.dot_dimension_numbers<[2], [1], [1], [2], [0, 0, 0, 1, 1, 2], [0], [0]>} : vector<2x8x8xbf16>, vector<2x8x16xbf16>, vector<2x8x16xf32> -> vector<2x8x16xf32>
    "tpu.trace_stop"() : () -> ()
    %172 = vector.shape_cast %171 : vector<2x8x16xf32> to vector<16x16xf32>
    %173 = vector.extract_strided_slice %32 {offsets = [0, 96], sizes = [16, 16], strides = [1, 1]} : vector<16x128xf32> to vector<16x16xf32>
    %174 = arith.truncf %173 : vector<16x16xf32> to vector<16x16xbf16>
    %175 = vector.shape_cast %174 : vector<16x16xbf16> to vector<2x8x16xbf16>
    %176 = vector.extract_strided_slice %33 {offsets = [0, 96], sizes = [16, 16], strides = [1, 1]} : vector<16x128xf32> to vector<16x16xf32>
    %177 = arith.truncf %176 : vector<16x16xf32> to vector<16x16xbf16>
    %178 = vector.shape_cast %177 : vector<16x16xbf16> to vector<2x8x16xbf16>
    %179 = vector.extract_strided_slice %34 {offsets = [0, 96], sizes = [16, 16], strides = [1, 1]} : vector<16x128xf32> to vector<16x16xf32>
    %180 = arith.truncf %179 : vector<16x16xf32> to vector<16x16xbf16>
    %181 = vector.shape_cast %180 : vector<16x16xbf16> to vector<2x8x16xbf16>
    "tpu.trace_start"() <{level = 10 : i32, message = "bqk,btk->bqt"}> : () -> ()
    %cst_35 = arith.constant dense<0.000000e+00> : vector<2x8x8xf32>
    %182 = tpu.matmul %175, %178, %cst_35 {dimension_numbers = #tpu.dot_dimension_numbers<[2], [2], [1], [1], [0, 0, 0, 1, 1, 1], [0], [0]>} : vector<2x8x16xbf16>, vector<2x8x16xbf16>, vector<2x8x8xf32> -> vector<2x8x8xf32>
    "tpu.trace_stop"() : () -> ()
    %cst_36 = arith.constant dense<0xFF800000> : vector<2x8xf32>
    %183 = vector.multi_reduction <maximumf>, %182, %cst_36 [2] : vector<2x8x8xf32> to vector<2x8xf32>
    %184 = vector.shape_cast %183 : vector<2x8xf32> to vector<2x8x1xf32>
    %185 = vector.broadcast %184 : vector<2x8x1xf32> to vector<2x8x8xf32>
    %186 = arith.subf %182, %185 : vector<2x8x8xf32>
    %187 = math.exp %186 : vector<2x8x8xf32>
    %cst_37 = arith.constant dense<0.000000e+00> : vector<2x8xf32>
    %188 = vector.multi_reduction <add>, %187, %cst_37 [2] : vector<2x8x8xf32> to vector<2x8xf32>
    %189 = vector.shape_cast %188 : vector<2x8xf32> to vector<2x8x1xf32>
    %190 = tpu.reciprocal %189 {approx = true} : vector<2x8x1xf32> -> vector<2x8x1xf32>
    %191 = vector.broadcast %190 : vector<2x8x1xf32> to vector<2x8x8xf32>
    %192 = arith.mulf %187, %191 : vector<2x8x8xf32>
    %193 = arith.truncf %192 : vector<2x8x8xf32> to vector<2x8x8xbf16>
    "tpu.trace_start"() <{level = 10 : i32, message = "bqt,btk->bqk"}> : () -> ()
    %cst_38 = arith.constant dense<0.000000e+00> : vector<2x8x16xf32>
    %194 = tpu.matmul %193, %181, %cst_38 {dimension_numbers = #tpu.dot_dimension_numbers<[2], [1], [1], [2], [0, 0, 0, 1, 1, 2], [0], [0]>} : vector<2x8x8xbf16>, vector<2x8x16xbf16>, vector<2x8x16xf32> -> vector<2x8x16xf32>
    "tpu.trace_stop"() : () -> ()
    %195 = vector.shape_cast %194 : vector<2x8x16xf32> to vector<16x16xf32>
    %196 = vector.extract_strided_slice %32 {offsets = [0, 112], sizes = [16, 16], strides = [1, 1]} : vector<16x128xf32> to vector<16x16xf32>
    %197 = arith.truncf %196 : vector<16x16xf32> to vector<16x16xbf16>
    %198 = vector.shape_cast %197 : vector<16x16xbf16> to vector<2x8x16xbf16>
    %199 = vector.extract_strided_slice %33 {offsets = [0, 112], sizes = [16, 16], strides = [1, 1]} : vector<16x128xf32> to vector<16x16xf32>
    %200 = arith.truncf %199 : vector<16x16xf32> to vector<16x16xbf16>
    %201 = vector.shape_cast %200 : vector<16x16xbf16> to vector<2x8x16xbf16>
    %202 = vector.extract_strided_slice %34 {offsets = [0, 112], sizes = [16, 16], strides = [1, 1]} : vector<16x128xf32> to vector<16x16xf32>
    %203 = arith.truncf %202 : vector<16x16xf32> to vector<16x16xbf16>
    %204 = vector.shape_cast %203 : vector<16x16xbf16> to vector<2x8x16xbf16>
    "tpu.trace_start"() <{level = 10 : i32, message = "bqk,btk->bqt"}> : () -> ()
    %cst_39 = arith.constant dense<0.000000e+00> : vector<2x8x8xf32>
    %205 = tpu.matmul %198, %201, %cst_39 {dimension_numbers = #tpu.dot_dimension_numbers<[2], [2], [1], [1], [0, 0, 0, 1, 1, 1], [0], [0]>} : vector<2x8x16xbf16>, vector<2x8x16xbf16>, vector<2x8x8xf32> -> vector<2x8x8xf32>
    "tpu.trace_stop"() : () -> ()
    %cst_40 = arith.constant dense<0xFF800000> : vector<2x8xf32>
    %206 = vector.multi_reduction <maximumf>, %205, %cst_40 [2] : vector<2x8x8xf32> to vector<2x8xf32>
    %207 = vector.shape_cast %206 : vector<2x8xf32> to vector<2x8x1xf32>
    %208 = vector.broadcast %207 : vector<2x8x1xf32> to vector<2x8x8xf32>
    %209 = arith.subf %205, %208 : vector<2x8x8xf32>
    %210 = math.exp %209 : vector<2x8x8xf32>
    %cst_41 = arith.constant dense<0.000000e+00> : vector<2x8xf32>
    %211 = vector.multi_reduction <add>, %210, %cst_41 [2] : vector<2x8x8xf32> to vector<2x8xf32>
    %212 = vector.shape_cast %211 : vector<2x8xf32> to vector<2x8x1xf32>
    %213 = tpu.reciprocal %212 {approx = true} : vector<2x8x1xf32> -> vector<2x8x1xf32>
    %214 = vector.broadcast %213 : vector<2x8x1xf32> to vector<2x8x8xf32>
    %215 = arith.mulf %210, %214 : vector<2x8x8xf32>
    %216 = arith.truncf %215 : vector<2x8x8xf32> to vector<2x8x8xbf16>
    "tpu.trace_start"() <{level = 10 : i32, message = "bqt,btk->bqk"}> : () -> ()
    %cst_42 = arith.constant dense<0.000000e+00> : vector<2x8x16xf32>
    %217 = tpu.matmul %216, %204, %cst_42 {dimension_numbers = #tpu.dot_dimension_numbers<[2], [1], [1], [2], [0, 0, 0, 1, 1, 2], [0], [0]>} : vector<2x8x8xbf16>, vector<2x8x16xbf16>, vector<2x8x16xf32> -> vector<2x8x16xf32>
    "tpu.trace_stop"() : () -> ()
    %218 = vector.shape_cast %217 : vector<2x8x16xf32> to vector<16x16xf32>
    %219 = tpu.concatenate %57, %80, %103, %126, %149, %172, %195, %218 in 1 : vector<16x16xf32>, vector<16x16xf32>, vector<16x16xf32>, vector<16x16xf32>, vector<16x16xf32>, vector<16x16xf32>, vector<16x16xf32>, vector<16x16xf32> -> vector<16x128xf32>
    %220 = arith.truncf %219 : vector<16x128xf32> to vector<16x128xbf16>
    %c0_43 = arith.constant 0 : index
    %c0_44 = arith.constant 0 : index
    %221 = vector.load %arg3[%c0_43, %c0_44] : memref<128x128xbf16, #tpu.memory_space<vmem>>, vector<128x128xbf16>
    %cst_45 = arith.constant dense<0.000000e+00> : vector<16x128xf32>
    %222 = tpu.matmul %220, %221, %cst_45 {dimension_numbers = #tpu.dot_dimension_numbers<[1], [0], [0], [1], [0, 0, 1, 1], [], []>} : vector<16x128xbf16>, vector<128x128xbf16>, vector<16x128xf32> -> vector<16x128xf32>
    %223 = arith.addf %1, %222 : vector<16x128xf32>
    %cst_46 = arith.constant dense<0.000000e+00> : vector<16xf32>
    %224 = vector.multi_reduction <add>, %223, %cst_46 [1] : vector<16x128xf32> to vector<16xf32>
    %225 = vector.shape_cast %224 : vector<16xf32> to vector<16x1xf32>
    %cst_47 = arith.constant 1.280000e+02 : f32
    %226 = vector.broadcast %cst_47 : f32 to vector<16x1xf32>
    %227 = arith.divf %225, %226 : vector<16x1xf32>
    %228 = arith.mulf %223, %223 : vector<16x128xf32>
    %cst_48 = arith.constant dense<0.000000e+00> : vector<16xf32>
    %229 = vector.multi_reduction <add>, %228, %cst_48 [1] : vector<16x128xf32> to vector<16xf32>
    %230 = vector.shape_cast %229 : vector<16xf32> to vector<16x1xf32>
    %cst_49 = arith.constant 1.280000e+02 : f32
    %231 = vector.broadcast %cst_49 : f32 to vector<16x1xf32>
    %232 = arith.divf %230, %231 : vector<16x1xf32>
    %233 = arith.mulf %227, %227 : vector<16x1xf32>
    %234 = arith.subf %232, %233 : vector<16x1xf32>
    %235 = vector.broadcast %227 : vector<16x1xf32> to vector<16x128xf32>
    %236 = arith.subf %223, %235 : vector<16x128xf32>
    %cst_50 = arith.constant 9.99999974E-6 : f32
    %237 = vector.broadcast %cst_50 : f32 to vector<16x1xf32>
    %238 = arith.addf %234, %237 : vector<16x1xf32>
    %239 = math.rsqrt %238 : vector<16x1xf32>
    %240 = vector.broadcast %239 : vector<16x1xf32> to vector<16x128xf32>
    %241 = arith.mulf %236, %240 : vector<16x128xf32>
    %242 = vector.broadcast %5 : vector<1x128xf32> to vector<16x128xf32>
    %243 = arith.mulf %241, %242 : vector<16x128xf32>
    %244 = vector.broadcast %6 : vector<1x128xf32> to vector<16x128xf32>
    %245 = arith.addf %243, %244 : vector<16x128xf32>
    %246 = arith.truncf %245 : vector<16x128xf32> to vector<16x128xbf16>
    %c0_51 = arith.constant 0 : index
    %c0_52 = arith.constant 0 : index
    %247 = vector.load %arg5[%c0_51, %c0_52] : memref<128x512xbf16, #tpu.memory_space<vmem>>, vector<128x512xbf16>
    %cst_53 = arith.constant dense<0.000000e+00> : vector<16x512xf32>
    %248 = tpu.matmul %246, %247, %cst_53 {dimension_numbers = #tpu.dot_dimension_numbers<[1], [0], [0], [1], [0, 0, 1, 1], [], []>} : vector<16x128xbf16>, vector<128x512xbf16>, vector<16x512xf32> -> vector<16x512xf32>
    %c0_54 = arith.constant 0 : index
    %c0_55 = arith.constant 0 : index
    %249 = vector.load %arg6[%c0_54, %c0_55] : memref<1x512xf32, #tpu.memory_space<vmem>>, vector<1x512xf32>
    %250 = vector.broadcast %249 : vector<1x512xf32> to vector<16x512xf32>
    %251 = arith.addf %248, %250 : vector<16x512xf32>
    %cst_56 = arith.constant 0.000000e+00 : f32
    %252 = vector.broadcast %cst_56 : f32 to vector<16x512xf32>
    %253 = arith.maximumf %251, %252 : vector<16x512xf32>
    %254 = arith.truncf %253 : vector<16x512xf32> to vector<16x512xbf16>
    %c0_57 = arith.constant 0 : index
    %c0_58 = arith.constant 0 : index
    %255 = vector.load %arg7[%c0_57, %c0_58] : memref<512x128xbf16, #tpu.memory_space<vmem>>, vector<512x128xbf16>
    %cst_59 = arith.constant dense<0.000000e+00> : vector<16x128xf32>
    %256 = tpu.matmul %254, %255, %cst_59 {dimension_numbers = #tpu.dot_dimension_numbers<[1], [0], [0], [1], [0, 0, 1, 1], [], []>} : vector<16x512xbf16>, vector<512x128xbf16>, vector<16x128xf32> -> vector<16x128xf32>
    %c0_60 = arith.constant 0 : index
    %c0_61 = arith.constant 0 : index
    %257 = vector.load %arg8[%c0_60, %c0_61] : memref<1x128xf32, #tpu.memory_space<vmem>>, vector<1x128xf32>
    %258 = vector.broadcast %257 : vector<1x128xf32> to vector<16x128xf32>
    %259 = arith.addf %256, %258 : vector<16x128xf32>
    %260 = arith.addf %223, %259 : vector<16x128xf32>
    %261 = vector.shape_cast %260 : vector<16x128xf32> to vector<2x8x128xf32>
    %c0_62 = arith.constant 0 : index
    %c0_63 = arith.constant 0 : index
    %c0_64 = arith.constant 0 : index
    %262 = vector.load %arg9[%c0_62, %c0_63, %c0_64] : memref<2x8x128xf32, #tpu.memory_space<vmem>>, vector<2x8x128xf32>
    tpu.vector_store %arg9[%c0_62, %c0_63, %c0_64], %261 {strides = array<i32>} : memref<2x8x128xf32, #tpu.memory_space<vmem>>, vector<2x8x128xf32>,
    return
  }
  func.func @transform_0(%arg0: i32) -> (i32, i32, i32) {
    %c0_i32 = arith.constant 0 : i32
    %c0_i32_0 = arith.constant 0 : i32
    %c0_i32_1 = arith.constant 0 : i32
    return %arg0, %c0_i32, %c0_i32_0 : i32, i32, i32
  }
  func.func @transform_1(%arg0: i32) -> (i32, i32) {
    %c0_i32 = arith.constant 0 : i32
    %c0_i32_0 = arith.constant 0 : i32
    %c0_i32_1 = arith.constant 0 : i32
    return %c0_i32, %c0_i32_0 : i32, i32
  }
  func.func @transform_2(%arg0: i32) -> (i32, i32) {
    %c0_i32 = arith.constant 0 : i32
    %c0_i32_0 = arith.constant 0 : i32
    %c0_i32_1 = arith.constant 0 : i32
    return %c0_i32, %c0_i32_0 : i32, i32
  }
  func.func @transform_3(%arg0: i32) -> (i32, i32) {
    %c0_i32 = arith.constant 0 : i32
    %c0_i32_0 = arith.constant 0 : i32
    %c0_i32_1 = arith.constant 0 : i32
    return %c0_i32, %c0_i32_0 : i32, i32
  }
  func.func @transform_4(%arg0: i32) -> (i32, i32) {
    %c0_i32 = arith.constant 0 : i32
    %c0_i32_0 = arith.constant 0 : i32
    %c0_i32_1 = arith.constant 0 : i32
    return %c0_i32, %c0_i32_0 : i32, i32
  }
  func.func @transform_5(%arg0: i32) -> (i32, i32) {
    %c0_i32 = arith.constant 0 : i32
    %c0_i32_0 = arith.constant 0 : i32
    %c0_i32_1 = arith.constant 0 : i32
    return %c0_i32, %c0_i32_0 : i32, i32
  }
  func.func @transform_6(%arg0: i32) -> (i32, i32) {
    %c0_i32 = arith.constant 0 : i32
    %c0_i32_0 = arith.constant 0 : i32
    %c0_i32_1 = arith.constant 0 : i32
    return %c0_i32, %c0_i32_0 : i32, i32
  }
  func.func @transform_7(%arg0: i32) -> (i32, i32) {
    %c0_i32 = arith.constant 0 : i32
    %c0_i32_0 = arith.constant 0 : i32
    %c0_i32_1 = arith.constant 0 : i32
    return %c0_i32, %c0_i32_0 : i32, i32
  }
  func.func @transform_8(%arg0: i32) -> (i32, i32, i32) {
    %c0_i32 = arith.constant 0 : i32
    %c0_i32_0 = arith.constant 0 : i32
    %c0_i32_1 = arith.constant 0 : i32
    return %arg0, %c0_i32, %c0_i32_0 : i32, i32, i32
  }
}

</mosaic_0001>

<llo_original>
// kernel: multi_head_attention_layer.1
$region0: #{multi_head_attention_layer.1}
  #allocation0 [shape = 'u32[]', space=smem, size = 0x4, offset = 0x4, fixed_abs, tag = 'smem constant byte address 0x4 - core index']
  #allocation1 [shape = 'u32[144,128]{1,0:T(1,128)}', space=vmem, size = 0x12000, scoped, tag = 'internal scratch']
  %s0 = inlined_call_operand.hbm [shape: f32[2,8,128], index: 0, kind: input, shape index: {}]
  %s1 = inlined_call_operand.hbm [shape: bf16[128,384], index: 1, kind: input, shape index: {}]
  %s2 = inlined_call_operand.hbm [shape: bf16[128,128], index: 2, kind: input, shape index: {}]
  %s3 = inlined_call_operand.vmem [shape: f32[4,128], index: 3, kind: input, shape index: {}]
  %s4 = inlined_call_operand.hbm [shape: bf16[128,512], index: 4, kind: input, shape index: {}]
  %s5 = inlined_call_operand.vmem [shape: f32[1,512], index: 5, kind: input, shape index: {}]
  %s6 = inlined_call_operand.hbm [shape: bf16[512,128], index: 6, kind: input, shape index: {}]
  %s7 = inlined_call_operand.vmem [shape: f32[1,128], index: 7, kind: input, shape index: {}]
  %s8 = inlined_call_operand.hbm [shape: f32[2,8,128], index: 8, kind: output, shape index: {}]
  %s9 = sld [smem:[#allocation0]]
  $region62: #{multi_head_attention_layer.1} parent=0
    _
  %s11 = ssub.s32 1, %s9
  %s12 = scalar_select 0, %s11, %s9
  $region1: #{multi_head_attention_layer.1} parent=0
    #allocation2 [shape = 'u8[8192]{0}', space=vmem, size = 0x2000, scoped, tag = 'input window, operand 0, single buffered']
    #allocation3 [shape = 's32[1]{0}', space=sflag, size = 0x4, scoped, tag = 'scoped memory for multi_head_attention_layer.1']
    #allocation4 [shape = 's32[1]{0}', space=sflag, size = 0x4, scoped, tag = 'scoped memory for multi_head_attention_layer.1']
    #allocation5 [shape = 'u8[98304]{0}', space=vmem, size = 0x18000, scoped, tag = 'input window, operand 1, single buffered']
    #allocation6 [shape = 's32[1]{0}', space=sflag, size = 0x4, scoped, tag = 'scoped memory for multi_head_attention_layer.1']
    #allocation7 [shape = 'u8[32768]{0}', space=vmem, size = 0x8000, scoped, tag = 'input window, operand 2, single buffered']
    #allocation8 [shape = 'u8[131072]{0}', space=vmem, size = 0x20000, scoped, tag = 'input window, operand 4, single buffered']
    #allocation9 [shape = 's32[1]{0}', space=sflag, size = 0x4, scoped, tag = 'scoped memory for multi_head_attention_layer.1']
    #allocation10 [shape = 'u8[131072]{0}', space=vmem, size = 0x20000, scoped, tag = 'input window, operand 6, single buffered']
    #allocation11 [shape = 'u8[8192]{0}', space=vmem, size = 0x2000, scoped, tag = 'output window, operand 0, single buffered']
    %13 = vsyncpa [#allocation3], 0
    %14 = vsyncpa [#allocation6], 0
    %15 = vsyncpa [#allocation9], 0
    %16 = vsyncpa [#allocation4], 0
    // Predicated region
    $region2: #{multi_head_attention_layer.1} parent=1 // pred_check
      _
    $region3: #{multi_head_attention_layer.1} parent=1 // pred_check_branch
      %18 = sbr.rel (0) target = $region5
    $region4: #{multi_head_attention_layer.1} parent=1 // pred_region
      %s20 = ssub.s32 256, 256
      %21 = vsyncadd [#allocation3], %s20
      %s22 = sshll.u32 [#allocation2], 4
      %s23 = int_to_ptr.vmem [resolvable:$true] %s22
      %28 = dma.hbm_to_vmem [thread:$0]  %s0, 256, %s23, [#allocation3], 128, 128, 8
    $region5: #{multi_head_attention_layer.1} parent=1 // pred_fallthru
      _
    // Predicated region
    $region6: #{multi_head_attention_layer.1} parent=1 // pred_check
      _
    $region7: #{multi_head_attention_layer.1} parent=1 // pred_check_branch
      %30 = sbr.rel (0) target = $region9
    $region8: #{multi_head_attention_layer.1} parent=1 // pred_region
      %s32 = ssub.s32 3072, 3072
      %33 = vsyncadd [#allocation6], %s32
      %s34 = sshll.u32 [#allocation5], 4
      %s35 = int_to_ptr.vmem [resolvable:$true] %s34
      %40 = dma.hbm_to_vmem [thread:$0]  %s1, 3072, %s35, [#allocation6], 192, 192, 12
    $region9: #{multi_head_attention_layer.1} parent=1 // pred_fallthru
      _
    // Predicated region
    $region10: #{multi_head_attention_layer.1} parent=1 // pred_check
      _
    $region11: #{multi_head_attention_layer.1} parent=1 // pred_check_branch
      %42 = sbr.rel (0) target = $region13
    $region12: #{multi_head_attention_layer.1} parent=1 // pred_region
      %s44 = ssub.s32 1024, 1024
      %45 = vsyncadd [#allocation6], %s44
      %s46 = sshll.u32 [#allocation7], 4
      %s47 = int_to_ptr.vmem [resolvable:$true] %s46
      %52 = dma.hbm_to_vmem [thread:$0]  %s2, 1024, %s47, [#allocation6], 64, 64, 4
    $region13: #{multi_head_attention_layer.1} parent=1 // pred_fallthru
      _
    // Predicated region
    $region14: #{multi_head_attention_layer.1} parent=1 // pred_check
      _
    $region15: #{multi_head_attention_layer.1} parent=1 // pred_check_branch
      %54 = sbr.rel (0) target = $region17
    $region16: #{multi_head_attention_layer.1} parent=1 // pred_region
      _
    $region17: #{multi_head_attention_layer.1} parent=1 // pred_fallthru
      _
    // Predicated region
    $region18: #{multi_head_attention_layer.1} parent=1 // pred_check
      _
    $region19: #{multi_head_attention_layer.1} parent=1 // pred_check_branch
      %56 = sbr.rel (0) target = $region21
    $region20: #{multi_head_attention_layer.1} parent=1 // pred_region
      %s58 = ssub.s32 4096, 4096
      %59 = vsyncadd [#allocation9], %s58
      %s60 = sshll.u32 [#allocation8], 4
      %s61 = int_to_ptr.vmem [resolvable:$true] %s60
      %66 = dma.hbm_to_vmem [thread:$0]  %s4, 4096, %s61, [#allocation9], 256, 256, 16
    $region21: #{multi_head_attention_layer.1} parent=1 // pred_fallthru
      _
    // Predicated region
    $region22: #{multi_head_attention_layer.1} parent=1 // pred_check
      _
    $region23: #{multi_head_attention_layer.1} parent=1 // pred_check_branch
      %68 = sbr.rel (0) target = $region25
    $region24: #{multi_head_attention_layer.1} parent=1 // pred_region
      _
    $region25: #{multi_head_attention_layer.1} parent=1 // pred_fallthru
      _
    // Predicated region
    $region26: #{multi_head_attention_layer.1} parent=1 // pred_check
      _
    $region27: #{multi_head_attention_layer.1} parent=1 // pred_check_branch
      %70 = sbr.rel (0) target = $region29
    $region28: #{multi_head_attention_layer.1} parent=1 // pred_region
      %s72 = ssub.s32 4096, 4096
      %73 = vsyncadd [#allocation9], %s72
      %s74 = sshll.u32 [#allocation10], 4
      %s75 = int_to_ptr.vmem [resolvable:$true] %s74
      %80 = dma.hbm_to_vmem [thread:$0]  %s6, 4096, %s75, [#allocation9], 64, 64, 4
    $region29: #{multi_head_attention_layer.1} parent=1 // pred_fallthru
      _
    // Predicated region
    $region30: #{multi_head_attention_layer.1} parent=1 // pred_check
      _
    $region31: #{multi_head_attention_layer.1} parent=1 // pred_check_branch
      %82 = sbr.rel (0) target = $region33
    $region32: #{multi_head_attention_layer.1} parent=1 // pred_region
      _
    $region33: #{multi_head_attention_layer.1} parent=1 // pred_fallthru
      _
    // Predicated region
    $region34: #{multi_head_attention_layer.1} parent=1 // pred_check
      _
    $region35: #{multi_head_attention_layer.1} parent=1 // pred_check_branch
      %84 = sbr.rel (0) target = $region37
    $region36: #{multi_head_attention_layer.1} parent=1 // pred_region
      %85 = dma.done [#allocation3], 256
    $region37: #{multi_head_attention_layer.1} parent=1 // pred_fallthru
      _
    // Predicated region
    $region38: #{multi_head_attention_layer.1} parent=1 // pred_check
      _
    $region39: #{multi_head_attention_layer.1} parent=1 // pred_check_branch
      %87 = sbr.rel (0) target = $region41
    $region40: #{multi_head_attention_layer.1} parent=1 // pred_region
      %88 = dma.done [#allocation6], 3072
    $region41: #{multi_head_attention_layer.1} parent=1 // pred_fallthru
      _
    // Predicated region
    $region42: #{multi_head_attention_layer.1} parent=1 // pred_check
      _
    $region43: #{multi_head_attention_layer.1} parent=1 // pred_check_branch
      %90 = sbr.rel (0) target = $region45
    $region44: #{multi_head_attention_layer.1} parent=1 // pred_region
      %91 = dma.done [#allocation6], 1024
    $region45: #{multi_head_attention_layer.1} parent=1 // pred_fallthru
      _
    // Predicated region
    $region46: #{multi_head_attention_layer.1} parent=1 // pred_check
      _
    $region47: #{multi_head_attention_layer.1} parent=1 // pred_check_branch
      %93 = sbr.rel (0) target = $region49
    $region48: #{multi_head_attention_layer.1} parent=1 // pred_region
      %94 = dma.done [#allocation9], 4096
    $region49: #{multi_head_attention_layer.1} parent=1 // pred_fallthru
      _
    // Predicated region
    $region50: #{multi_head_attention_layer.1} parent=1 // pred_check
      _
    $region51: #{multi_head_attention_layer.1} parent=1 // pred_check_branch
      %96 = sbr.rel (0) target = $region53
    $region52: #{multi_head_attention_layer.1} parent=1 // pred_region
      %97 = dma.done [#allocation9], 4096
    $region53: #{multi_head_attention_layer.1} parent=1 // pred_fallthru
      _
    %v99 = vld [vmem:[#allocation2] sm:$0xff]
    %v100 = vld [vmem:[#allocation2 + $0x8] sm:$0xff]
    %v101 = vld [vmem:[%s3] sm:$0xf]
    %102 = vadd.xlane.f32.xlu0 %v99
    %v103 = vpop.xlane.xlu0 %102
    %104 = vadd.xlane.f32.xlu0 %v100
    %v105 = vpop.xlane.xlu0 %104
    %v106 = vrcp.pop 128.0
    %v107 = vmul.f32 %v103, %v106
    %v108 = vmul.f32 %v105, %v106
    %v109 = vmul.f32 %v99, %v99
    %v110 = vmul.f32 %v100, %v100
    %111 = vadd.xlane.f32.xlu0 %v109
    %v112 = vpop.xlane.xlu0 %111
    %113 = vadd.xlane.f32.xlu0 %v110
    %v114 = vpop.xlane.xlu0 %113
    %v115 = vmul.f32 %v112, %v106
    %v116 = vmul.f32 %v114, %v106
    %v117 = vmul.f32 %v107, %v107
    %v118 = vmul.f32 %v108, %v108
    %v119 = vsub.f32 %v115, %v117
    %v120 = vsub.f32 %v116, %v118
    %v121 = vsub.f32 %v99, %v107
    %v122 = vsub.f32 %v100, %v108
    %v123 = vadd.f32 %v119, 1e-05
    %v124 = vadd.f32 %v120, 1e-05
    %v125 = vrsqrt.pop %v123
    %v126 = vrsqrt.pop %v124
    %v127 = vmul.f32 %v121, %v125
    %v128 = vmul.f32 %v122, %v126
    %v129 = vlaneseq
    %v130 = vshrl.u32 %v129, 7
    %v131 = vsub.s32 0, %v130
    %v132 = vrot.slane %v101, %v131
    %v133 = vmul.f32 %v127, %v132
    %v134 = vmul.f32 %v128, %v132
    %v135 = vlaneseq
    %v136 = vshrl.u32 %v135, 7
    %v137 = vsub.s32 1, %v136
    %v138 = vrot.slane %v101, %v137
    %v139 = vadd.f32 %v133, %v138
    %v140 = vadd.f32 %v134, %v138
    %v141 = vpack.c.bf16 %v140, %v139
    %v142 = vld [vmem:[#allocation5] sm:$0xff]
    %v143 = vld [vmem:[#allocation5 + $0x8] sm:$0xf]
    %v144 = vld [vmem:[#allocation5 + $0xc] sm:$0xff]
    %v145 = vld [vmem:[#allocation5 + $0x14] sm:$0xf]
    %v146 = vld [vmem:[#allocation5 + $0x18] sm:$0xff]
    %v147 = vld [vmem:[#allocation5 + $0x20] sm:$0xf]
    %v148 = vld [vmem:[#allocation5 + $0x24] sm:$0xff]
    %v149 = vld [vmem:[#allocation5 + $0x2c] sm:$0xf]
    %v150 = vld [vmem:[#allocation5 + $0x30] sm:$0xff]
    %v151 = vld [vmem:[#allocation5 + $0x38] sm:$0xf]
    %v152 = vld [vmem:[#allocation5 + $0x3c] sm:$0xff]
    %v153 = vld [vmem:[#allocation5 + $0x44] sm:$0xf]
    %v154 = vld [vmem:[#allocation5 + $0x48] sm:$0xff]
    %v155 = vld [vmem:[#allocation5 + $0x50] sm:$0xf]
    %v156 = vld [vmem:[#allocation5 + $0x54] sm:$0xff]
    %v157 = vld [vmem:[#allocation5 + $0x5c] sm:$0xf]
    %v158 = vld [vmem:[#allocation5 + $0x60] sm:$0xff]
    %v159 = vld [vmem:[#allocation5 + $0x68] sm:$0xf]
    %v160 = vld [vmem:[#allocation5 + $0x6c] sm:$0xff]
    %v161 = vld [vmem:[#allocation5 + $0x74] sm:$0xf]
    %v162 = vld [vmem:[#allocation5 + $0x78] sm:$0xff]
    %v163 = vld [vmem:[#allocation5 + $0x80] sm:$0xf]
    %v164 = vld [vmem:[#allocation5 + $0x84] sm:$0xff]
    %v165 = vld [vmem:[#allocation5 + $0x8c] sm:$0xf]
    %v166 = vld [vmem:[#allocation5 + $0x90] sm:$0xff]
    %v167 = vld [vmem:[#allocation5 + $0x98] sm:$0xf]
    %v168 = vld [vmem:[#allocation5 + $0x9c] sm:$0xff]
    %v169 = vld [vmem:[#allocation5 + $0xa4] sm:$0xf]
    %v170 = vld [vmem:[#allocation5 + $0xa8] sm:$0xff]
    %v171 = vld [vmem:[#allocation5 + $0xb0] sm:$0xf]
    %v172 = vld [vmem:[#allocation5 + $0xb4] sm:$0xff]
    %v173 = vld [vmem:[#allocation5 + $0xbc] sm:$0xf]
    %v206 = vunpack.c.l.b16 %v142
    %v207 = vunpack.c.h.b16 %v142
    %v208 = vunpack.c.l.b16 %v143
    %v209 = vunpack.c.l.b16 %v144
    %v210 = vunpack.c.h.b16 %v144
    %v211 = vunpack.c.l.b16 %v145
    %v212 = vunpack.c.l.b16 %v146
    %v213 = vunpack.c.h.b16 %v146
    %v214 = vunpack.c.l.b16 %v147
    %v215 = vunpack.c.l.b16 %v148
    %v216 = vunpack.c.h.b16 %v148
    %v217 = vunpack.c.l.b16 %v149
    %v218 = vunpack.c.l.b16 %v150
    %v219 = vunpack.c.h.b16 %v150
    %v220 = vunpack.c.l.b16 %v151
    %v221 = vunpack.c.l.b16 %v152
    %v222 = vunpack.c.h.b16 %v152
    %v223 = vunpack.c.l.b16 %v153
    %v224 = vunpack.c.l.b16 %v154
    %v225 = vunpack.c.h.b16 %v154
    %v226 = vunpack.c.l.b16 %v155
    %v227 = vunpack.c.l.b16 %v156
    %v228 = vunpack.c.h.b16 %v156
    %v229 = vunpack.c.l.b16 %v157
    %v230 = vunpack.c.l.b16 %v158
    %v231 = vunpack.c.h.b16 %v158
    %v232 = vunpack.c.l.b16 %v159
    %v233 = vunpack.c.l.b16 %v160
    %v234 = vunpack.c.h.b16 %v160
    %v235 = vunpack.c.l.b16 %v161
    %v236 = vunpack.c.l.b16 %v162
    %v237 = vunpack.c.h.b16 %v162
    %v238 = vunpack.c.l.b16 %v163
    %v239 = vunpack.c.l.b16 %v164
    %v240 = vunpack.c.h.b16 %v164
    %v241 = vunpack.c.l.b16 %v165
    %v242 = vunpack.c.l.b16 %v166
    %v243 = vunpack.c.h.b16 %v166
    %v244 = vunpack.c.l.b16 %v167
    %v245 = vunpack.c.l.b16 %v168
    %v246 = vunpack.c.h.b16 %v168
    %v247 = vunpack.c.l.b16 %v169
    %v248 = vunpack.c.l.b16 %v170
    %v249 = vunpack.c.h.b16 %v170
    %v250 = vunpack.c.l.b16 %v171
    %v251 = vunpack.c.l.b16 %v172
    %v252 = vunpack.c.h.b16 %v172
    %v253 = vunpack.c.l.b16 %v173
    %v254 = vpack.c.b16 %v209, %v206
    %v255 = vpack.c.b16 %v210, %v207
    %v256 = vpack.c.b16 %v211, %v208
    %v257 = vpack.c.b16 %v215, %v212
    %v258 = vpack.c.b16 %v216, %v213
    %v259 = vpack.c.b16 %v217, %v214
    %v260 = vpack.c.b16 %v221, %v218
    %v261 = vpack.c.b16 %v222, %v219
    %v262 = vpack.c.b16 %v223, %v220
    %v263 = vpack.c.b16 %v227, %v224
    %v264 = vpack.c.b16 %v228, %v225
    %v265 = vpack.c.b16 %v229, %v226
    %v266 = vpack.c.b16 %v233, %v230
    %v267 = vpack.c.b16 %v234, %v231
    %v268 = vpack.c.b16 %v235, %v232
    %v269 = vpack.c.b16 %v239, %v236
    %v270 = vpack.c.b16 %v240, %v237
    %v271 = vpack.c.b16 %v241, %v238
    %v272 = vpack.c.b16 %v245, %v242
    %v273 = vpack.c.b16 %v246, %v243
    %v274 = vpack.c.b16 %v247, %v244
    %v275 = vpack.c.b16 %v251, %v248
    %v276 = vpack.c.b16 %v252, %v249
    %v277 = vpack.c.b16 %v253, %v250
    %302 = vmatprep.subr.bf16.mxu0 %v255
    %303 = vmatpush1.bf16.msra.mxu0 %v254
    %304 = vmatprep.subr.bf16.mxu0 %v258
    %305 = vmatpush1.bf16.msra.mxu0 %v257
    %306 = vmatprep.subr.bf16.mxu0 %v261
    %307 = vmatpush1.bf16.msra.mxu0 %v260
    %308 = vmatprep.subr.bf16.mxu0 %v264
    %309 = vmatpush1.bf16.msra.mxu0 %v263
    %310 = vmatprep.subr.bf16.mxu0 %v267
    %311 = vmatpush1.bf16.msra.mxu0 %v266
    %312 = vmatprep.subr.bf16.mxu0 %v270
    %313 = vmatpush1.bf16.msra.mxu0 %v269
    %314 = vmatprep.subr.bf16.mxu0 %v273
    %315 = vmatpush1.bf16.msra.mxu0 %v272
    %316 = vmatprep.subr.bf16.mxu0 %v276
    %317 = vmatpush1.bf16.msra.mxu0 %v275
    %318 = vmatprep.subr.bf16.mxu0 0
    %319 = vmatpush1.bf16.msra.mxu0 0
    %320 = vmatprep.subr.bf16.mxu0 0
    %321 = vmatpush1.bf16.msra.mxu0 0
    %322 = vmatprep.subr.bf16.mxu0 0
    %323 = vmatpush1.bf16.msra.mxu0 0
    %324 = vmatprep.subr.bf16.mxu0 0
    %325 = vmatpush1.bf16.msra.mxu0 0
    %326 = vmatprep.subr.bf16.mxu0 0
    %327 = vmatpush1.bf16.msra.mxu0 0
    %328 = vmatprep.subr.bf16.mxu0 0
    %329 = vmatpush1.bf16.msra.mxu0 0
    %330 = vmatprep.subr.bf16.mxu0 0
    %331 = vmatpush1.bf16.msra.mxu0 0
    %332 = vmatprep.subr.bf16.mxu0 0
    %333 = vmatpush1.bf16.msra.mxu0 0
    %334 = vmatprep.mubr.bf16.mxu0 0
    %335 = vmatmul.mubr.bf16.gmra.mrb[0].mxu0 %v141
    %v336 = vpop.f32.mrb[0].mxu0
    %v337 = vadd.f32 0.0, %v336
    %v338 = vpop.f32.mrb[0].mxu0
    %v339 = vadd.f32 0.0, %v338
    %v340 = vpop.f32.mrb[0].mxu0
    %v341 = vadd.f32 0.0, %v340
    %v342 = vpop.f32.mrb[0].mxu0
    %v343 = vadd.f32 0.0, %v342
    %344 = vdwg.mxu0
    %345 = vmatprep.subr.bf16.mxu0 0
    %346 = vmatpush1.bf16.msra.mxu0 %v256
    %347 = vmatprep.subr.bf16.mxu0 0
    %348 = vmatpush1.bf16.msra.mxu0 %v259
    %349 = vmatprep.subr.bf16.mxu0 0
    %350 = vmatpush1.bf16.msra.mxu0 %v262
    %351 = vmatprep.subr.bf16.mxu0 0
    %352 = vmatpush1.bf16.msra.mxu0 %v265
    %353 = vmatprep.subr.bf16.mxu0 0
    %354 = vmatpush1.bf16.msra.mxu0 %v268
    %355 = vmatprep.subr.bf16.mxu0 0
    %356 = vmatpush1.bf16.msra.mxu0 %v271
    %357 = vmatprep.subr.bf16.mxu0 0
    %358 = vmatpush1.bf16.msra.mxu0 %v274
    %359 = vmatprep.subr.bf16.mxu0 0
    %360 = vmatpush1.bf16.msra.mxu0 %v277
    %361 = vmatprep.subr.bf16.mxu0 0
    %362 = vmatpush1.bf16.msra.mxu0 0
    %363 = vmatprep.subr.bf16.mxu0 0
    %364 = vmatpush1.bf16.msra.mxu0 0
    %365 = vmatprep.subr.bf16.mxu0 0
    %366 = vmatpush1.bf16.msra.mxu0 0
    %367 = vmatprep.subr.bf16.mxu0 0
    %368 = vmatpush1.bf16.msra.mxu0 0
    %369 = vmatprep.subr.bf16.mxu0 0
    %370 = vmatpush1.bf16.msra.mxu0 0
    %371 = vmatprep.subr.bf16.mxu0 0
    %372 = vmatpush1.bf16.msra.mxu0 0
    %373 = vmatprep.subr.bf16.mxu0 0
    %374 = vmatpush1.bf16.msra.mxu0 0
    %375 = vmatprep.subr.bf16.mxu0 0
    %376 = vmatpush1.bf16.msra.mxu0 0
    %377 = vmatprep.mubr.bf16.mxu0 0
    %378 = vmatmul.mubr.bf16.gmra.mrb[0].mxu0 %v141
    %v379 = vpop.f32.mrb[0].mxu0
    %v380 = vadd.f32 0.0, %v379
    %v381 = vpop.f32.mrb[0].mxu0
    %v382 = vpop.f32.mrb[0].mxu0
    %v383 = vadd.f32 0.0, %v382
    %v384 = vpop.f32.mrb[0].mxu0
    %385 = vdwg.mxu0
    %v386 = vpack.c.bf16 %v341, %v337
    %v388 = vunpack.c.l.b16 %v386
    %v389 = vunpack.c.h.b16 %v386
    %v390 = vpack.c.b16 %v388, %v388
    %v391 = vpack.c.b16 %v389, %v389
    %v392 = vpack.c.bf16 %v343, %v339
    %v394 = vunpack.c.l.b16 %v392
    %v395 = vunpack.c.h.b16 %v392
    %v396 = vpack.c.b16 %v394, %v394
    %v397 = vpack.c.b16 %v395, %v395
    %v398 = vpack.c.bf16 %v383, %v380
    %v400 = vunpack.c.l.b16 %v398
    %v401 = vunpack.c.h.b16 %v398
    %v402 = vpack.c.b16 %v400, %v400
    %v403 = vpack.c.b16 %v401, %v401
    %vm404 = vcmask 130048
    %v406 = vsel %vm404, %v390, 0
    %v409 = vsel %vm404, %v396, 0
    %411 = vmatprep.subr.bf16.mxu0 0
    %412 = vmatpush1.bf16.xpose.msra.mxu0 %v409
    %413 = vmatprep.subr.bf16.mxu0 0
    %414 = vmatpush1.bf16.xpose.msra.mxu0 0
    %415 = vmatprep.subr.bf16.mxu0 0
    %416 = vmatpush1.bf16.xpose.msra.mxu0 0
    %417 = vmatprep.subr.bf16.mxu0 0
    %418 = vmatpush1.bf16.xpose.msra.mxu0 0
    %419 = vmatprep.subr.bf16.mxu0 0
    %420 = vmatpush1.bf16.xpose.msra.mxu0 0
    %421 = vmatprep.subr.bf16.mxu0 0
    %422 = vmatpush1.bf16.xpose.msra.mxu0 0
    %423 = vmatprep.subr.bf16.mxu0 0
    %424 = vmatpush1.bf16.xpose.msra.mxu0 0
    %425 = vmatprep.subr.bf16.mxu0 0
    %426 = vmatpush1.bf16.xpose.msra.mxu0 0
    %427 = vmatprep.subr.bf16.mxu0 0
    %428 = vmatpush1.bf16.xpose.msra.mxu0 0
    %429 = vmatprep.subr.bf16.mxu0 0
    %430 = vmatpush1.bf16.xpose.msra.mxu0 0
    %431 = vmatprep.subr.bf16.mxu0 0
    %432 = vmatpush1.bf16.xpose.msra.mxu0 0
    %433 = vmatprep.subr.bf16.mxu0 0
    %434 = vmatpush1.bf16.xpose.msra.mxu0 0
    %435 = vmatprep.subr.bf16.mxu0 0
    %436 = vmatpush1.bf16.xpose.msra.mxu0 0
    %437 = vmatprep.subr.bf16.mxu0 0
    %438 = vmatpush1.bf16.xpose.msra.mxu0 0
    %439 = vmatprep.subr.bf16.mxu0 0
    %440 = vmatpush1.bf16.xpose.msra.mxu0 0
    %441 = vmatprep.subr.bf16.mxu0 0
    %442 = vmatpush1.bf16.xpose.msra.mxu0 0
    %443 = vmatprep.mubr.bf16.mxu0 0
    %444 = vmatmul.mubr.bf16.gmra.mrb[0].mxu0 %v406
    %v445 = vpop.f32.mrb[0].mxu0
    %v446 = vadd.f32 0.0, %v445
    %v447 = vpop.f32.mrb[0].mxu0
    %v448 = vpop.f32.mrb[0].mxu0
    %v449 = vpop.f32.mrb[0].mxu0
    %450 = vdwg.mxu0
    %v452 = vsel %vm404, %v391, 0
    %v455 = vsel %vm404, %v397, 0
    %457 = vmatprep.subr.bf16.mxu0 0
    %458 = vmatpush1.bf16.xpose.msra.mxu0 %v455
    %459 = vmatprep.subr.bf16.mxu0 0
    %460 = vmatpush1.bf16.xpose.msra.mxu0 0
    %461 = vmatprep.subr.bf16.mxu0 0
    %462 = vmatpush1.bf16.xpose.msra.mxu0 0
    %463 = vmatprep.subr.bf16.mxu0 0
    %464 = vmatpush1.bf16.xpose.msra.mxu0 0
    %465 = vmatprep.subr.bf16.mxu0 0
    %466 = vmatpush1.bf16.xpose.msra.mxu0 0
    %467 = vmatprep.subr.bf16.mxu0 0
    %468 = vmatpush1.bf16.xpose.msra.mxu0 0
    %469 = vmatprep.subr.bf16.mxu0 0
    %470 = vmatpush1.bf16.xpose.msra.mxu0 0
    %471 = vmatprep.subr.bf16.mxu0 0
    %472 = vmatpush1.bf16.xpose.msra.mxu0 0
    %473 = vmatprep.subr.bf16.mxu0 0
    %474 = vmatpush1.bf16.xpose.msra.mxu0 0
    %475 = vmatprep.subr.bf16.mxu0 0
    %476 = vmatpush1.bf16.xpose.msra.mxu0 0
    %477 = vmatprep.subr.bf16.mxu0 0
    %478 = vmatpush1.bf16.xpose.msra.mxu0 0
    %479 = vmatprep.subr.bf16.mxu0 0
    %480 = vmatpush1.bf16.xpose.msra.mxu0 0
    %481 = vmatprep.subr.bf16.mxu0 0
    %482 = vmatpush1.bf16.xpose.msra.mxu0 0
    %483 = vmatprep.subr.bf16.mxu0 0
    %484 = vmatpush1.bf16.xpose.msra.mxu0 0
    %485 = vmatprep.subr.bf16.mxu0 0
    %486 = vmatpush1.bf16.xpose.msra.mxu0 0
    %487 = vmatprep.subr.bf16.mxu0 0
    %488 = vmatpush1.bf16.xpose.msra.mxu0 0
    %489 = vmatprep.mubr.bf16.mxu0 0
    %490 = vmatmul.mubr.bf16.gmra.mrb[0].mxu0 %v452
    %v491 = vpop.f32.mrb[0].mxu0
    %v492 = vadd.f32 0.0, %v491
    %v493 = vpop.f32.mrb[0].mxu0
    %v494 = vpop.f32.mrb[0].mxu0
    %v495 = vpop.f32.mrb[0].mxu0
    %496 = vdwg.mxu0
    %vm497 = vcmask 64512
    %v498 = vsel %vm497, %v446, -inf
    %499 = vmax.xlane.f32.xlu0 %v498
    %v500 = vpop.xlane.xlu0 %499
    %v501 = vsel %vm497, %v492, -inf
    %502 = vmax.xlane.f32.xlu0 %v501
    %v503 = vpop.xlane.xlu0 %502
    %v504 = vsub.f32 %v446, %v500
    %v505 = vsub.f32 %v492, %v503
    %v506 = vmul.f32 %v504, 1.442695
    %v507 = vpow.pop %v506
    %v508 = vmul.f32 %v505, 1.442695
    %v509 = vpow.pop %v508
    %v510 = vsel %vm497, %v507, 0.0
    %511 = vadd.xlane.f32.xlu0 %v510
    %v512 = vpop.xlane.xlu0 %511
    %v513 = vsel %vm497, %v509, 0.0
    %514 = vadd.xlane.f32.xlu0 %v513
    %v515 = vpop.xlane.xlu0 %514
    %v516 = vrcp.pop %v512
    %v517 = vrcp.pop %v515
    %v518 = vmul.f32 %v507, %v516
    %v519 = vmul.f32 %v509, %v517
    %v520 = vpack.c.bf16 %v518, %v518
    %v521 = vpack.c.bf16 %v519, %v519
    %v523 = vsel %vm497, %v520, 0
    %vm525 = vcmask 1043456
    %v527 = vsel %vm525, %v402, 0
    %529 = vmatprep.subr.bf16.mxu0 0
    %530 = vmatpush1.bf16.msra.mxu0 %v527
    %531 = vmatprep.subr.bf16.mxu0 0
    %532 = vmatpush1.bf16.msra.mxu0 0
    %533 = vmatprep.subr.bf16.mxu0 0
    %534 = vmatpush1.bf16.msra.mxu0 0
    %535 = vmatprep.subr.bf16.mxu0 0
    %536 = vmatpush1.bf16.msra.mxu0 0
    %537 = vmatprep.subr.bf16.mxu0 0
    %538 = vmatpush1.bf16.msra.mxu0 0
    %539 = vmatprep.subr.bf16.mxu0 0
    %540 = vmatpush1.bf16.msra.mxu0 0
    %541 = vmatprep.subr.bf16.mxu0 0
    %542 = vmatpush1.bf16.msra.mxu0 0
    %543 = vmatprep.subr.bf16.mxu0 0
    %544 = vmatpush1.bf16.msra.mxu0 0
    %545 = vmatprep.subr.bf16.mxu0 0
    %546 = vmatpush1.bf16.msra.mxu0 0
    %547 = vmatprep.subr.bf16.mxu0 0
    %548 = vmatpush1.bf16.msra.mxu0 0
    %549 = vmatprep.subr.bf16.mxu0 0
    %550 = vmatpush1.bf16.msra.mxu0 0
    %551 = vmatprep.subr.bf16.mxu0 0
    %552 = vmatpush1.bf16.msra.mxu0 0
    %553 = vmatprep.subr.bf16.mxu0 0
    %554 = vmatpush1.bf16.msra.mxu0 0
    %555 = vmatprep.subr.bf16.mxu0 0
    %556 = vmatpush1.bf16.msra.mxu0 0
    %557 = vmatprep.subr.bf16.mxu0 0
    %558 = vmatpush1.bf16.msra.mxu0 0
    %559 = vmatprep.subr.bf16.mxu0 0
    %560 = vmatpush1.bf16.msra.mxu0 0
    %561 = vmatprep.mubr.bf16.mxu0 0
    %562 = vmatmul.mubr.bf16.gmra.mrb[0].mxu0 %v523
    %v563 = vpop.f32.mrb[0].mxu0
    %v564 = vadd.f32 0.0, %v563
    %v565 = vpop.f32.mrb[0].mxu0
    %v566 = vpop.f32.mrb[0].mxu0
    %v567 = vpop.f32.mrb[0].mxu0
    %568 = vdwg.mxu0
    %v570 = vsel %vm497, %v521, 0
    %v573 = vsel %vm525, %v403, 0
    %575 = vmatprep.subr.bf16.mxu0 0
    %576 = vmatpush1.bf16.msra.mxu0 %v573
    %577 = vmatprep.subr.bf16.mxu0 0
    %578 = vmatpush1.bf16.msra.mxu0 0
    %579 = vmatprep.subr.bf16.mxu0 0
    %580 = vmatpush1.bf16.msra.mxu0 0
    %581 = vmatprep.subr.bf16.mxu0 0
    %582 = vmatpush1.bf16.msra.mxu0 0
    %583 = vmatprep.subr.bf16.mxu0 0
    %584 = vmatpush1.bf16.msra.mxu0 0
    %585 = vmatprep.subr.bf16.mxu0 0
    %586 = vmatpush1.bf16.msra.mxu0 0
    %587 = vmatprep.subr.bf16.mxu0 0
    %588 = vmatpush1.bf16.msra.mxu0 0
    %589 = vmatprep.subr.bf16.mxu0 0
    %590 = vmatpush1.bf16.msra.mxu0 0
    %591 = vmatprep.subr.bf16.mxu0 0
    %592 = vmatpush1.bf16.msra.mxu0 0
    %593 = vmatprep.subr.bf16.mxu0 0
    %594 = vmatpush1.bf16.msra.mxu0 0
    %595 = vmatprep.subr.bf16.mxu0 0
    %596 = vmatpush1.bf16.msra.mxu0 0
    %597 = vmatprep.subr.bf16.mxu0 0
    %598 = vmatpush1.bf16.msra.mxu0 0
    %599 = vmatprep.subr.bf16.mxu0 0
    %600 = vmatpush1.bf16.msra.mxu0 0
    %601 = vmatprep.subr.bf16.mxu0 0
    %602 = vmatpush1.bf16.msra.mxu0 0
    %603 = vmatprep.subr.bf16.mxu0 0
    %604 = vmatpush1.bf16.msra.mxu0 0
    %605 = vmatprep.subr.bf16.mxu0 0
    %606 = vmatpush1.bf16.msra.mxu0 0
    %607 = vmatprep.mubr.bf16.mxu0 0
    %608 = vmatmul.mubr.bf16.gmra.mrb[0].mxu0 %v570
    %v609 = vpop.f32.mrb[0].mxu0
    %v610 = vadd.f32 0.0, %v609
    %v611 = vpop.f32.mrb[0].mxu0
    %v612 = vpop.f32.mrb[0].mxu0
    %v613 = vpop.f32.mrb[0].mxu0
    %614 = vdwg.mxu0
    %615 = vrot.lane.b32.xlu0 %v390, 112
    %v616 = vpop.permute.xlu0 %615
    %617 = vrot.lane.b32.xlu0 %v396, 112
    %v618 = vpop.permute.xlu0 %617
    %v620 = vsel %vm404, %v616, 0
    %v623 = vsel %vm404, %v618, 0
    %625 = vmatprep.subr.bf16.mxu0 0
    %626 = vmatpush1.bf16.xpose.msra.mxu0 %v623
    %627 = vmatprep.subr.bf16.mxu0 0
    %628 = vmatpush1.bf16.xpose.msra.mxu0 0
    %629 = vmatprep.subr.bf16.mxu0 0
    %630 = vmatpush1.bf16.xpose.msra.mxu0 0
    %631 = vmatprep.subr.bf16.mxu0 0
    %632 = vmatpush1.bf16.xpose.msra.mxu0 0
    %633 = vmatprep.subr.bf16.mxu0 0
    %634 = vmatpush1.bf16.xpose.msra.mxu0 0
    %635 = vmatprep.subr.bf16.mxu0 0
    %636 = vmatpush1.bf16.xpose.msra.mxu0 0
    %637 = vmatprep.subr.bf16.mxu0 0
    %638 = vmatpush1.bf16.xpose.msra.mxu0 0
    %639 = vmatprep.subr.bf16.mxu0 0
    %640 = vmatpush1.bf16.xpose.msra.mxu0 0
    %641 = vmatprep.subr.bf16.mxu0 0
    %642 = vmatpush1.bf16.xpose.msra.mxu0 0
    %643 = vmatprep.subr.bf16.mxu0 0
    %644 = vmatpush1.bf16.xpose.msra.mxu0 0
    %645 = vmatprep.subr.bf16.mxu0 0
    %646 = vmatpush1.bf16.xpose.msra.mxu0 0
    %647 = vmatprep.subr.bf16.mxu0 0
    %648 = vmatpush1.bf16.xpose.msra.mxu0 0
    %649 = vmatprep.subr.bf16.mxu0 0
    %650 = vmatpush1.bf16.xpose.msra.mxu0 0
    %651 = vmatprep.subr.bf16.mxu0 0
    %652 = vmatpush1.bf16.xpose.msra.mxu0 0
    %653 = vmatprep.subr.bf16.mxu0 0
    %654 = vmatpush1.bf16.xpose.msra.mxu0 0
    %655 = vmatprep.subr.bf16.mxu0 0
    %656 = vmatpush1.bf16.xpose.msra.mxu0 0
    %657 = vmatprep.mubr.bf16.mxu0 0
    %658 = vmatmul.mubr.bf16.gmra.mrb[0].mxu0 %v620
    %v659 = vpop.f32.mrb[0].mxu0
    %v660 = vadd.f32 0.0, %v659
    %v661 = vpop.f32.mrb[0].mxu0
    %v662 = vpop.f32.mrb[0].mxu0
    %v663 = vpop.f32.mrb[0].mxu0
    %664 = vdwg.mxu0
    %665 = vrot.lane.b32.xlu0 %v391, 112
    %v666 = vpop.permute.xlu0 %665
    %667 = vrot.lane.b32.xlu0 %v397, 112
    %v668 = vpop.permute.xlu0 %667
    %v670 = vsel %vm404, %v666, 0
    %v673 = vsel %vm404, %v668, 0
    %675 = vmatprep.subr.bf16.mxu0 0
    %676 = vmatpush1.bf16.xpose.msra.mxu0 %v673
    %677 = vmatprep.subr.bf16.mxu0 0
    %678 = vmatpush1.bf16.xpose.msra.mxu0 0
    %679 = vmatprep.subr.bf16.mxu0 0
    %680 = vmatpush1.bf16.xpose.msra.mxu0 0
    %681 = vmatprep.subr.bf16.mxu0 0
    %682 = vmatpush1.bf16.xpose.msra.mxu0 0
    %683 = vmatprep.subr.bf16.mxu0 0
    %684 = vmatpush1.bf16.xpose.msra.mxu0 0
    %685 = vmatprep.subr.bf16.mxu0 0
    %686 = vmatpush1.bf16.xpose.msra.mxu0 0
    %687 = vmatprep.subr.bf16.mxu0 0
    %688 = vmatpush1.bf16.xpose.msra.mxu0 0
    %689 = vmatprep.subr.bf16.mxu0 0
    %690 = vmatpush1.bf16.xpose.msra.mxu0 0
    %691 = vmatprep.subr.bf16.mxu0 0
    %692 = vmatpush1.bf16.xpose.msra.mxu0 0
    %693 = vmatprep.subr.bf16.mxu0 0
    %694 = vmatpush1.bf16.xpose.msra.mxu0 0
    %695 = vmatprep.subr.bf16.mxu0 0
    %696 = vmatpush1.bf16.xpose.msra.mxu0 0
    %697 = vmatprep.subr.bf16.mxu0 0
    %698 = vmatpush1.bf16.xpose.msra.mxu0 0
    %699 = vmatprep.subr.bf16.mxu0 0
    %700 = vmatpush1.bf16.xpose.msra.mxu0 0
    %701 = vmatprep.subr.bf16.mxu0 0
    %702 = vmatpush1.bf16.xpose.msra.mxu0 0
    %703 = vmatprep.subr.bf16.mxu0 0
    %704 = vmatpush1.bf16.xpose.msra.mxu0 0
    %705 = vmatprep.subr.bf16.mxu0 0
    %706 = vmatpush1.bf16.xpose.msra.mxu0 0
    %707 = vmatprep.mubr.bf16.mxu0 0
    %708 = vmatmul.mubr.bf16.gmra.mrb[0].mxu0 %v670
    %v709 = vpop.f32.mrb[0].mxu0
    %v710 = vadd.f32 0.0, %v709
    %v711 = vpop.f32.mrb[0].mxu0
    %v712 = vpop.f32.mrb[0].mxu0
    %v713 = vpop.f32.mrb[0].mxu0
    %714 = vdwg.mxu0
    %v715 = vsel %vm497, %v660, -inf
    %716 = vmax.xlane.f32.xlu0 %v715
    %v717 = vpop.xlane.xlu0 %716
    %v718 = vsel %vm497, %v710, -inf
    %719 = vmax.xlane.f32.xlu0 %v718
    %v720 = vpop.xlane.xlu0 %719
    %v721 = vsub.f32 %v660, %v717
    %v722 = vsub.f32 %v710, %v720
    %v723 = vmul.f32 %v721, 1.442695
    %v724 = vpow.pop %v723
    %v725 = vmul.f32 %v722, 1.442695
    %v726 = vpow.pop %v725
    %v727 = vsel %vm497, %v724, 0.0
    %728 = vadd.xlane.f32.xlu0 %v727
    %v729 = vpop.xlane.xlu0 %728
    %v730 = vsel %vm497, %v726, 0.0
    %731 = vadd.xlane.f32.xlu0 %v730
    %v732 = vpop.xlane.xlu0 %731
    %v733 = vrcp.pop %v729
    %v734 = vrcp.pop %v732
    %v735 = vmul.f32 %v724, %v733
    %v736 = vmul.f32 %v726, %v734
    %v737 = vpack.c.bf16 %v735, %v735
    %v738 = vpack.c.bf16 %v736, %v736
    %739 = vrot.lane.b32.xlu0 %v402, 112
    %v740 = vpop.permute.xlu0 %739
    %v742 = vsel %vm497, %v737, 0
    %v745 = vsel %vm525, %v740, 0
    %747 = vmatprep.subr.bf16.mxu0 0
    %748 = vmatpush1.bf16.msra.mxu0 %v745
    %749 = vmatprep.subr.bf16.mxu0 0
    %750 = vmatpush1.bf16.msra.mxu0 0
    %751 = vmatprep.subr.bf16.mxu0 0
    %752 = vmatpush1.bf16.msra.mxu0 0
    %753 = vmatprep.subr.bf16.mxu0 0
    %754 = vmatpush1.bf16.msra.mxu0 0
    %755 = vmatprep.subr.bf16.mxu0 0
    %756 = vmatpush1.bf16.msra.mxu0 0
    %757 = vmatprep.subr.bf16.mxu0 0
    %758 = vmatpush1.bf16.msra.mxu0 0
    %759 = vmatprep.subr.bf16.mxu0 0
    %760 = vmatpush1.bf16.msra.mxu0 0
    %761 = vmatprep.subr.bf16.mxu0 0
    %762 = vmatpush1.bf16.msra.mxu0 0
    %763 = vmatprep.subr.bf16.mxu0 0
    %764 = vmatpush1.bf16.msra.mxu0 0
    %765 = vmatprep.subr.bf16.mxu0 0
    %766 = vmatpush1.bf16.msra.mxu0 0
    %767 = vmatprep.subr.bf16.mxu0 0
    %768 = vmatpush1.bf16.msra.mxu0 0
    %769 = vmatprep.subr.bf16.mxu0 0
    %770 = vmatpush1.bf16.msra.mxu0 0
    %771 = vmatprep.subr.bf16.mxu0 0
    %772 = vmatpush1.bf16.msra.mxu0 0
    %773 = vmatprep.subr.bf16.mxu0 0
    %774 = vmatpush1.bf16.msra.mxu0 0
    %775 = vmatprep.subr.bf16.mxu0 0
    %776 = vmatpush1.bf16.msra.mxu0 0
    %777 = vmatprep.subr.bf16.mxu0 0
    %778 = vmatpush1.bf16.msra.mxu0 0
    %779 = vmatprep.mubr.bf16.mxu0 0
    %780 = vmatmul.mubr.bf16.gmra.mrb[0].mxu0 %v742
    %v781 = vpop.f32.mrb[0].mxu0
    %v782 = vadd.f32 0.0, %v781
    %v783 = vpop.f32.mrb[0].mxu0
    %v784 = vpop.f32.mrb[0].mxu0
    %v785 = vpop.f32.mrb[0].mxu0
    %786 = vdwg.mxu0
    %787 = vrot.lane.b32.xlu0 %v403, 112
    %v788 = vpop.permute.xlu0 %787
    %v790 = vsel %vm497, %v738, 0
    %v793 = vsel %vm525, %v788, 0
    %795 = vmatprep.subr.bf16.mxu0 0
    %796 = vmatpush1.bf16.msra.mxu0 %v793
    %797 = vmatprep.subr.bf16.mxu0 0
    %798 = vmatpush1.bf16.msra.mxu0 0
    %799 = vmatprep.subr.bf16.mxu0 0
    %800 = vmatpush1.bf16.msra.mxu0 0
    %801 = vmatprep.subr.bf16.mxu0 0
    %802 = vmatpush1.bf16.msra.mxu0 0
    %803 = vmatprep.subr.bf16.mxu0 0
    %804 = vmatpush1.bf16.msra.mxu0 0
    %805 = vmatprep.subr.bf16.mxu0 0
    %806 = vmatpush1.bf16.msra.mxu0 0
    %807 = vmatprep.subr.bf16.mxu0 0
    %808 = vmatpush1.bf16.msra.mxu0 0
    %809 = vmatprep.subr.bf16.mxu0 0
    %810 = vmatpush1.bf16.msra.mxu0 0
    %811 = vmatprep.subr.bf16.mxu0 0
    %812 = vmatpush1.bf16.msra.mxu0 0
    %813 = vmatprep.subr.bf16.mxu0 0
    %814 = vmatpush1.bf16.msra.mxu0 0
    %815 = vmatprep.subr.bf16.mxu0 0
    %816 = vmatpush1.bf16.msra.mxu0 0
    %817 = vmatprep.subr.bf16.mxu0 0
    %818 = vmatpush1.bf16.msra.mxu0 0
    %819 = vmatprep.subr.bf16.mxu0 0
    %820 = vmatpush1.bf16.msra.mxu0 0
    %821 = vmatprep.subr.bf16.mxu0 0
    %822 = vmatpush1.bf16.msra.mxu0 0
    %823 = vmatprep.subr.bf16.mxu0 0
    %824 = vmatpush1.bf16.msra.mxu0 0
    %825 = vmatprep.subr.bf16.mxu0 0
    %826 = vmatpush1.bf16.msra.mxu0 0
    %827 = vmatprep.mubr.bf16.mxu0 0
    %828 = vmatmul.mubr.bf16.gmra.mrb[0].mxu0 %v790
    %v829 = vpop.f32.mrb[0].mxu0
    %v830 = vadd.f32 0.0, %v829
    %v831 = vpop.f32.mrb[0].mxu0
    %v832 = vpop.f32.mrb[0].mxu0
    %v833 = vpop.f32.mrb[0].mxu0
    %834 = vdwg.mxu0
    %835 = vrot.lane.b32.xlu0 %v390, 96
    %v836 = vpop.permute.xlu0 %835
    %837 = vrot.lane.b32.xlu0 %v396, 96
    %v838 = vpop.permute.xlu0 %837
    %v840 = vsel %vm404, %v836, 0
    %v843 = vsel %vm404, %v838, 0
    %845 = vmatprep.subr.bf16.mxu0 0
    %846 = vmatpush1.bf16.xpose.msra.mxu0 %v843
    %847 = vmatprep.subr.bf16.mxu0 0
    %848 = vmatpush1.bf16.xpose.msra.mxu0 0
    %849 = vmatprep.subr.bf16.mxu0 0
    %850 = vmatpush1.bf16.xpose.msra.mxu0 0
    %851 = vmatprep.subr.bf16.mxu0 0
    %852 = vmatpush1.bf16.xpose.msra.mxu0 0
    %853 = vmatprep.subr.bf16.mxu0 0
    %854 = vmatpush1.bf16.xpose.msra.mxu0 0
    %855 = vmatprep.subr.bf16.mxu0 0
    %856 = vmatpush1.bf16.xpose.msra.mxu0 0
    %857 = vmatprep.subr.bf16.mxu0 0
    %858 = vmatpush1.bf16.xpose.msra.mxu0 0
    %859 = vmatprep.subr.bf16.mxu0 0
    %860 = vmatpush1.bf16.xpose.msra.mxu0 0
    %861 = vmatprep.subr.bf16.mxu0 0
    %862 = vmatpush1.bf16.xpose.msra.mxu0 0
    %863 = vmatprep.subr.bf16.mxu0 0
    %864 = vmatpush1.bf16.xpose.msra.mxu0 0
    %865 = vmatprep.subr.bf16.mxu0 0
    %866 = vmatpush1.bf16.xpose.msra.mxu0 0
    %867 = vmatprep.subr.bf16.mxu0 0
    %868 = vmatpush1.bf16.xpose.msra.mxu0 0
    %869 = vmatprep.subr.bf16.mxu0 0
    %870 = vmatpush1.bf16.xpose.msra.mxu0 0
    %871 = vmatprep.subr.bf16.mxu0 0
    %872 = vmatpush1.bf16.xpose.msra.mxu0 0
    %873 = vmatprep.subr.bf16.mxu0 0
    %874 = vmatpush1.bf16.xpose.msra.mxu0 0
    %875 = vmatprep.subr.bf16.mxu0 0
    %876 = vmatpush1.bf16.xpose.msra.mxu0 0
    %877 = vmatprep.mubr.bf16.mxu0 0
    %878 = vmatmul.mubr.bf16.gmra.mrb[0].mxu0 %v840
    %v879 = vpop.f32.mrb[0].mxu0
    %v880 = vadd.f32 0.0, %v879
    %v881 = vpop.f32.mrb[0].mxu0
    %v882 = vpop.f32.mrb[0].mxu0
    %v883 = vpop.f32.mrb[0].mxu0
    %884 = vdwg.mxu0
    %885 = vrot.lane.b32.xlu0 %v391, 96
    %v886 = vpop.permute.xlu0 %885
    %887 = vrot.lane.b32.xlu0 %v397, 96
    %v888 = vpop.permute.xlu0 %887
    %v890 = vsel %vm404, %v886, 0
    %v893 = vsel %vm404, %v888, 0
    %895 = vmatprep.subr.bf16.mxu0 0
    %896 = vmatpush1.bf16.xpose.msra.mxu0 %v893
    %897 = vmatprep.subr.bf16.mxu0 0
    %898 = vmatpush1.bf16.xpose.msra.mxu0 0
    %899 = vmatprep.subr.bf16.mxu0 0
    %900 = vmatpush1.bf16.xpose.msra.mxu0 0
    %901 = vmatprep.subr.bf16.mxu0 0
    %902 = vmatpush1.bf16.xpose.msra.mxu0 0
    %903 = vmatprep.subr.bf16.mxu0 0
    %904 = vmatpush1.bf16.xpose.msra.mxu0 0
    %905 = vmatprep.subr.bf16.mxu0 0
    %906 = vmatpush1.bf16.xpose.msra.mxu0 0
    %907 = vmatprep.subr.bf16.mxu0 0
    %908 = vmatpush1.bf16.xpose.msra.mxu0 0
    %909 = vmatprep.subr.bf16.mxu0 0
    %910 = vmatpush1.bf16.xpose.msra.mxu0 0
    %911 = vmatprep.subr.bf16.mxu0 0
    %912 = vmatpush1.bf16.xpose.msra.mxu0 0
    %913 = vmatprep.subr.bf16.mxu0 0
    %914 = vmatpush1.bf16.xpose.msra.mxu0 0
    %915 = vmatprep.subr.bf16.mxu0 0
    %916 = vmatpush1.bf16.xpose.msra.mxu0 0
    %917 = vmatprep.subr.bf16.mxu0 0
    %918 = vmatpush1.bf16.xpose.msra.mxu0 0
    %919 = vmatprep.subr.bf16.mxu0 0
    %920 = vmatpush1.bf16.xpose.msra.mxu0 0
    %921 = vmatprep.subr.bf16.mxu0 0
    %922 = vmatpush1.bf16.xpose.msra.mxu0 0
    %923 = vmatprep.subr.bf16.mxu0 0
    %924 = vmatpush1.bf16.xpose.msra.mxu0 0
    %925 = vmatprep.subr.bf16.mxu0 0
    %926 = vmatpush1.bf16.xpose.msra.mxu0 0
    %927 = vmatprep.mubr.bf16.mxu0 0
    %928 = vmatmul.mubr.bf16.gmra.mrb[0].mxu0 %v890
    %v929 = vpop.f32.mrb[0].mxu0
    %v930 = vadd.f32 0.0, %v929
    %v931 = vpop.f32.mrb[0].mxu0
    %v932 = vpop.f32.mrb[0].mxu0
    %v933 = vpop.f32.mrb[0].mxu0
    %934 = vdwg.mxu0
    %v935 = vsel %vm497, %v880, -inf
    %936 = vmax.xlane.f32.xlu0 %v935
    %v937 = vpop.xlane.xlu0 %936
    %v938 = vsel %vm497, %v930, -inf
    %939 = vmax.xlane.f32.xlu0 %v938
    %v940 = vpop.xlane.xlu0 %939
    %v941 = vsub.f32 %v880, %v937
    %v942 = vsub.f32 %v930, %v940
    %v943 = vmul.f32 %v941, 1.442695
    %v944 = vpow.pop %v943
    %v945 = vmul.f32 %v942, 1.442695
    %v946 = vpow.pop %v945
    %v947 = vsel %vm497, %v944, 0.0
    %948 = vadd.xlane.f32.xlu0 %v947
    %v949 = vpop.xlane.xlu0 %948
    %v950 = vsel %vm497, %v946, 0.0
    %951 = vadd.xlane.f32.xlu0 %v950
    %v952 = vpop.xlane.xlu0 %951
    %v953 = vrcp.pop %v949
    %v954 = vrcp.pop %v952
    %v955 = vmul.f32 %v944, %v953
    %v956 = vmul.f32 %v946, %v954
    %v957 = vpack.c.bf16 %v955, %v955
    %v958 = vpack.c.bf16 %v956, %v956
    %959 = vrot.lane.b32.xlu0 %v402, 96
    %v960 = vpop.permute.xlu0 %959
    %v962 = vsel %vm497, %v957, 0
    %v965 = vsel %vm525, %v960, 0
    %967 = vmatprep.subr.bf16.mxu0 0
    %968 = vmatpush1.bf16.msra.mxu0 %v965
    %969 = vmatprep.subr.bf16.mxu0 0
    %970 = vmatpush1.bf16.msra.mxu0 0
    %971 = vmatprep.subr.bf16.mxu0 0
    %972 = vmatpush1.bf16.msra.mxu0 0
    %973 = vmatprep.subr.bf16.mxu0 0
    %974 = vmatpush1.bf16.msra.mxu0 0
    %975 = vmatprep.subr.bf16.mxu0 0
    %976 = vmatpush1.bf16.msra.mxu0 0
    %977 = vmatprep.subr.bf16.mxu0 0
    %978 = vmatpush1.bf16.msra.mxu0 0
    %979 = vmatprep.subr.bf16.mxu0 0
    %980 = vmatpush1.bf16.msra.mxu0 0
    %981 = vmatprep.subr.bf16.mxu0 0
    %982 = vmatpush1.bf16.msra.mxu0 0
    %983 = vmatprep.subr.bf16.mxu0 0
    %984 = vmatpush1.bf16.msra.mxu0 0
    %985 = vmatprep.subr.bf16.mxu0 0
    %986 = vmatpush1.bf16.msra.mxu0 0
    %987 = vmatprep.subr.bf16.mxu0 0
    %988 = vmatpush1.bf16.msra.mxu0 0
    %989 = vmatprep.subr.bf16.mxu0 0
    %990 = vmatpush1.bf16.msra.mxu0 0
    %991 = vmatprep.subr.bf16.mxu0 0
    %992 = vmatpush1.bf16.msra.mxu0 0
    %993 = vmatprep.subr.bf16.mxu0 0
    %994 = vmatpush1.bf16.msra.mxu0 0
    %995 = vmatprep.subr.bf16.mxu0 0
    %996 = vmatpush1.bf16.msra.mxu0 0
    %997 = vmatprep.subr.bf16.mxu0 0
    %998 = vmatpush1.bf16.msra.mxu0 0
    %999 = vmatprep.mubr.bf16.mxu0 0
    %1000 = vmatmul.mubr.bf16.gmra.mrb[0].mxu0 %v962
    %v1001 = vpop.f32.mrb[0].mxu0
    %v1002 = vadd.f32 0.0, %v1001
    %v1003 = vpop.f32.mrb[0].mxu0
    %v1004 = vpop.f32.mrb[0].mxu0
    %v1005 = vpop.f32.mrb[0].mxu0
    %1006 = vdwg.mxu0
    %1007 = vrot.lane.b32.xlu0 %v403, 96
    %v1008 = vpop.permute.xlu0 %1007
    %v1010 = vsel %vm497, %v958, 0
    %v1013 = vsel %vm525, %v1008, 0
    %1015 = vmatprep.subr.bf16.mxu0 0
    %1016 = vmatpush1.bf16.msra.mxu0 %v1013
    %1017 = vmatprep.subr.bf16.mxu0 0
    %1018 = vmatpush1.bf16.msra.mxu0 0
    %1019 = vmatprep.subr.bf16.mxu0 0
    %1020 = vmatpush1.bf16.msra.mxu0 0
    %1021 = vmatprep.subr.bf16.mxu0 0
    %1022 = vmatpush1.bf16.msra.mxu0 0
    %1023 = vmatprep.subr.bf16.mxu0 0
    %1024 = vmatpush1.bf16.msra.mxu0 0
    %1025 = vmatprep.subr.bf16.mxu0 0
    %1026 = vmatpush1.bf16.msra.mxu0 0
    %1027 = vmatprep.subr.bf16.mxu0 0
    %1028 = vmatpush1.bf16.msra.mxu0 0
    %1029 = vmatprep.subr.bf16.mxu0 0
    %1030 = vmatpush1.bf16.msra.mxu0 0
    %1031 = vmatprep.subr.bf16.mxu0 0
    %1032 = vmatpush1.bf16.msra.mxu0 0
    %1033 = vmatprep.subr.bf16.mxu0 0
    %1034 = vmatpush1.bf16.msra.mxu0 0
    %1035 = vmatprep.subr.bf16.mxu0 0
    %1036 = vmatpush1.bf16.msra.mxu0 0
    %1037 = vmatprep.subr.bf16.mxu0 0
    %1038 = vmatpush1.bf16.msra.mxu0 0
    %1039 = vmatprep.subr.bf16.mxu0 0
    %1040 = vmatpush1.bf16.msra.mxu0 0
    %1041 = vmatprep.subr.bf16.mxu0 0
    %1042 = vmatpush1.bf16.msra.mxu0 0
    %1043 = vmatprep.subr.bf16.mxu0 0
    %1044 = vmatpush1.bf16.msra.mxu0 0
    %1045 = vmatprep.subr.bf16.mxu0 0
    %1046 = vmatpush1.bf16.msra.mxu0 0
    %1047 = vmatprep.mubr.bf16.mxu0 0
    %1048 = vmatmul.mubr.bf16.gmra.mrb[0].mxu0 %v1010
    %v1049 = vpop.f32.mrb[0].mxu0
    %v1050 = vadd.f32 0.0, %v1049
    %v1051 = vpop.f32.mrb[0].mxu0
    %v1052 = vpop.f32.mrb[0].mxu0
    %v1053 = vpop.f32.mrb[0].mxu0
    %1054 = vdwg.mxu0
    %1055 = vrot.lane.b32.xlu0 %v390, 80
    %v1056 = vpop.permute.xlu0 %1055
    %1057 = vrot.lane.b32.xlu0 %v396, 80
    %v1058 = vpop.permute.xlu0 %1057
    %v1060 = vsel %vm404, %v1056, 0
    %v1063 = vsel %vm404, %v1058, 0
    %1065 = vmatprep.subr.bf16.mxu0 0
    %1066 = vmatpush1.bf16.xpose.msra.mxu0 %v1063
    %1067 = vmatprep.subr.bf16.mxu0 0
    %1068 = vmatpush1.bf16.xpose.msra.mxu0 0
    %1069 = vmatprep.subr.bf16.mxu0 0
    %1070 = vmatpush1.bf16.xpose.msra.mxu0 0
    %1071 = vmatprep.subr.bf16.mxu0 0
    %1072 = vmatpush1.bf16.xpose.msra.mxu0 0
    %1073 = vmatprep.subr.bf16.mxu0 0
    %1074 = vmatpush1.bf16.xpose.msra.mxu0 0
    %1075 = vmatprep.subr.bf16.mxu0 0
    %1076 = vmatpush1.bf16.xpose.msra.mxu0 0
    %1077 = vmatprep.subr.bf16.mxu0 0
    %1078 = vmatpush1.bf16.xpose.msra.mxu0 0
    %1079 = vmatprep.subr.bf16.mxu0 0
    %1080 = vmatpush1.bf16.xpose.msra.mxu0 0
    %1081 = vmatprep.subr.bf16.mxu0 0
    %1082 = vmatpush1.bf16.xpose.msra.mxu0 0
    %1083 = vmatprep.subr.bf16.mxu0 0
    %1084 = vmatpush1.bf16.xpose.msra.mxu0 0
    %1085 = vmatprep.subr.bf16.mxu0 0
    %1086 = vmatpush1.bf16.xpose.msra.mxu0 0
    %1087 = vmatprep.subr.bf16.mxu0 0
    %1088 = vmatpush1.bf16.xpose.msra.mxu0 0
    %1089 = vmatprep.subr.bf16.mxu0 0
    %1090 = vmatpush1.bf16.xpose.msra.mxu0 0
    %1091 = vmatprep.subr.bf16.mxu0 0
    %1092 = vmatpush1.bf16.xpose.msra.mxu0 0
    %1093 = vmatprep.subr.bf16.mxu0 0
    %1094 = vmatpush1.bf16.xpose.msra.mxu0 0
    %1095 = vmatprep.subr.bf16.mxu0 0
    %1096 = vmatpush1.bf16.xpose.msra.mxu0 0
    %1097 = vmatprep.mubr.bf16.mxu0 0
    %1098 = vmatmul.mubr.bf16.gmra.mrb[0].mxu0 %v1060
    %v1099 = vpop.f32.mrb[0].mxu0
    %v1100 = vadd.f32 0.0, %v1099
    %v1101 = vpop.f32.mrb[0].mxu0
    %v1102 = vpop.f32.mrb[0].mxu0
    %v1103 = vpop.f32.mrb[0].mxu0
    %1104 = vdwg.mxu0
    %1105 = vrot.lane.b32.xlu0 %v391, 80
    %v1106 = vpop.permute.xlu0 %1105
    %1107 = vrot.lane.b32.xlu0 %v397, 80
    %v1108 = vpop.permute.xlu0 %1107
    %v1110 = vsel %vm404, %v1106, 0
    %v1113 = vsel %vm404, %v1108, 0
    %1115 = vmatprep.subr.bf16.mxu0 0
    %1116 = vmatpush1.bf16.xpose.msra.mxu0 %v1113
    %1117 = vmatprep.subr.bf16.mxu0 0
    %1118 = vmatpush1.bf16.xpose.msra.mxu0 0
    %1119 = vmatprep.subr.bf16.mxu0 0
    %1120 = vmatpush1.bf16.xpose.msra.mxu0 0
    %1121 = vmatprep.subr.bf16.mxu0 0
    %1122 = vmatpush1.bf16.xpose.msra.mxu0 0
    %1123 = vmatprep.subr.bf16.mxu0 0
    %1124 = vmatpush1.bf16.xpose.msra.mxu0 0
    %1125 = vmatprep.subr.bf16.mxu0 0
    %1126 = vmatpush1.bf16.xpose.msra.mxu0 0
    %1127 = vmatprep.subr.bf16.mxu0 0
    %1128 = vmatpush1.bf16.xpose.msra.mxu0 0
    %1129 = vmatprep.subr.bf16.mxu0 0
    %1130 = vmatpush1.bf16.xpose.msra.mxu0 0
    %1131 = vmatprep.subr.bf16.mxu0 0
    %1132 = vmatpush1.bf16.xpose.msra.mxu0 0
    %1133 = vmatprep.subr.bf16.mxu0 0
    %1134 = vmatpush1.bf16.xpose.msra.mxu0 0
    %1135 = vmatprep.subr.bf16.mxu0 0
    %1136 = vmatpush1.bf16.xpose.msra.mxu0 0
    %1137 = vmatprep.subr.bf16.mxu0 0
    %1138 = vmatpush1.bf16.xpose.msra.mxu0 0
    %1139 = vmatprep.subr.bf16.mxu0 0
    %1140 = vmatpush1.bf16.xpose.msra.mxu0 0
    %1141 = vmatprep.subr.bf16.mxu0 0
    %1142 = vmatpush1.bf16.xpose.msra.mxu0 0
    %1143 = vmatprep.subr.bf16.mxu0 0
    %1144 = vmatpush1.bf16.xpose.msra.mxu0 0
    %1145 = vmatprep.subr.bf16.mxu0 0
    %1146 = vmatpush1.bf16.xpose.msra.mxu0 0
    %1147 = vmatprep.mubr.bf16.mxu0 0
    %1148 = vmatmul.mubr.bf16.gmra.mrb[0].mxu0 %v1110
    %v1149 = vpop.f32.mrb[0].mxu0
    %v1150 = vadd.f32 0.0, %v1149
    %v1151 = vpop.f32.mrb[0].mxu0
    %v1152 = vpop.f32.mrb[0].mxu0
    %v1153 = vpop.f32.mrb[0].mxu0
    %1154 = vdwg.mxu0
    %v1155 = vsel %vm497, %v1100, -inf
    %1156 = vmax.xlane.f32.xlu0 %v1155
    %v1157 = vpop.xlane.xlu0 %1156
    %v1158 = vsel %vm497, %v1150, -inf
    %1159 = vmax.xlane.f32.xlu0 %v1158
    %v1160 = vpop.xlane.xlu0 %1159
    %v1161 = vsub.f32 %v1100, %v1157
    %v1162 = vsub.f32 %v1150, %v1160
    %v1163 = vmul.f32 %v1161, 1.442695
    %v1164 = vpow.pop %v1163
    %v1165 = vmul.f32 %v1162, 1.442695
    %v1166 = vpow.pop %v1165
    %v1167 = vsel %vm497, %v1164, 0.0
    %1168 = vadd.xlane.f32.xlu0 %v1167
    %v1169 = vpop.xlane.xlu0 %1168
    %v1170 = vsel %vm497, %v1166, 0.0
    %1171 = vadd.xlane.f32.xlu0 %v1170
    %v1172 = vpop.xlane.xlu0 %1171
    %v1173 = vrcp.pop %v1169
    %v1174 = vrcp.pop %v1172
    %v1175 = vmul.f32 %v1164, %v1173
    %v1176 = vmul.f32 %v1166, %v1174
    %v1177 = vpack.c.bf16 %v1175, %v1175
    %v1178 = vpack.c.bf16 %v1176, %v1176
    %1179 = vrot.lane.b32.xlu0 %v402, 80
    %v1180 = vpop.permute.xlu0 %1179
    %v1182 = vsel %vm497, %v1177, 0
    %v1185 = vsel %vm525, %v1180, 0
    %1187 = vmatprep.subr.bf16.mxu0 0
    %1188 = vmatpush1.bf16.msra.mxu0 %v1185
    %1189 = vmatprep.subr.bf16.mxu0 0
    %1190 = vmatpush1.bf16.msra.mxu0 0
    %1191 = vmatprep.subr.bf16.mxu0 0
    %1192 = vmatpush1.bf16.msra.mxu0 0
    %1193 = vmatprep.subr.bf16.mxu0 0
    %1194 = vmatpush1.bf16.msra.mxu0 0
    %1195 = vmatprep.subr.bf16.mxu0 0
    %1196 = vmatpush1.bf16.msra.mxu0 0
    %1197 = vmatprep.subr.bf16.mxu0 0
    %1198 = vmatpush1.bf16.msra.mxu0 0
    %1199 = vmatprep.subr.bf16.mxu0 0
    %1200 = vmatpush1.bf16.msra.mxu0 0
    %1201 = vmatprep.subr.bf16.mxu0 0
    %1202 = vmatpush1.bf16.msra.mxu0 0
    %1203 = vmatprep.subr.bf16.mxu0 0
    %1204 = vmatpush1.bf16.msra.mxu0 0
    %1205 = vmatprep.subr.bf16.mxu0 0
    %1206 = vmatpush1.bf16.msra.mxu0 0
    %1207 = vmatprep.subr.bf16.mxu0 0
    %1208 = vmatpush1.bf16.msra.mxu0 0
    %1209 = vmatprep.subr.bf16.mxu0 0
    %1210 = vmatpush1.bf16.msra.mxu0 0
    %1211 = vmatprep.subr.bf16.mxu0 0
    %1212 = vmatpush1.bf16.msra.mxu0 0
    %1213 = vmatprep.subr.bf16.mxu0 0
    %1214 = vmatpush1.bf16.msra.mxu0 0
    %1215 = vmatprep.subr.bf16.mxu0 0
    %1216 = vmatpush1.bf16.msra.mxu0 0
    %1217 = vmatprep.subr.bf16.mxu0 0
    %1218 = vmatpush1.bf16.msra.mxu0 0
    %1219 = vmatprep.mubr.bf16.mxu0 0
    %1220 = vmatmul.mubr.bf16.gmra.mrb[0].mxu0 %v1182
    %v1221 = vpop.f32.mrb[0].mxu0
    %v1222 = vadd.f32 0.0, %v1221
    %v1223 = vpop.f32.mrb[0].mxu0
    %v1224 = vpop.f32.mrb[0].mxu0
    %v1225 = vpop.f32.mrb[0].mxu0
    %1226 = vdwg.mxu0
    %1227 = vrot.lane.b32.xlu0 %v403, 80
    %v1228 = vpop.permute.xlu0 %1227
    %v1230 = vsel %vm497, %v1178, 0
    %v1233 = vsel %vm525, %v1228, 0
    %1235 = vmatprep.subr.bf16.mxu0 0
    %1236 = vmatpush1.bf16.msra.mxu0 %v1233
    %1237 = vmatprep.subr.bf16.mxu0 0
    %1238 = vmatpush1.bf16.msra.mxu0 0
    %1239 = vmatprep.subr.bf16.mxu0 0
    %1240 = vmatpush1.bf16.msra.mxu0 0
    %1241 = vmatprep.subr.bf16.mxu0 0
    %1242 = vmatpush1.bf16.msra.mxu0 0
    %1243 = vmatprep.subr.bf16.mxu0 0
    %1244 = vmatpush1.bf16.msra.mxu0 0
    %1245 = vmatprep.subr.bf16.mxu0 0
    %1246 = vmatpush1.bf16.msra.mxu0 0
    %1247 = vmatprep.subr.bf16.mxu0 0
    %1248 = vmatpush1.bf16.msra.mxu0 0
    %1249 = vmatprep.subr.bf16.mxu0 0
    %1250 = vmatpush1.bf16.msra.mxu0 0
    %1251 = vmatprep.subr.bf16.mxu0 0
    %1252 = vmatpush1.bf16.msra.mxu0 0
    %1253 = vmatprep.subr.bf16.mxu0 0
    %1254 = vmatpush1.bf16.msra.mxu0 0
    %1255 = vmatprep.subr.bf16.mxu0 0
    %1256 = vmatpush1.bf16.msra.mxu0 0
    %1257 = vmatprep.subr.bf16.mxu0 0
    %1258 = vmatpush1.bf16.msra.mxu0 0
    %1259 = vmatprep.subr.bf16.mxu0 0
    %1260 = vmatpush1.bf16.msra.mxu0 0
    %1261 = vmatprep.subr.bf16.mxu0 0
    %1262 = vmatpush1.bf16.msra.mxu0 0
    %1263 = vmatprep.subr.bf16.mxu0 0
    %1264 = vmatpush1.bf16.msra.mxu0 0
    %1265 = vmatprep.subr.bf16.mxu0 0
    %1266 = vmatpush1.bf16.msra.mxu0 0
    %1267 = vmatprep.mubr.bf16.mxu0 0
    %1268 = vmatmul.mubr.bf16.gmra.mrb[0].mxu0 %v1230
    %v1269 = vpop.f32.mrb[0].mxu0
    %v1270 = vadd.f32 0.0, %v1269
    %v1271 = vpop.f32.mrb[0].mxu0
    %v1272 = vpop.f32.mrb[0].mxu0
    %v1273 = vpop.f32.mrb[0].mxu0
    %1274 = vdwg.mxu0
    %1275 = vrot.lane.b32.xlu0 %v390, 64
    %v1276 = vpop.permute.xlu0 %1275
    %1277 = vrot.lane.b32.xlu0 %v396, 64
    %v1278 = vpop.permute.xlu0 %1277
    %v1280 = vsel %vm404, %v1276, 0
    %v1283 = vsel %vm404, %v1278, 0
    %1285 = vmatprep.subr.bf16.mxu0 0
    %1286 = vmatpush1.bf16.xpose.msra.mxu0 %v1283
    %1287 = vmatprep.subr.bf16.mxu0 0
    %1288 = vmatpush1.bf16.xpose.msra.mxu0 0
    %1289 = vmatprep.subr.bf16.mxu0 0
    %1290 = vmatpush1.bf16.xpose.msra.mxu0 0
    %1291 = vmatprep.subr.bf16.mxu0 0
    %1292 = vmatpush1.bf16.xpose.msra.mxu0 0
    %1293 = vmatprep.subr.bf16.mxu0 0
    %1294 = vmatpush1.bf16.xpose.msra.mxu0 0
    %1295 = vmatprep.subr.bf16.mxu0 0
    %1296 = vmatpush1.bf16.xpose.msra.mxu0 0
    %1297 = vmatprep.subr.bf16.mxu0 0
    %1298 = vmatpush1.bf16.xpose.msra.mxu0 0
    %1299 = vmatprep.subr.bf16.mxu0 0
    %1300 = vmatpush1.bf16.xpose.msra.mxu0 0
    %1301 = vmatprep.subr.bf16.mxu0 0
    %1302 = vmatpush1.bf16.xpose.msra.mxu0 0
    %1303 = vmatprep.subr.bf16.mxu0 0
    %1304 = vmatpush1.bf16.xpose.msra.mxu0 0
    %1305 = vmatprep.subr.bf16.mxu0 0
    %1306 = vmatpush1.bf16.xpose.msra.mxu0 0
    %1307 = vmatprep.subr.bf16.mxu0 0
    %1308 = vmatpush1.bf16.xpose.msra.mxu0 0
    %1309 = vmatprep.subr.bf16.mxu0 0
    %1310 = vmatpush1.bf16.xpose.msra.mxu0 0
    %1311 = vmatprep.subr.bf16.mxu0 0
    %1312 = vmatpush1.bf16.xpose.msra.mxu0 0
    %1313 = vmatprep.subr.bf16.mxu0 0
    %1314 = vmatpush1.bf16.xpose.msra.mxu0 0
    %1315 = vmatprep.subr.bf16.mxu0 0
    %1316 = vmatpush1.bf16.xpose.msra.mxu0 0
    %1317 = vmatprep.mubr.bf16.mxu0 0
    %1318 = vmatmul.mubr.bf16.gmra.mrb[0].mxu0 %v1280
    %v1319 = vpop.f32.mrb[0].mxu0
    %v1320 = vadd.f32 0.0, %v1319
    %v1321 = vpop.f32.mrb[0].mxu0
    %v1322 = vpop.f32.mrb[0].mxu0
    %v1323 = vpop.f32.mrb[0].mxu0
    %1324 = vdwg.mxu0
    %1325 = vrot.lane.b32.xlu0 %v391, 64
    %v1326 = vpop.permute.xlu0 %1325
    %1327 = vrot.lane.b32.xlu0 %v397, 64
    %v1328 = vpop.permute.xlu0 %1327
    %v1330 = vsel %vm404, %v1326, 0
    %v1333 = vsel %vm404, %v1328, 0
    %1335 = vmatprep.subr.bf16.mxu0 0
    %1336 = vmatpush1.bf16.xpose.msra.mxu0 %v1333
    %1337 = vmatprep.subr.bf16.mxu0 0
    %1338 = vmatpush1.bf16.xpose.msra.mxu0 0
    %1339 = vmatprep.subr.bf16.mxu0 0
    %1340 = vmatpush1.bf16.xpose.msra.mxu0 0
    %1341 = vmatprep.subr.bf16.mxu0 0
    %1342 = vmatpush1.bf16.xpose.msra.mxu0 0
    %1343 = vmatprep.subr.bf16.mxu0 0
    %1344 = vmatpush1.bf16.xpose.msra.mxu0 0
    %1345 = vmatprep.subr.bf16.mxu0 0
    %1346 = vmatpush1.bf16.xpose.msra.mxu0 0
    %1347 = vmatprep.subr.bf16.mxu0 0
    %1348 = vmatpush1.bf16.xpose.msra.mxu0 0
    %1349 = vmatprep.subr.bf16.mxu0 0
    %1350 = vmatpush1.bf16.xpose.msra.mxu0 0
    %1351 = vmatprep.subr.bf16.mxu0 0
    %1352 = vmatpush1.bf16.xpose.msra.mxu0 0
    %1353 = vmatprep.subr.bf16.mxu0 0
    %1354 = vmatpush1.bf16.xpose.msra.mxu0 0
    %1355 = vmatprep.subr.bf16.mxu0 0
    %1356 = vmatpush1.bf16.xpose.msra.mxu0 0
    %1357 = vmatprep.subr.bf16.mxu0 0
    %1358 = vmatpush1.bf16.xpose.msra.mxu0 0
    %1359 = vmatprep.subr.bf16.mxu0 0
    %1360 = vmatpush1.bf16.xpose.msra.mxu0 0
    %1361 = vmatprep.subr.bf16.mxu0 0
    %1362 = vmatpush1.bf16.xpose.msra.mxu0 0
    %1363 = vmatprep.subr.bf16.mxu0 0
    %1364 = vmatpush1.bf16.xpose.msra.mxu0 0
    %1365 = vmatprep.subr.bf16.mxu0 0
    %1366 = vmatpush1.bf16.xpose.msra.mxu0 0
    %1367 = vmatprep.mubr.bf16.mxu0 0
    %1368 = vmatmul.mubr.bf16.gmra.mrb[0].mxu0 %v1330
    %v1369 = vpop.f32.mrb[0].mxu0
    %v1370 = vadd.f32 0.0, %v1369
    %v1371 = vpop.f32.mrb[0].mxu0
    %v1372 = vpop.f32.mrb[0].mxu0
    %v1373 = vpop.f32.mrb[0].mxu0
    %1374 = vdwg.mxu0
    %v1375 = vsel %vm497, %v1320, -inf
    %1376 = vmax.xlane.f32.xlu0 %v1375
    %v1377 = vpop.xlane.xlu0 %1376
    %v1378 = vsel %vm497, %v1370, -inf
    %1379 = vmax.xlane.f32.xlu0 %v1378
    %v1380 = vpop.xlane.xlu0 %1379
    %v1381 = vsub.f32 %v1320, %v1377
    %v1382 = vsub.f32 %v1370, %v1380
    %v1383 = vmul.f32 %v1381, 1.442695
    %v1384 = vpow.pop %v1383
    %v1385 = vmul.f32 %v1382, 1.442695
    %v1386 = vpow.pop %v1385
    %v1387 = vsel %vm497, %v1384, 0.0
    %1388 = vadd.xlane.f32.xlu0 %v1387
    %v1389 = vpop.xlane.xlu0 %1388
    %v1390 = vsel %vm497, %v1386, 0.0
    %1391 = vadd.xlane.f32.xlu0 %v1390
    %v1392 = vpop.xlane.xlu0 %1391
    %v1393 = vrcp.pop %v1389
    %v1394 = vrcp.pop %v1392
    %v1395 = vmul.f32 %v1384, %v1393
    %v1396 = vmul.f32 %v1386, %v1394
    %v1397 = vpack.c.bf16 %v1395, %v1395
    %v1398 = vpack.c.bf16 %v1396, %v1396
    %1399 = vrot.lane.b32.xlu0 %v402, 64
    %v1400 = vpop.permute.xlu0 %1399
    %v1402 = vsel %vm497, %v1397, 0
    %v1405 = vsel %vm525, %v1400, 0
    %1407 = vmatprep.subr.bf16.mxu0 0
    %1408 = vmatpush1.bf16.msra.mxu0 %v1405
    %1409 = vmatprep.subr.bf16.mxu0 0
    %1410 = vmatpush1.bf16.msra.mxu0 0
    %1411 = vmatprep.subr.bf16.mxu0 0
    %1412 = vmatpush1.bf16.msra.mxu0 0
    %1413 = vmatprep.subr.bf16.mxu0 0
    %1414 = vmatpush1.bf16.msra.mxu0 0
    %1415 = vmatprep.subr.bf16.mxu0 0
    %1416 = vmatpush1.bf16.msra.mxu0 0
    %1417 = vmatprep.subr.bf16.mxu0 0
    %1418 = vmatpush1.bf16.msra.mxu0 0
    %1419 = vmatprep.subr.bf16.mxu0 0
    %1420 = vmatpush1.bf16.msra.mxu0 0
    %1421 = vmatprep.subr.bf16.mxu0 0
    %1422 = vmatpush1.bf16.msra.mxu0 0
    %1423 = vmatprep.subr.bf16.mxu0 0
    %1424 = vmatpush1.bf16.msra.mxu0 0
    %1425 = vmatprep.subr.bf16.mxu0 0
    %1426 = vmatpush1.bf16.msra.mxu0 0
    %1427 = vmatprep.subr.bf16.mxu0 0
    %1428 = vmatpush1.bf16.msra.mxu0 0
    %1429 = vmatprep.subr.bf16.mxu0 0
    %1430 = vmatpush1.bf16.msra.mxu0 0
    %1431 = vmatprep.subr.bf16.mxu0 0
    %1432 = vmatpush1.bf16.msra.mxu0 0
    %1433 = vmatprep.subr.bf16.mxu0 0
    %1434 = vmatpush1.bf16.msra.mxu0 0
    %1435 = vmatprep.subr.bf16.mxu0 0
    %1436 = vmatpush1.bf16.msra.mxu0 0
    %1437 = vmatprep.subr.bf16.mxu0 0
    %1438 = vmatpush1.bf16.msra.mxu0 0
    %1439 = vmatprep.mubr.bf16.mxu0 0
    %1440 = vmatmul.mubr.bf16.gmra.mrb[0].mxu0 %v1402
    %v1441 = vpop.f32.mrb[0].mxu0
    %v1442 = vadd.f32 0.0, %v1441
    %v1443 = vpop.f32.mrb[0].mxu0
    %v1444 = vpop.f32.mrb[0].mxu0
    %v1445 = vpop.f32.mrb[0].mxu0
    %1446 = vdwg.mxu0
    %1447 = vrot.lane.b32.xlu0 %v403, 64
    %v1448 = vpop.permute.xlu0 %1447
    %v1450 = vsel %vm497, %v1398, 0
    %v1453 = vsel %vm525, %v1448, 0
    %1455 = vmatprep.subr.bf16.mxu0 0
    %1456 = vmatpush1.bf16.msra.mxu0 %v1453
    %1457 = vmatprep.subr.bf16.mxu0 0
    %1458 = vmatpush1.bf16.msra.mxu0 0
    %1459 = vmatprep.subr.bf16.mxu0 0
    %1460 = vmatpush1.bf16.msra.mxu0 0
    %1461 = vmatprep.subr.bf16.mxu0 0
    %1462 = vmatpush1.bf16.msra.mxu0 0
    %1463 = vmatprep.subr.bf16.mxu0 0
    %1464 = vmatpush1.bf16.msra.mxu0 0
    %1465 = vmatprep.subr.bf16.mxu0 0
    %1466 = vmatpush1.bf16.msra.mxu0 0
    %1467 = vmatprep.subr.bf16.mxu0 0
    %1468 = vmatpush1.bf16.msra.mxu0 0
    %1469 = vmatprep.subr.bf16.mxu0 0
    %1470 = vmatpush1.bf16.msra.mxu0 0
    %1471 = vmatprep.subr.bf16.mxu0 0
    %1472 = vmatpush1.bf16.msra.mxu0 0
    %1473 = vmatprep.subr.bf16.mxu0 0
    %1474 = vmatpush1.bf16.msra.mxu0 0
    %1475 = vmatprep.subr.bf16.mxu0 0
    %1476 = vmatpush1.bf16.msra.mxu0 0
    %1477 = vmatprep.subr.bf16.mxu0 0
    %1478 = vmatpush1.bf16.msra.mxu0 0
    %1479 = vmatprep.subr.bf16.mxu0 0
    %1480 = vmatpush1.bf16.msra.mxu0 0
    %1481 = vmatprep.subr.bf16.mxu0 0
    %1482 = vmatpush1.bf16.msra.mxu0 0
    %1483 = vmatprep.subr.bf16.mxu0 0
    %1484 = vmatpush1.bf16.msra.mxu0 0
    %1485 = vmatprep.subr.bf16.mxu0 0
    %1486 = vmatpush1.bf16.msra.mxu0 0
    %1487 = vmatprep.mubr.bf16.mxu0 0
    %1488 = vmatmul.mubr.bf16.gmra.mrb[0].mxu0 %v1450
    %v1489 = vpop.f32.mrb[0].mxu0
    %v1490 = vadd.f32 0.0, %v1489
    %v1491 = vpop.f32.mrb[0].mxu0
    %v1492 = vpop.f32.mrb[0].mxu0
    %v1493 = vpop.f32.mrb[0].mxu0
    %1494 = vdwg.mxu0
    %1495 = vrot.lane.b32.xlu0 %v390, 48
    %v1496 = vpop.permute.xlu0 %1495
    %1497 = vrot.lane.b32.xlu0 %v396, 48
    %v1498 = vpop.permute.xlu0 %1497
    %v1500 = vsel %vm404, %v1496, 0
    %v1503 = vsel %vm404, %v1498, 0
    %1505 = vmatprep.subr.bf16.mxu0 0
    %1506 = vmatpush1.bf16.xpose.msra.mxu0 %v1503
    %1507 = vmatprep.subr.bf16.mxu0 0
    %1508 = vmatpush1.bf16.xpose.msra.mxu0 0
    %1509 = vmatprep.subr.bf16.mxu0 0
    %1510 = vmatpush1.bf16.xpose.msra.mxu0 0
    %1511 = vmatprep.subr.bf16.mxu0 0
    %1512 = vmatpush1.bf16.xpose.msra.mxu0 0
    %1513 = vmatprep.subr.bf16.mxu0 0
    %1514 = vmatpush1.bf16.xpose.msra.mxu0 0
    %1515 = vmatprep.subr.bf16.mxu0 0
    %1516 = vmatpush1.bf16.xpose.msra.mxu0 0
    %1517 = vmatprep.subr.bf16.mxu0 0
    %1518 = vmatpush1.bf16.xpose.msra.mxu0 0
    %1519 = vmatprep.subr.bf16.mxu0 0
    %1520 = vmatpush1.bf16.xpose.msra.mxu0 0
    %1521 = vmatprep.subr.bf16.mxu0 0
    %1522 = vmatpush1.bf16.xpose.msra.mxu0 0
    %1523 = vmatprep.subr.bf16.mxu0 0
    %1524 = vmatpush1.bf16.xpose.msra.mxu0 0
    %1525 = vmatprep.subr.bf16.mxu0 0
    %1526 = vmatpush1.bf16.xpose.msra.mxu0 0
    %1527 = vmatprep.subr.bf16.mxu0 0
    %1528 = vmatpush1.bf16.xpose.msra.mxu0 0
    %1529 = vmatprep.subr.bf16.mxu0 0
    %1530 = vmatpush1.bf16.xpose.msra.mxu0 0
    %1531 = vmatprep.subr.bf16.mxu0 0
    %1532 = vmatpush1.bf16.xpose.msra.mxu0 0
    %1533 = vmatprep.subr.bf16.mxu0 0
    %1534 = vmatpush1.bf16.xpose.msra.mxu0 0
    %1535 = vmatprep.subr.bf16.mxu0 0
    %1536 = vmatpush1.bf16.xpose.msra.mxu0 0
    %1537 = vmatprep.mubr.bf16.mxu0 0
    %1538 = vmatmul.mubr.bf16.gmra.mrb[0].mxu0 %v1500
    %v1539 = vpop.f32.mrb[0].mxu0
    %v1540 = vadd.f32 0.0, %v1539
    %v1541 = vpop.f32.mrb[0].mxu0
    %v1542 = vpop.f32.mrb[0].mxu0
    %v1543 = vpop.f32.mrb[0].mxu0
    %1544 = vdwg.mxu0
    %1545 = vrot.lane.b32.xlu0 %v391, 48
    %v1546 = vpop.permute.xlu0 %1545
    %1547 = vrot.lane.b32.xlu0 %v397, 48
    %v1548 = vpop.permute.xlu0 %1547
    %v1550 = vsel %vm404, %v1546, 0
    %v1553 = vsel %vm404, %v1548, 0
    %1555 = vmatprep.subr.bf16.mxu0 0
    %1556 = vmatpush1.bf16.xpose.msra.mxu0 %v1553
    %1557 = vmatprep.subr.bf16.mxu0 0
    %1558 = vmatpush1.bf16.xpose.msra.mxu0 0
    %1559 = vmatprep.subr.bf16.mxu0 0
    %1560 = vmatpush1.bf16.xpose.msra.mxu0 0
    %1561 = vmatprep.subr.bf16.mxu0 0
    %1562 = vmatpush1.bf16.xpose.msra.mxu0 0
    %1563 = vmatprep.subr.bf16.mxu0 0
    %1564 = vmatpush1.bf16.xpose.msra.mxu0 0
    %1565 = vmatprep.subr.bf16.mxu0 0
    %1566 = vmatpush1.bf16.xpose.msra.mxu0 0
    %1567 = vmatprep.subr.bf16.mxu0 0
    %1568 = vmatpush1.bf16.xpose.msra.mxu0 0
    %1569 = vmatprep.subr.bf16.mxu0 0
    %1570 = vmatpush1.bf16.xpose.msra.mxu0 0
    %1571 = vmatprep.subr.bf16.mxu0 0
    %1572 = vmatpush1.bf16.xpose.msra.mxu0 0
    %1573 = vmatprep.subr.bf16.mxu0 0
    %1574 = vmatpush1.bf16.xpose.msra.mxu0 0
    %1575 = vmatprep.subr.bf16.mxu0 0
    %1576 = vmatpush1.bf16.xpose.msra.mxu0 0
    %1577 = vmatprep.subr.bf16.mxu0 0
    %1578 = vmatpush1.bf16.xpose.msra.mxu0 0
    %1579 = vmatprep.subr.bf16.mxu0 0
    %1580 = vmatpush1.bf16.xpose.msra.mxu0 0
    %1581 = vmatprep.subr.bf16.mxu0 0
    %1582 = vmatpush1.bf16.xpose.msra.mxu0 0
    %1583 = vmatprep.subr.bf16.mxu0 0
    %1584 = vmatpush1.bf16.xpose.msra.mxu0 0
    %1585 = vmatprep.subr.bf16.mxu0 0
    %1586 = vmatpush1.bf16.xpose.msra.mxu0 0
    %1587 = vmatprep.mubr.bf16.mxu0 0
    %1588 = vmatmul.mubr.bf16.gmra.mrb[0].mxu0 %v1550
    %v1589 = vpop.f32.mrb[0].mxu0
    %v1590 = vadd.f32 0.0, %v1589
    %v1591 = vpop.f32.mrb[0].mxu0
    %v1592 = vpop.f32.mrb[0].mxu0
    %v1593 = vpop.f32.mrb[0].mxu0
    %1594 = vdwg.mxu0
    %v1595 = vsel %vm497, %v1540, -inf
    %1596 = vmax.xlane.f32.xlu0 %v1595
    %v1597 = vpop.xlane.xlu0 %1596
    %v1598 = vsel %vm497, %v1590, -inf
    %1599 = vmax.xlane.f32.xlu0 %v1598
    %v1600 = vpop.xlane.xlu0 %1599
    %v1601 = vsub.f32 %v1540, %v1597
    %v1602 = vsub.f32 %v1590, %v1600
    %v1603 = vmul.f32 %v1601, 1.442695
    %v1604 = vpow.pop %v1603
    %v1605 = vmul.f32 %v1602, 1.442695
    %v1606 = vpow.pop %v1605
    %v1607 = vsel %vm497, %v1604, 0.0
    %1608 = vadd.xlane.f32.xlu0 %v1607
    %v1609 = vpop.xlane.xlu0 %1608
    %v1610 = vsel %vm497, %v1606, 0.0
    %1611 = vadd.xlane.f32.xlu0 %v1610
    %v1612 = vpop.xlane.xlu0 %1611
    %v1613 = vrcp.pop %v1609
    %v1614 = vrcp.pop %v1612
    %v1615 = vmul.f32 %v1604, %v1613
    %v1616 = vmul.f32 %v1606, %v1614
    %v1617 = vpack.c.bf16 %v1615, %v1615
    %v1618 = vpack.c.bf16 %v1616, %v1616
    %1619 = vrot.lane.b32.xlu0 %v402, 48
    %v1620 = vpop.permute.xlu0 %1619
    %v1622 = vsel %vm497, %v1617, 0
    %v1625 = vsel %vm525, %v1620, 0
    %1627 = vmatprep.subr.bf16.mxu0 0
    %1628 = vmatpush1.bf16.msra.mxu0 %v1625
    %1629 = vmatprep.subr.bf16.mxu0 0
    %1630 = vmatpush1.bf16.msra.mxu0 0
    %1631 = vmatprep.subr.bf16.mxu0 0
    %1632 = vmatpush1.bf16.msra.mxu0 0
    %1633 = vmatprep.subr.bf16.mxu0 0
    %1634 = vmatpush1.bf16.msra.mxu0 0
    %1635 = vmatprep.subr.bf16.mxu0 0
    %1636 = vmatpush1.bf16.msra.mxu0 0
    %1637 = vmatprep.subr.bf16.mxu0 0
    %1638 = vmatpush1.bf16.msra.mxu0 0
    %1639 = vmatprep.subr.bf16.mxu0 0
    %1640 = vmatpush1.bf16.msra.mxu0 0
    %1641 = vmatprep.subr.bf16.mxu0 0
    %1642 = vmatpush1.bf16.msra.mxu0 0
    %1643 = vmatprep.subr.bf16.mxu0 0
    %1644 = vmatpush1.bf16.msra.mxu0 0
    %1645 = vmatprep.subr.bf16.mxu0 0
    %1646 = vmatpush1.bf16.msra.mxu0 0
    %1647 = vmatprep.subr.bf16.mxu0 0
    %1648 = vmatpush1.bf16.msra.mxu0 0
    %1649 = vmatprep.subr.bf16.mxu0 0
    %1650 = vmatpush1.bf16.msra.mxu0 0
    %1651 = vmatprep.subr.bf16.mxu0 0
    %1652 = vmatpush1.bf16.msra.mxu0 0
    %1653 = vmatprep.subr.bf16.mxu0 0
    %1654 = vmatpush1.bf16.msra.mxu0 0
    %1655 = vmatprep.subr.bf16.mxu0 0
    %1656 = vmatpush1.bf16.msra.mxu0 0
    %1657 = vmatprep.subr.bf16.mxu0 0
    %1658 = vmatpush1.bf16.msra.mxu0 0
    %1659 = vmatprep.mubr.bf16.mxu0 0
    %1660 = vmatmul.mubr.bf16.gmra.mrb[0].mxu0 %v1622
    %v1661 = vpop.f32.mrb[0].mxu0
    %v1662 = vadd.f32 0.0, %v1661
    %v1663 = vpop.f32.mrb[0].mxu0
    %v1664 = vpop.f32.mrb[0].mxu0
    %v1665 = vpop.f32.mrb[0].mxu0
    %1666 = vdwg.mxu0
    %1667 = vrot.lane.b32.xlu0 %v403, 48
    %v1668 = vpop.permute.xlu0 %1667
    %v1670 = vsel %vm497, %v1618, 0
    %v1673 = vsel %vm525, %v1668, 0
    %1675 = vmatprep.subr.bf16.mxu0 0
    %1676 = vmatpush1.bf16.msra.mxu0 %v1673
    %1677 = vmatprep.subr.bf16.mxu0 0
    %1678 = vmatpush1.bf16.msra.mxu0 0
    %1679 = vmatprep.subr.bf16.mxu0 0
    %1680 = vmatpush1.bf16.msra.mxu0 0
    %1681 = vmatprep.subr.bf16.mxu0 0
    %1682 = vmatpush1.bf16.msra.mxu0 0
    %1683 = vmatprep.subr.bf16.mxu0 0
    %1684 = vmatpush1.bf16.msra.mxu0 0
    %1685 = vmatprep.subr.bf16.mxu0 0
    %1686 = vmatpush1.bf16.msra.mxu0 0
    %1687 = vmatprep.subr.bf16.mxu0 0
    %1688 = vmatpush1.bf16.msra.mxu0 0
    %1689 = vmatprep.subr.bf16.mxu0 0
    %1690 = vmatpush1.bf16.msra.mxu0 0
    %1691 = vmatprep.subr.bf16.mxu0 0
    %1692 = vmatpush1.bf16.msra.mxu0 0
    %1693 = vmatprep.subr.bf16.mxu0 0
    %1694 = vmatpush1.bf16.msra.mxu0 0
    %1695 = vmatprep.subr.bf16.mxu0 0
    %1696 = vmatpush1.bf16.msra.mxu0 0
    %1697 = vmatprep.subr.bf16.mxu0 0
    %1698 = vmatpush1.bf16.msra.mxu0 0
    %1699 = vmatprep.subr.bf16.mxu0 0
    %1700 = vmatpush1.bf16.msra.mxu0 0
    %1701 = vmatprep.subr.bf16.mxu0 0
    %1702 = vmatpush1.bf16.msra.mxu0 0
    %1703 = vmatprep.subr.bf16.mxu0 0
    %1704 = vmatpush1.bf16.msra.mxu0 0
    %1705 = vmatprep.subr.bf16.mxu0 0
    %1706 = vmatpush1.bf16.msra.mxu0 0
    %1707 = vmatprep.mubr.bf16.mxu0 0
    %1708 = vmatmul.mubr.bf16.gmra.mrb[0].mxu0 %v1670
    %v1709 = vpop.f32.mrb[0].mxu0
    %v1710 = vadd.f32 0.0, %v1709
    %v1711 = vpop.f32.mrb[0].mxu0
    %v1712 = vpop.f32.mrb[0].mxu0
    %v1713 = vpop.f32.mrb[0].mxu0
    %1714 = vdwg.mxu0
    %1715 = vrot.lane.b32.xlu0 %v390, 32
    %v1716 = vpop.permute.xlu0 %1715
    %1717 = vrot.lane.b32.xlu0 %v396, 32
    %v1718 = vpop.permute.xlu0 %1717
    %v1720 = vsel %vm404, %v1716, 0
    %v1723 = vsel %vm404, %v1718, 0
    %1725 = vmatprep.subr.bf16.mxu0 0
    %1726 = vmatpush1.bf16.xpose.msra.mxu0 %v1723
    %1727 = vmatprep.subr.bf16.mxu0 0
    %1728 = vmatpush1.bf16.xpose.msra.mxu0 0
    %1729 = vmatprep.subr.bf16.mxu0 0
    %1730 = vmatpush1.bf16.xpose.msra.mxu0 0
    %1731 = vmatprep.subr.bf16.mxu0 0
    %1732 = vmatpush1.bf16.xpose.msra.mxu0 0
    %1733 = vmatprep.subr.bf16.mxu0 0
    %1734 = vmatpush1.bf16.xpose.msra.mxu0 0
    %1735 = vmatprep.subr.bf16.mxu0 0
    %1736 = vmatpush1.bf16.xpose.msra.mxu0 0
    %1737 = vmatprep.subr.bf16.mxu0 0
    %1738 = vmatpush1.bf16.xpose.msra.mxu0 0
    %1739 = vmatprep.subr.bf16.mxu0 0
    %1740 = vmatpush1.bf16.xpose.msra.mxu0 0
    %1741 = vmatprep.subr.bf16.mxu0 0
    %1742 = vmatpush1.bf16.xpose.msra.mxu0 0
    %1743 = vmatprep.subr.bf16.mxu0 0
    %1744 = vmatpush1.bf16.xpose.msra.mxu0 0
    %1745 = vmatprep.subr.bf16.mxu0 0
    %1746 = vmatpush1.bf16.xpose.msra.mxu0 0
    %1747 = vmatprep.subr.bf16.mxu0 0
    %1748 = vmatpush1.bf16.xpose.msra.mxu0 0
    %1749 = vmatprep.subr.bf16.mxu0 0
    %1750 = vmatpush1.bf16.xpose.msra.mxu0 0
    %1751 = vmatprep.subr.bf16.mxu0 0
    %1752 = vmatpush1.bf16.xpose.msra.mxu0 0
    %1753 = vmatprep.subr.bf16.mxu0 0
    %1754 = vmatpush1.bf16.xpose.msra.mxu0 0
    %1755 = vmatprep.subr.bf16.mxu0 0
    %1756 = vmatpush1.bf16.xpose.msra.mxu0 0
    %1757 = vmatprep.mubr.bf16.mxu0 0
    %1758 = vmatmul.mubr.bf16.gmra.mrb[0].mxu0 %v1720
    %v1759 = vpop.f32.mrb[0].mxu0
    %v1760 = vadd.f32 0.0, %v1759
    %v1761 = vpop.f32.mrb[0].mxu0
    %v1762 = vpop.f32.mrb[0].mxu0
    %v1763 = vpop.f32.mrb[0].mxu0
    %1764 = vdwg.mxu0
    %1765 = vrot.lane.b32.xlu0 %v391, 32
    %v1766 = vpop.permute.xlu0 %1765
    %1767 = vrot.lane.b32.xlu0 %v397, 32
    %v1768 = vpop.permute.xlu0 %1767
    %v1770 = vsel %vm404, %v1766, 0
    %v1773 = vsel %vm404, %v1768, 0
    %1775 = vmatprep.subr.bf16.mxu0 0
    %1776 = vmatpush1.bf16.xpose.msra.mxu0 %v1773
    %1777 = vmatprep.subr.bf16.mxu0 0
    %1778 = vmatpush1.bf16.xpose.msra.mxu0 0
    %1779 = vmatprep.subr.bf16.mxu0 0
    %1780 = vmatpush1.bf16.xpose.msra.mxu0 0
    %1781 = vmatprep.subr.bf16.mxu0 0
    %1782 = vmatpush1.bf16.xpose.msra.mxu0 0
    %1783 = vmatprep.subr.bf16.mxu0 0
    %1784 = vmatpush1.bf16.xpose.msra.mxu0 0
    %1785 = vmatprep.subr.bf16.mxu0 0
    %1786 = vmatpush1.bf16.xpose.msra.mxu0 0
    %1787 = vmatprep.subr.bf16.mxu0 0
    %1788 = vmatpush1.bf16.xpose.msra.mxu0 0
    %1789 = vmatprep.subr.bf16.mxu0 0
    %1790 = vmatpush1.bf16.xpose.msra.mxu0 0
    %1791 = vmatprep.subr.bf16.mxu0 0
    %1792 = vmatpush1.bf16.xpose.msra.mxu0 0
    %1793 = vmatprep.subr.bf16.mxu0 0
    %1794 = vmatpush1.bf16.xpose.msra.mxu0 0
    %1795 = vmatprep.subr.bf16.mxu0 0
    %1796 = vmatpush1.bf16.xpose.msra.mxu0 0
    %1797 = vmatprep.subr.bf16.mxu0 0
    %1798 = vmatpush1.bf16.xpose.msra.mxu0 0
    %1799 = vmatprep.subr.bf16.mxu0 0
    %1800 = vmatpush1.bf16.xpose.msra.mxu0 0
    %1801 = vmatprep.subr.bf16.mxu0 0
    %1802 = vmatpush1.bf16.xpose.msra.mxu0 0
    %1803 = vmatprep.subr.bf16.mxu0 0
    %1804 = vmatpush1.bf16.xpose.msra.mxu0 0
    %1805 = vmatprep.subr.bf16.mxu0 0
    %1806 = vmatpush1.bf16.xpose.msra.mxu0 0
    %1807 = vmatprep.mubr.bf16.mxu0 0
    %1808 = vmatmul.mubr.bf16.gmra.mrb[0].mxu0 %v1770
    %v1809 = vpop.f32.mrb[0].mxu0
    %v1810 = vadd.f32 0.0, %v1809
    %v1811 = vpop.f32.mrb[0].mxu0
    %v1812 = vpop.f32.mrb[0].mxu0
    %v1813 = vpop.f32.mrb[0].mxu0
    %1814 = vdwg.mxu0
    %v1815 = vsel %vm497, %v1760, -inf
    %1816 = vmax.xlane.f32.xlu0 %v1815
    %v1817 = vpop.xlane.xlu0 %1816
    %v1818 = vsel %vm497, %v1810, -inf
    %1819 = vmax.xlane.f32.xlu0 %v1818
    %v1820 = vpop.xlane.xlu0 %1819
    %v1821 = vsub.f32 %v1760, %v1817
    %v1822 = vsub.f32 %v1810, %v1820
    %v1823 = vmul.f32 %v1821, 1.442695
    %v1824 = vpow.pop %v1823
    %v1825 = vmul.f32 %v1822, 1.442695
    %v1826 = vpow.pop %v1825
    %v1827 = vsel %vm497, %v1824, 0.0
    %1828 = vadd.xlane.f32.xlu0 %v1827
    %v1829 = vpop.xlane.xlu0 %1828
    %v1830 = vsel %vm497, %v1826, 0.0
    %1831 = vadd.xlane.f32.xlu0 %v1830
    %v1832 = vpop.xlane.xlu0 %1831
    %v1833 = vrcp.pop %v1829
    %v1834 = vrcp.pop %v1832
    %v1835 = vmul.f32 %v1824, %v1833
    %v1836 = vmul.f32 %v1826, %v1834
    %v1837 = vpack.c.bf16 %v1835, %v1835
    %v1838 = vpack.c.bf16 %v1836, %v1836
    %1839 = vrot.lane.b32.xlu0 %v402, 32
    %v1840 = vpop.permute.xlu0 %1839
    %v1842 = vsel %vm497, %v1837, 0
    %v1845 = vsel %vm525, %v1840, 0
    %1847 = vmatprep.subr.bf16.mxu0 0
    %1848 = vmatpush1.bf16.msra.mxu0 %v1845
    %1849 = vmatprep.subr.bf16.mxu0 0
    %1850 = vmatpush1.bf16.msra.mxu0 0
    %1851 = vmatprep.subr.bf16.mxu0 0
    %1852 = vmatpush1.bf16.msra.mxu0 0
    %1853 = vmatprep.subr.bf16.mxu0 0
    %1854 = vmatpush1.bf16.msra.mxu0 0
    %1855 = vmatprep.subr.bf16.mxu0 0
    %1856 = vmatpush1.bf16.msra.mxu0 0
    %1857 = vmatprep.subr.bf16.mxu0 0
    %1858 = vmatpush1.bf16.msra.mxu0 0
    %1859 = vmatprep.subr.bf16.mxu0 0
    %1860 = vmatpush1.bf16.msra.mxu0 0
    %1861 = vmatprep.subr.bf16.mxu0 0
    %1862 = vmatpush1.bf16.msra.mxu0 0
    %1863 = vmatprep.subr.bf16.mxu0 0
    %1864 = vmatpush1.bf16.msra.mxu0 0
    %1865 = vmatprep.subr.bf16.mxu0 0
    %1866 = vmatpush1.bf16.msra.mxu0 0
    %1867 = vmatprep.subr.bf16.mxu0 0
    %1868 = vmatpush1.bf16.msra.mxu0 0
    %1869 = vmatprep.subr.bf16.mxu0 0
    %1870 = vmatpush1.bf16.msra.mxu0 0
    %1871 = vmatprep.subr.bf16.mxu0 0
    %1872 = vmatpush1.bf16.msra.mxu0 0
    %1873 = vmatprep.subr.bf16.mxu0 0
    %1874 = vmatpush1.bf16.msra.mxu0 0
    %1875 = vmatprep.subr.bf16.mxu0 0
    %1876 = vmatpush1.bf16.msra.mxu0 0
    %1877 = vmatprep.subr.bf16.mxu0 0
    %1878 = vmatpush1.bf16.msra.mxu0 0
    %1879 = vmatprep.mubr.bf16.mxu0 0
    %1880 = vmatmul.mubr.bf16.gmra.mrb[0].mxu0 %v1842
    %v1881 = vpop.f32.mrb[0].mxu0
    %v1882 = vadd.f32 0.0, %v1881
    %v1883 = vpop.f32.mrb[0].mxu0
    %v1884 = vpop.f32.mrb[0].mxu0
    %v1885 = vpop.f32.mrb[0].mxu0
    %1886 = vdwg.mxu0
    %1887 = vrot.lane.b32.xlu0 %v403, 32
    %v1888 = vpop.permute.xlu0 %1887
    %v1890 = vsel %vm497, %v1838, 0
    %v1893 = vsel %vm525, %v1888, 0
    %1895 = vmatprep.subr.bf16.mxu0 0
    %1896 = vmatpush1.bf16.msra.mxu0 %v1893
    %1897 = vmatprep.subr.bf16.mxu0 0
    %1898 = vmatpush1.bf16.msra.mxu0 0
    %1899 = vmatprep.subr.bf16.mxu0 0
    %1900 = vmatpush1.bf16.msra.mxu0 0
    %1901 = vmatprep.subr.bf16.mxu0 0
    %1902 = vmatpush1.bf16.msra.mxu0 0
    %1903 = vmatprep.subr.bf16.mxu0 0
    %1904 = vmatpush1.bf16.msra.mxu0 0
    %1905 = vmatprep.subr.bf16.mxu0 0
    %1906 = vmatpush1.bf16.msra.mxu0 0
    %1907 = vmatprep.subr.bf16.mxu0 0
    %1908 = vmatpush1.bf16.msra.mxu0 0
    %1909 = vmatprep.subr.bf16.mxu0 0
    %1910 = vmatpush1.bf16.msra.mxu0 0
    %1911 = vmatprep.subr.bf16.mxu0 0
    %1912 = vmatpush1.bf16.msra.mxu0 0
    %1913 = vmatprep.subr.bf16.mxu0 0
    %1914 = vmatpush1.bf16.msra.mxu0 0
    %1915 = vmatprep.subr.bf16.mxu0 0
    %1916 = vmatpush1.bf16.msra.mxu0 0
    %1917 = vmatprep.subr.bf16.mxu0 0
    %1918 = vmatpush1.bf16.msra.mxu0 0
    %1919 = vmatprep.subr.bf16.mxu0 0
    %1920 = vmatpush1.bf16.msra.mxu0 0
    %1921 = vmatprep.subr.bf16.mxu0 0
    %1922 = vmatpush1.bf16.msra.mxu0 0
    %1923 = vmatprep.subr.bf16.mxu0 0
    %1924 = vmatpush1.bf16.msra.mxu0 0
    %1925 = vmatprep.subr.bf16.mxu0 0
    %1926 = vmatpush1.bf16.msra.mxu0 0
    %1927 = vmatprep.mubr.bf16.mxu0 0
    %1928 = vmatmul.mubr.bf16.gmra.mrb[0].mxu0 %v1890
    %v1929 = vpop.f32.mrb[0].mxu0
    %v1930 = vadd.f32 0.0, %v1929
    %v1931 = vpop.f32.mrb[0].mxu0
    %v1932 = vpop.f32.mrb[0].mxu0
    %v1933 = vpop.f32.mrb[0].mxu0
    %1934 = vdwg.mxu0
    %1935 = vrot.lane.b32.xlu0 %v390, 16
    %v1936 = vpop.permute.xlu0 %1935
    %1937 = vrot.lane.b32.xlu0 %v396, 16
    %v1938 = vpop.permute.xlu0 %1937
    %v1940 = vsel %vm404, %v1936, 0
    %v1943 = vsel %vm404, %v1938, 0
    %1945 = vmatprep.subr.bf16.mxu0 0
    %1946 = vmatpush1.bf16.xpose.msra.mxu0 %v1943
    %1947 = vmatprep.subr.bf16.mxu0 0
    %1948 = vmatpush1.bf16.xpose.msra.mxu0 0
    %1949 = vmatprep.subr.bf16.mxu0 0
    %1950 = vmatpush1.bf16.xpose.msra.mxu0 0
    %1951 = vmatprep.subr.bf16.mxu0 0
    %1952 = vmatpush1.bf16.xpose.msra.mxu0 0
    %1953 = vmatprep.subr.bf16.mxu0 0
    %1954 = vmatpush1.bf16.xpose.msra.mxu0 0
    %1955 = vmatprep.subr.bf16.mxu0 0
    %1956 = vmatpush1.bf16.xpose.msra.mxu0 0
    %1957 = vmatprep.subr.bf16.mxu0 0
    %1958 = vmatpush1.bf16.xpose.msra.mxu0 0
    %1959 = vmatprep.subr.bf16.mxu0 0
    %1960 = vmatpush1.bf16.xpose.msra.mxu0 0
    %1961 = vmatprep.subr.bf16.mxu0 0
    %1962 = vmatpush1.bf16.xpose.msra.mxu0 0
    %1963 = vmatprep.subr.bf16.mxu0 0
    %1964 = vmatpush1.bf16.xpose.msra.mxu0 0
    %1965 = vmatprep.subr.bf16.mxu0 0
    %1966 = vmatpush1.bf16.xpose.msra.mxu0 0
    %1967 = vmatprep.subr.bf16.mxu0 0
    %1968 = vmatpush1.bf16.xpose.msra.mxu0 0
    %1969 = vmatprep.subr.bf16.mxu0 0
    %1970 = vmatpush1.bf16.xpose.msra.mxu0 0
    %1971 = vmatprep.subr.bf16.mxu0 0
    %1972 = vmatpush1.bf16.xpose.msra.mxu0 0
    %1973 = vmatprep.subr.bf16.mxu0 0
    %1974 = vmatpush1.bf16.xpose.msra.mxu0 0
    %1975 = vmatprep.subr.bf16.mxu0 0
    %1976 = vmatpush1.bf16.xpose.msra.mxu0 0
    %1977 = vmatprep.mubr.bf16.mxu0 0
    %1978 = vmatmul.mubr.bf16.gmra.mrb[0].mxu0 %v1940
    %v1979 = vpop.f32.mrb[0].mxu0
    %v1980 = vadd.f32 0.0, %v1979
    %v1981 = vpop.f32.mrb[0].mxu0
    %v1982 = vpop.f32.mrb[0].mxu0
    %v1983 = vpop.f32.mrb[0].mxu0
    %1984 = vdwg.mxu0
    %1985 = vrot.lane.b32.xlu0 %v391, 16
    %v1986 = vpop.permute.xlu0 %1985
    %1987 = vrot.lane.b32.xlu0 %v397, 16
    %v1988 = vpop.permute.xlu0 %1987
    %v1990 = vsel %vm404, %v1986, 0
    %v1993 = vsel %vm404, %v1988, 0
    %1995 = vmatprep.subr.bf16.mxu0 0
    %1996 = vmatpush1.bf16.xpose.msra.mxu0 %v1993
    %1997 = vmatprep.subr.bf16.mxu0 0
    %1998 = vmatpush1.bf16.xpose.msra.mxu0 0
    %1999 = vmatprep.subr.bf16.mxu0 0
    %2000 = vmatpush1.bf16.xpose.msra.mxu0 0
    %2001 = vmatprep.subr.bf16.mxu0 0
    %2002 = vmatpush1.bf16.xpose.msra.mxu0 0
    %2003 = vmatprep.subr.bf16.mxu0 0
    %2004 = vmatpush1.bf16.xpose.msra.mxu0 0
    %2005 = vmatprep.subr.bf16.mxu0 0
    %2006 = vmatpush1.bf16.xpose.msra.mxu0 0
    %2007 = vmatprep.subr.bf16.mxu0 0
    %2008 = vmatpush1.bf16.xpose.msra.mxu0 0
    %2009 = vmatprep.subr.bf16.mxu0 0
    %2010 = vmatpush1.bf16.xpose.msra.mxu0 0
    %2011 = vmatprep.subr.bf16.mxu0 0
    %2012 = vmatpush1.bf16.xpose.msra.mxu0 0
    %2013 = vmatprep.subr.bf16.mxu0 0
    %2014 = vmatpush1.bf16.xpose.msra.mxu0 0
    %2015 = vmatprep.subr.bf16.mxu0 0
    %2016 = vmatpush1.bf16.xpose.msra.mxu0 0
    %2017 = vmatprep.subr.bf16.mxu0 0
    %2018 = vmatpush1.bf16.xpose.msra.mxu0 0
    %2019 = vmatprep.subr.bf16.mxu0 0
    %2020 = vmatpush1.bf16.xpose.msra.mxu0 0
    %2021 = vmatprep.subr.bf16.mxu0 0
    %2022 = vmatpush1.bf16.xpose.msra.mxu0 0
    %2023 = vmatprep.subr.bf16.mxu0 0
    %2024 = vmatpush1.bf16.xpose.msra.mxu0 0
    %2025 = vmatprep.subr.bf16.mxu0 0
    %2026 = vmatpush1.bf16.xpose.msra.mxu0 0
    %2027 = vmatprep.mubr.bf16.mxu0 0
    %2028 = vmatmul.mubr.bf16.gmra.mrb[0].mxu0 %v1990
    %v2029 = vpop.f32.mrb[0].mxu0
    %v2030 = vadd.f32 0.0, %v2029
    %v2031 = vpop.f32.mrb[0].mxu0
    %v2032 = vpop.f32.mrb[0].mxu0
    %v2033 = vpop.f32.mrb[0].mxu0
    %2034 = vdwg.mxu0
    %v2035 = vsel %vm497, %v1980, -inf
    %2036 = vmax.xlane.f32.xlu0 %v2035
    %v2037 = vpop.xlane.xlu0 %2036
    %v2038 = vsel %vm497, %v2030, -inf
    %2039 = vmax.xlane.f32.xlu0 %v2038
    %v2040 = vpop.xlane.xlu0 %2039
    %v2041 = vsub.f32 %v1980, %v2037
    %v2042 = vsub.f32 %v2030, %v2040
    %v2043 = vmul.f32 %v2041, 1.442695
    %v2044 = vpow.pop %v2043
    %v2045 = vmul.f32 %v2042, 1.442695
    %v2046 = vpow.pop %v2045
    %v2047 = vsel %vm497, %v2044, 0.0
    %2048 = vadd.xlane.f32.xlu0 %v2047
    %v2049 = vpop.xlane.xlu0 %2048
    %v2050 = vsel %vm497, %v2046, 0.0
    %2051 = vadd.xlane.f32.xlu0 %v2050
    %v2052 = vpop.xlane.xlu0 %2051
    %v2053 = vrcp.pop %v2049
    %v2054 = vrcp.pop %v2052
    %v2055 = vmul.f32 %v2044, %v2053
    %v2056 = vmul.f32 %v2046, %v2054
    %v2057 = vpack.c.bf16 %v2055, %v2055
    %v2058 = vpack.c.bf16 %v2056, %v2056
    %2059 = vrot.lane.b32.xlu0 %v402, 16
    %v2060 = vpop.permute.xlu0 %2059
    %v2062 = vsel %vm497, %v2057, 0
    %v2065 = vsel %vm525, %v2060, 0
    %2067 = vmatprep.subr.bf16.mxu0 0
    %2068 = vmatpush1.bf16.msra.mxu0 %v2065
    %2069 = vmatprep.subr.bf16.mxu0 0
    %2070 = vmatpush1.bf16.msra.mxu0 0
    %2071 = vmatprep.subr.bf16.mxu0 0
    %2072 = vmatpush1.bf16.msra.mxu0 0
    %2073 = vmatprep.subr.bf16.mxu0 0
    %2074 = vmatpush1.bf16.msra.mxu0 0
    %2075 = vmatprep.subr.bf16.mxu0 0
    %2076 = vmatpush1.bf16.msra.mxu0 0
    %2077 = vmatprep.subr.bf16.mxu0 0
    %2078 = vmatpush1.bf16.msra.mxu0 0
    %2079 = vmatprep.subr.bf16.mxu0 0
    %2080 = vmatpush1.bf16.msra.mxu0 0
    %2081 = vmatprep.subr.bf16.mxu0 0
    %2082 = vmatpush1.bf16.msra.mxu0 0
    %2083 = vmatprep.subr.bf16.mxu0 0
    %2084 = vmatpush1.bf16.msra.mxu0 0
    %2085 = vmatprep.subr.bf16.mxu0 0
    %2086 = vmatpush1.bf16.msra.mxu0 0
    %2087 = vmatprep.subr.bf16.mxu0 0
    %2088 = vmatpush1.bf16.msra.mxu0 0
    %2089 = vmatprep.subr.bf16.mxu0 0
    %2090 = vmatpush1.bf16.msra.mxu0 0
    %2091 = vmatprep.subr.bf16.mxu0 0
    %2092 = vmatpush1.bf16.msra.mxu0 0
    %2093 = vmatprep.subr.bf16.mxu0 0
    %2094 = vmatpush1.bf16.msra.mxu0 0
    %2095 = vmatprep.subr.bf16.mxu0 0
    %2096 = vmatpush1.bf16.msra.mxu0 0
    %2097 = vmatprep.subr.bf16.mxu0 0
    %2098 = vmatpush1.bf16.msra.mxu0 0
    %2099 = vmatprep.mubr.bf16.mxu0 0
    %2100 = vmatmul.mubr.bf16.gmra.mrb[0].mxu0 %v2062
    %v2101 = vpop.f32.mrb[0].mxu0
    %v2102 = vadd.f32 0.0, %v2101
    %v2103 = vpop.f32.mrb[0].mxu0
    %v2104 = vpop.f32.mrb[0].mxu0
    %v2105 = vpop.f32.mrb[0].mxu0
    %2106 = vdwg.mxu0
    %2107 = vrot.lane.b32.xlu0 %v403, 16
    %v2108 = vpop.permute.xlu0 %2107
    %v2110 = vsel %vm497, %v2058, 0
    %v2113 = vsel %vm525, %v2108, 0
    %2115 = vmatprep.subr.bf16.mxu0 0
    %2116 = vmatpush1.bf16.msra.mxu0 %v2113
    %2117 = vmatprep.subr.bf16.mxu0 0
    %2118 = vmatpush1.bf16.msra.mxu0 0
    %2119 = vmatprep.subr.bf16.mxu0 0
    %2120 = vmatpush1.bf16.msra.mxu0 0
    %2121 = vmatprep.subr.bf16.mxu0 0
    %2122 = vmatpush1.bf16.msra.mxu0 0
    %2123 = vmatprep.subr.bf16.mxu0 0
    %2124 = vmatpush1.bf16.msra.mxu0 0
    %2125 = vmatprep.subr.bf16.mxu0 0
    %2126 = vmatpush1.bf16.msra.mxu0 0
    %2127 = vmatprep.subr.bf16.mxu0 0
    %2128 = vmatpush1.bf16.msra.mxu0 0
    %2129 = vmatprep.subr.bf16.mxu0 0
    %2130 = vmatpush1.bf16.msra.mxu0 0
    %2131 = vmatprep.subr.bf16.mxu0 0
    %2132 = vmatpush1.bf16.msra.mxu0 0
    %2133 = vmatprep.subr.bf16.mxu0 0
    %2134 = vmatpush1.bf16.msra.mxu0 0
    %2135 = vmatprep.subr.bf16.mxu0 0
    %2136 = vmatpush1.bf16.msra.mxu0 0
    %2137 = vmatprep.subr.bf16.mxu0 0
    %2138 = vmatpush1.bf16.msra.mxu0 0
    %2139 = vmatprep.subr.bf16.mxu0 0
    %2140 = vmatpush1.bf16.msra.mxu0 0
    %2141 = vmatprep.subr.bf16.mxu0 0
    %2142 = vmatpush1.bf16.msra.mxu0 0
    %2143 = vmatprep.subr.bf16.mxu0 0
    %2144 = vmatpush1.bf16.msra.mxu0 0
    %2145 = vmatprep.subr.bf16.mxu0 0
    %2146 = vmatpush1.bf16.msra.mxu0 0
    %2147 = vmatprep.mubr.bf16.mxu0 0
    %2148 = vmatmul.mubr.bf16.gmra.mrb[0].mxu0 %v2110
    %v2149 = vpop.f32.mrb[0].mxu0
    %v2150 = vadd.f32 0.0, %v2149
    %v2151 = vpop.f32.mrb[0].mxu0
    %v2152 = vpop.f32.mrb[0].mxu0
    %v2153 = vpop.f32.mrb[0].mxu0
    %2154 = vdwg.mxu0
    %2157 = vrot.lane.b32.xlu0 %v782, 16
    %v2158 = vpop.permute.xlu0 %2157
    %2159 = vrot.lane.b32.xlu0 %v830, 16
    %v2160 = vpop.permute.xlu0 %2159
    %2165 = vrot.lane.b32.xlu0 %v1002, 32
    %v2166 = vpop.permute.xlu0 %2165
    %2167 = vrot.lane.b32.xlu0 %v1050, 32
    %v2168 = vpop.permute.xlu0 %2167
    %2173 = vrot.lane.b32.xlu0 %v1222, 48
    %v2174 = vpop.permute.xlu0 %2173
    %2175 = vrot.lane.b32.xlu0 %v1270, 48
    %v2176 = vpop.permute.xlu0 %2175
    %2181 = vrot.lane.b32.xlu0 %v1442, 64
    %v2182 = vpop.permute.xlu0 %2181
    %2183 = vrot.lane.b32.xlu0 %v1490, 64
    %v2184 = vpop.permute.xlu0 %2183
    %2189 = vrot.lane.b32.xlu0 %v1662, 80
    %v2190 = vpop.permute.xlu0 %2189
    %2191 = vrot.lane.b32.xlu0 %v1710, 80
    %v2192 = vpop.permute.xlu0 %2191
    %2197 = vrot.lane.b32.xlu0 %v1882, 96
    %v2198 = vpop.permute.xlu0 %2197
    %2199 = vrot.lane.b32.xlu0 %v1930, 96
    %v2200 = vpop.permute.xlu0 %2199
    %2205 = vrot.lane.b32.xlu0 %v2102, 112
    %v2206 = vpop.permute.xlu0 %2205
    %2207 = vrot.lane.b32.xlu0 %v2150, 112
    %v2208 = vpop.permute.xlu0 %2207
    %v2211 = vsel %vm404, %v564, %v2158
    %v2212 = vsel %vm404, %v610, %v2160
    %vm2213 = vcmask 261120
    %v2214 = vsel %vm2213, %v2211, %v2166
    %v2215 = vsel %vm2213, %v2212, %v2168
    %vm2216 = vcmask 392192
    %v2217 = vsel %vm2216, %v2214, %v2174
    %v2218 = vsel %vm2216, %v2215, %v2176
    %vm2219 = vcmask 523264
    %v2220 = vsel %vm2219, %v2217, %v2182
    %v2221 = vsel %vm2219, %v2218, %v2184
    %vm2222 = vcmask 654336
    %v2223 = vsel %vm2222, %v2220, %v2190
    %v2224 = vsel %vm2222, %v2221, %v2192
    %vm2225 = vcmask 785408
    %v2226 = vsel %vm2225, %v2223, %v2198
    %v2227 = vsel %vm2225, %v2224, %v2200
    %vm2228 = vcmask 916480
    %v2229 = vsel %vm2228, %v2226, %v2206
    %v2230 = vsel %vm2228, %v2227, %v2208
    %v2231 = vpack.c.bf16 %v2230, %v2229
    %v2232 = vld [vmem:[#allocation7] sm:$0xf]
    %v2233 = vld [vmem:[#allocation7 + $0x4] sm:$0xf]
    %v2234 = vld [vmem:[#allocation7 + $0x8] sm:$0xf]
    %v2235 = vld [vmem:[#allocation7 + $0xc] sm:$0xf]
    %v2236 = vld [vmem:[#allocation7 + $0x10] sm:$0xf]
    %v2237 = vld [vmem:[#allocation7 + $0x14] sm:$0xf]
    %v2238 = vld [vmem:[#allocation7 + $0x18] sm:$0xf]
    %v2239 = vld [vmem:[#allocation7 + $0x1c] sm:$0xf]
    %v2240 = vld [vmem:[#allocation7 + $0x20] sm:$0xf]
    %v2241 = vld [vmem:[#allocation7 + $0x24] sm:$0xf]
    %v2242 = vld [vmem:[#allocation7 + $0x28] sm:$0xf]
    %v2243 = vld [vmem:[#allocation7 + $0x2c] sm:$0xf]
    %v2244 = vld [vmem:[#allocation7 + $0x30] sm:$0xf]
    %v2245 = vld [vmem:[#allocation7 + $0x34] sm:$0xf]
    %v2246 = vld [vmem:[#allocation7 + $0x38] sm:$0xf]
    %v2247 = vld [vmem:[#allocation7 + $0x3c] sm:$0xf]
    %v2264 = vunpack.c.l.b16 %v2232
    %v2265 = vunpack.c.l.b16 %v2233
    %v2266 = vunpack.c.l.b16 %v2234
    %v2267 = vunpack.c.l.b16 %v2235
    %v2268 = vunpack.c.l.b16 %v2236
    %v2269 = vunpack.c.l.b16 %v2237
    %v2270 = vunpack.c.l.b16 %v2238
    %v2271 = vunpack.c.l.b16 %v2239
    %v2272 = vunpack.c.l.b16 %v2240
    %v2273 = vunpack.c.l.b16 %v2241
    %v2274 = vunpack.c.l.b16 %v2242
    %v2275 = vunpack.c.l.b16 %v2243
    %v2276 = vunpack.c.l.b16 %v2244
    %v2277 = vunpack.c.l.b16 %v2245
    %v2278 = vunpack.c.l.b16 %v2246
    %v2279 = vunpack.c.l.b16 %v2247
    %v2280 = vpack.c.b16 %v2265, %v2264
    %v2281 = vpack.c.b16 %v2267, %v2266
    %v2282 = vpack.c.b16 %v2269, %v2268
    %v2283 = vpack.c.b16 %v2271, %v2270
    %v2284 = vpack.c.b16 %v2273, %v2272
    %v2285 = vpack.c.b16 %v2275, %v2274
    %v2286 = vpack.c.b16 %v2277, %v2276
    %v2287 = vpack.c.b16 %v2279, %v2278
    %2296 = vmatprep.subr.bf16.mxu0 0
    %2297 = vmatpush1.bf16.msra.mxu0 %v2280
    %2298 = vmatprep.subr.bf16.mxu0 0
    %2299 = vmatpush1.bf16.msra.mxu0 %v2281
    %2300 = vmatprep.subr.bf16.mxu0 0
    %2301 = vmatpush1.bf16.msra.mxu0 %v2282
    %2302 = vmatprep.subr.bf16.mxu0 0
    %2303 = vmatpush1.bf16.msra.mxu0 %v2283
    %2304 = vmatprep.subr.bf16.mxu0 0
    %2305 = vmatpush1.bf16.msra.mxu0 %v2284
    %2306 = vmatprep.subr.bf16.mxu0 0
    %2307 = vmatpush1.bf16.msra.mxu0 %v2285
    %2308 = vmatprep.subr.bf16.mxu0 0
    %2309 = vmatpush1.bf16.msra.mxu0 %v2286
    %2310 = vmatprep.subr.bf16.mxu0 0
    %2311 = vmatpush1.bf16.msra.mxu0 %v2287
    %2312 = vmatprep.subr.bf16.mxu0 0
    %2313 = vmatpush1.bf16.msra.mxu0 0
    %2314 = vmatprep.subr.bf16.mxu0 0
    %2315 = vmatpush1.bf16.msra.mxu0 0
    %2316 = vmatprep.subr.bf16.mxu0 0
    %2317 = vmatpush1.bf16.msra.mxu0 0
    %2318 = vmatprep.subr.bf16.mxu0 0
    %2319 = vmatpush1.bf16.msra.mxu0 0
    %2320 = vmatprep.subr.bf16.mxu0 0
    %2321 = vmatpush1.bf16.msra.mxu0 0
    %2322 = vmatprep.subr.bf16.mxu0 0
    %2323 = vmatpush1.bf16.msra.mxu0 0
    %2324 = vmatprep.subr.bf16.mxu0 0
    %2325 = vmatpush1.bf16.msra.mxu0 0
    %2326 = vmatprep.subr.bf16.mxu0 0
    %2327 = vmatpush1.bf16.msra.mxu0 0
    %2328 = vmatprep.mubr.bf16.mxu0 0
    %2329 = vmatmul.mubr.bf16.gmra.mrb[0].mxu0 %v2231
    %v2330 = vpop.f32.mrb[0].mxu0
    %v2331 = vadd.f32 0.0, %v2330
    %v2332 = vpop.f32.mrb[0].mxu0
    %v2333 = vpop.f32.mrb[0].mxu0
    %v2334 = vadd.f32 0.0, %v2333
    %v2335 = vpop.f32.mrb[0].mxu0
    %2336 = vdwg.mxu0
    %v2337 = vadd.f32 %v99, %v2331
    %v2338 = vadd.f32 %v100, %v2334
    %2339 = vadd.xlane.f32.xlu0 %v2337
    %v2340 = vpop.xlane.xlu0 %2339
    %2341 = vadd.xlane.f32.xlu0 %v2338
    %v2342 = vpop.xlane.xlu0 %2341
    %v2343 = vmul.f32 %v2340, %v106
    %v2344 = vmul.f32 %v2342, %v106
    %v2345 = vmul.f32 %v2337, %v2337
    %v2346 = vmul.f32 %v2338, %v2338
    %2347 = vadd.xlane.f32.xlu0 %v2345
    %v2348 = vpop.xlane.xlu0 %2347
    %2349 = vadd.xlane.f32.xlu0 %v2346
    %v2350 = vpop.xlane.xlu0 %2349
    %v2351 = vmul.f32 %v2348, %v106
    %v2352 = vmul.f32 %v2350, %v106
    %v2353 = vmul.f32 %v2343, %v2343
    %v2354 = vmul.f32 %v2344, %v2344
    %v2355 = vsub.f32 %v2351, %v2353
    %v2356 = vsub.f32 %v2352, %v2354
    %v2357 = vsub.f32 %v2337, %v2343
    %v2358 = vsub.f32 %v2338, %v2344
    %v2359 = vadd.f32 %v2355, 1e-05
    %v2360 = vadd.f32 %v2356, 1e-05
    %v2361 = vrsqrt.pop %v2359
    %v2362 = vrsqrt.pop %v2360
    %v2363 = vmul.f32 %v2357, %v2361
    %v2364 = vmul.f32 %v2358, %v2362
    %v2365 = vlaneseq
    %v2366 = vshrl.u32 %v2365, 7
    %v2367 = vsub.s32 2, %v2366
    %v2368 = vrot.slane %v101, %v2367
    %v2369 = vmul.f32 %v2363, %v2368
    %v2370 = vmul.f32 %v2364, %v2368
    %v2371 = vlaneseq
    %v2372 = vshrl.u32 %v2371, 7
    %v2373 = vsub.s32 3, %v2372
    %v2374 = vrot.slane %v101, %v2373
    %v2375 = vadd.f32 %v2369, %v2374
    %v2376 = vadd.f32 %v2370, %v2374
    %v2377 = vpack.c.bf16 %v2376, %v2375
    %v2378 = vld [vmem:[#allocation8] sm:$0xff]
    %v2379 = vld [vmem:[#allocation8 + $0x8] sm:$0xff]
    %v2380 = vld [vmem:[#allocation8 + $0x10] sm:$0xff]
    %v2381 = vld [vmem:[#allocation8 + $0x18] sm:$0xff]
    %v2382 = vld [vmem:[#allocation8 + $0x20] sm:$0xff]
    %v2383 = vld [vmem:[#allocation8 + $0x28] sm:$0xff]
    %v2384 = vld [vmem:[#allocation8 + $0x30] sm:$0xff]
    %v2385 = vld [vmem:[#allocation8 + $0x38] sm:$0xff]
    %v2386 = vld [vmem:[#allocation8 + $0x40] sm:$0xff]
    %v2387 = vld [vmem:[#allocation8 + $0x48] sm:$0xff]
    %v2388 = vld [vmem:[#allocation8 + $0x50] sm:$0xff]
    %v2389 = vld [vmem:[#allocation8 + $0x58] sm:$0xff]
    %v2390 = vld [vmem:[#allocation8 + $0x60] sm:$0xff]
    %v2391 = vld [vmem:[#allocation8 + $0x68] sm:$0xff]
    %v2392 = vld [vmem:[#allocation8 + $0x70] sm:$0xff]
    %v2393 = vld [vmem:[#allocation8 + $0x78] sm:$0xff]
    %v2394 = vld [vmem:[#allocation8 + $0x80] sm:$0xff]
    %v2395 = vld [vmem:[#allocation8 + $0x88] sm:$0xff]
    %v2396 = vld [vmem:[#allocation8 + $0x90] sm:$0xff]
    %v2397 = vld [vmem:[#allocation8 + $0x98] sm:$0xff]
    %v2398 = vld [vmem:[#allocation8 + $0xa0] sm:$0xff]
    %v2399 = vld [vmem:[#allocation8 + $0xa8] sm:$0xff]
    %v2400 = vld [vmem:[#allocation8 + $0xb0] sm:$0xff]
    %v2401 = vld [vmem:[#allocation8 + $0xb8] sm:$0xff]
    %v2402 = vld [vmem:[#allocation8 + $0xc0] sm:$0xff]
    %v2403 = vld [vmem:[#allocation8 + $0xc8] sm:$0xff]
    %v2404 = vld [vmem:[#allocation8 + $0xd0] sm:$0xff]
    %v2405 = vld [vmem:[#allocation8 + $0xd8] sm:$0xff]
    %v2406 = vld [vmem:[#allocation8 + $0xe0] sm:$0xff]
    %v2407 = vld [vmem:[#allocation8 + $0xe8] sm:$0xff]
    %v2408 = vld [vmem:[#allocation8 + $0xf0] sm:$0xff]
    %v2409 = vld [vmem:[#allocation8 + $0xf8] sm:$0xff]
    %v2410 = vld [vmem:[%s5] sm:$0xf]
    %v2412 = vlaneseq
    %v2413 = vshrl.u32 %v2412, 7
    %v2414 = vsub.s32 0, %v2413
    %v2415 = vrot.slane %v2410, %v2414
    %v2416 = vlaneseq
    %v2417 = vshrl.u32 %v2416, 7
    %v2418 = vsub.s32 1, %v2417
    %v2419 = vrot.slane %v2410, %v2418
    %v2420 = vlaneseq
    %v2421 = vshrl.u32 %v2420, 7
    %v2422 = vsub.s32 2, %v2421
    %v2423 = vrot.slane %v2410, %v2422
    %v2424 = vlaneseq
    %v2425 = vshrl.u32 %v2424, 7
    %v2426 = vsub.s32 3, %v2425
    %v2427 = vrot.slane %v2410, %v2426
    %v2464 = vunpack.c.l.b16 %v2378
    %v2465 = vunpack.c.h.b16 %v2378
    %v2466 = vunpack.c.l.b16 %v2379
    %v2467 = vunpack.c.h.b16 %v2379
    %v2468 = vunpack.c.l.b16 %v2380
    %v2469 = vunpack.c.h.b16 %v2380
    %v2470 = vunpack.c.l.b16 %v2381
    %v2471 = vunpack.c.h.b16 %v2381
    %v2472 = vunpack.c.l.b16 %v2382
    %v2473 = vunpack.c.h.b16 %v2382
    %v2474 = vunpack.c.l.b16 %v2383
    %v2475 = vunpack.c.h.b16 %v2383
    %v2476 = vunpack.c.l.b16 %v2384
    %v2477 = vunpack.c.h.b16 %v2384
    %v2478 = vunpack.c.l.b16 %v2385
    %v2479 = vunpack.c.h.b16 %v2385
    %v2480 = vunpack.c.l.b16 %v2386
    %v2481 = vunpack.c.h.b16 %v2386
    %v2482 = vunpack.c.l.b16 %v2387
    %v2483 = vunpack.c.h.b16 %v2387
    %v2484 = vunpack.c.l.b16 %v2388
    %v2485 = vunpack.c.h.b16 %v2388
    %v2486 = vunpack.c.l.b16 %v2389
    %v2487 = vunpack.c.h.b16 %v2389
    %v2488 = vunpack.c.l.b16 %v2390
    %v2489 = vunpack.c.h.b16 %v2390
    %v2490 = vunpack.c.l.b16 %v2391
    %v2491 = vunpack.c.h.b16 %v2391
    %v2492 = vunpack.c.l.b16 %v2392
    %v2493 = vunpack.c.h.b16 %v2392
    %v2494 = vunpack.c.l.b16 %v2393
    %v2495 = vunpack.c.h.b16 %v2393
    %v2496 = vunpack.c.l.b16 %v2394
    %v2497 = vunpack.c.h.b16 %v2394
    %v2498 = vunpack.c.l.b16 %v2395
    %v2499 = vunpack.c.h.b16 %v2395
    %v2500 = vunpack.c.l.b16 %v2396
    %v2501 = vunpack.c.h.b16 %v2396
    %v2502 = vunpack.c.l.b16 %v2397
    %v2503 = vunpack.c.h.b16 %v2397
    %v2504 = vunpack.c.l.b16 %v2398
    %v2505 = vunpack.c.h.b16 %v2398
    %v2506 = vunpack.c.l.b16 %v2399
    %v2507 = vunpack.c.h.b16 %v2399
    %v2508 = vunpack.c.l.b16 %v2400
    %v2509 = vunpack.c.h.b16 %v2400
    %v2510 = vunpack.c.l.b16 %v2401
    %v2511 = vunpack.c.h.b16 %v2401
    %v2512 = vunpack.c.l.b16 %v2402
    %v2513 = vunpack.c.h.b16 %v2402
    %v2514 = vunpack.c.l.b16 %v2403
    %v2515 = vunpack.c.h.b16 %v2403
    %v2516 = vunpack.c.l.b16 %v2404
    %v2517 = vunpack.c.h.b16 %v2404
    %v2518 = vunpack.c.l.b16 %v2405
    %v2519 = vunpack.c.h.b16 %v2405
    %v2520 = vunpack.c.l.b16 %v2406
    %v2521 = vunpack.c.h.b16 %v2406
    %v2522 = vunpack.c.l.b16 %v2407
    %v2523 = vunpack.c.h.b16 %v2407
    %v2524 = vunpack.c.l.b16 %v2408
    %v2525 = vunpack.c.h.b16 %v2408
    %v2526 = vunpack.c.l.b16 %v2409
    %v2527 = vunpack.c.h.b16 %v2409
    %v2528 = vpack.c.b16 %v2468, %v2464
    %v2529 = vpack.c.b16 %v2469, %v2465
    %v2530 = vpack.c.b16 %v2470, %v2466
    %v2531 = vpack.c.b16 %v2471, %v2467
    %v2532 = vpack.c.b16 %v2476, %v2472
    %v2533 = vpack.c.b16 %v2477, %v2473
    %v2534 = vpack.c.b16 %v2478, %v2474
    %v2535 = vpack.c.b16 %v2479, %v2475
    %v2536 = vpack.c.b16 %v2484, %v2480
    %v2537 = vpack.c.b16 %v2485, %v2481
    %v2538 = vpack.c.b16 %v2486, %v2482
    %v2539 = vpack.c.b16 %v2487, %v2483
    %v2540 = vpack.c.b16 %v2492, %v2488
    %v2541 = vpack.c.b16 %v2493, %v2489
    %v2542 = vpack.c.b16 %v2494, %v2490
    %v2543 = vpack.c.b16 %v2495, %v2491
    %v2544 = vpack.c.b16 %v2500, %v2496
    %v2545 = vpack.c.b16 %v2501, %v2497
    %v2546 = vpack.c.b16 %v2502, %v2498
    %v2547 = vpack.c.b16 %v2503, %v2499
    %v2548 = vpack.c.b16 %v2508, %v2504
    %v2549 = vpack.c.b16 %v2509, %v2505
    %v2550 = vpack.c.b16 %v2510, %v2506
    %v2551 = vpack.c.b16 %v2511, %v2507
    %v2552 = vpack.c.b16 %v2516, %v2512
    %v2553 = vpack.c.b16 %v2517, %v2513
    %v2554 = vpack.c.b16 %v2518, %v2514
    %v2555 = vpack.c.b16 %v2519, %v2515
    %v2556 = vpack.c.b16 %v2524, %v2520
    %v2557 = vpack.c.b16 %v2525, %v2521
    %v2558 = vpack.c.b16 %v2526, %v2522
    %v2559 = vpack.c.b16 %v2527, %v2523
    %2592 = vmatprep.subr.bf16.mxu0 %v2529
    %2593 = vmatpush1.bf16.msra.mxu0 %v2528
    %2594 = vmatprep.subr.bf16.mxu0 %v2533
    %2595 = vmatpush1.bf16.msra.mxu0 %v2532
    %2596 = vmatprep.subr.bf16.mxu0 %v2537
    %2597 = vmatpush1.bf16.msra.mxu0 %v2536
    %2598 = vmatprep.subr.bf16.mxu0 %v2541
    %2599 = vmatpush1.bf16.msra.mxu0 %v2540
    %2600 = vmatprep.subr.bf16.mxu0 %v2545
    %2601 = vmatpush1.bf16.msra.mxu0 %v2544
    %2602 = vmatprep.subr.bf16.mxu0 %v2549
    %2603 = vmatpush1.bf16.msra.mxu0 %v2548
    %2604 = vmatprep.subr.bf16.mxu0 %v2553
    %2605 = vmatpush1.bf16.msra.mxu0 %v2552
    %2606 = vmatprep.subr.bf16.mxu0 %v2557
    %2607 = vmatpush1.bf16.msra.mxu0 %v2556
    %2608 = vmatprep.subr.bf16.mxu0 0
    %2609 = vmatpush1.bf16.msra.mxu0 0
    %2610 = vmatprep.subr.bf16.mxu0 0
    %2611 = vmatpush1.bf16.msra.mxu0 0
    %2612 = vmatprep.subr.bf16.mxu0 0
    %2613 = vmatpush1.bf16.msra.mxu0 0
    %2614 = vmatprep.subr.bf16.mxu0 0
    %2615 = vmatpush1.bf16.msra.mxu0 0
    %2616 = vmatprep.subr.bf16.mxu0 0
    %2617 = vmatpush1.bf16.msra.mxu0 0
    %2618 = vmatprep.subr.bf16.mxu0 0
    %2619 = vmatpush1.bf16.msra.mxu0 0
    %2620 = vmatprep.subr.bf16.mxu0 0
    %2621 = vmatpush1.bf16.msra.mxu0 0
    %2622 = vmatprep.subr.bf16.mxu0 0
    %2623 = vmatpush1.bf16.msra.mxu0 0
    %2624 = vmatprep.mubr.bf16.mxu0 0
    %2625 = vmatmul.mubr.bf16.gmra.mrb[0].mxu0 %v2377
    %v2626 = vpop.f32.mrb[0].mxu0
    %v2627 = vadd.f32 %v2415, %v2626
    %v2628 = vpop.f32.mrb[0].mxu0
    %v2629 = vadd.f32 %v2419, %v2628
    %v2630 = vpop.f32.mrb[0].mxu0
    %v2631 = vadd.f32 %v2415, %v2630
    %v2632 = vpop.f32.mrb[0].mxu0
    %v2633 = vadd.f32 %v2419, %v2632
    %2634 = vdwg.mxu0
    %2635 = vmatprep.subr.bf16.mxu0 %v2531
    %2636 = vmatpush1.bf16.msra.mxu0 %v2530
    %2637 = vmatprep.subr.bf16.mxu0 %v2535
    %2638 = vmatpush1.bf16.msra.mxu0 %v2534
    %2639 = vmatprep.subr.bf16.mxu0 %v2539
    %2640 = vmatpush1.bf16.msra.mxu0 %v2538
    %2641 = vmatprep.subr.bf16.mxu0 %v2543
    %2642 = vmatpush1.bf16.msra.mxu0 %v2542
    %2643 = vmatprep.subr.bf16.mxu0 %v2547
    %2644 = vmatpush1.bf16.msra.mxu0 %v2546
    %2645 = vmatprep.subr.bf16.mxu0 %v2551
    %2646 = vmatpush1.bf16.msra.mxu0 %v2550
    %2647 = vmatprep.subr.bf16.mxu0 %v2555
    %2648 = vmatpush1.bf16.msra.mxu0 %v2554
    %2649 = vmatprep.subr.bf16.mxu0 %v2559
    %2650 = vmatpush1.bf16.msra.mxu0 %v2558
    %2651 = vmatprep.subr.bf16.mxu0 0
    %2652 = vmatpush1.bf16.msra.mxu0 0
    %2653 = vmatprep.subr.bf16.mxu0 0
    %2654 = vmatpush1.bf16.msra.mxu0 0
    %2655 = vmatprep.subr.bf16.mxu0 0
    %2656 = vmatpush1.bf16.msra.mxu0 0
    %2657 = vmatprep.subr.bf16.mxu0 0
    %2658 = vmatpush1.bf16.msra.mxu0 0
    %2659 = vmatprep.subr.bf16.mxu0 0
    %2660 = vmatpush1.bf16.msra.mxu0 0
    %2661 = vmatprep.subr.bf16.mxu0 0
    %2662 = vmatpush1.bf16.msra.mxu0 0
    %2663 = vmatprep.subr.bf16.mxu0 0
    %2664 = vmatpush1.bf16.msra.mxu0 0
    %2665 = vmatprep.subr.bf16.mxu0 0
    %2666 = vmatpush1.bf16.msra.mxu0 0
    %2667 = vmatprep.mubr.bf16.mxu0 0
    %2668 = vmatmul.mubr.bf16.gmra.mrb[0].mxu0 %v2377
    %v2669 = vpop.f32.mrb[0].mxu0
    %v2670 = vadd.f32 %v2423, %v2669
    %v2671 = vpop.f32.mrb[0].mxu0
    %v2672 = vadd.f32 %v2427, %v2671
    %v2673 = vpop.f32.mrb[0].mxu0
    %v2674 = vadd.f32 %v2423, %v2673
    %v2675 = vpop.f32.mrb[0].mxu0
    %v2676 = vadd.f32 %v2427, %v2675
    %2677 = vdwg.mxu0
    %v2678 = vmax.f32 %v2627, 0.0
    %v2679 = vmax.f32 %v2629, 0.0
    %v2680 = vmax.f32 %v2670, 0.0
    %v2681 = vmax.f32 %v2672, 0.0
    %v2682 = vmax.f32 %v2631, 0.0
    %v2683 = vmax.f32 %v2633, 0.0
    %v2684 = vmax.f32 %v2674, 0.0
    %v2685 = vmax.f32 %v2676, 0.0
    %v2686 = vpack.c.bf16 %v2682, %v2678
    %v2687 = vpack.c.bf16 %v2683, %v2679
    %v2688 = vpack.c.bf16 %v2684, %v2680
    %v2689 = vpack.c.bf16 %v2685, %v2681
    %v2690 = vld [vmem:[#allocation10] sm:$0xf]
    %v2691 = vld [vmem:[#allocation10 + $0x4] sm:$0xf]
    %v2692 = vld [vmem:[#allocation10 + $0x8] sm:$0xf]
    %v2693 = vld [vmem:[#allocation10 + $0xc] sm:$0xf]
    %v2694 = vld [vmem:[#allocation10 + $0x10] sm:$0xf]
    %v2695 = vld [vmem:[#allocation10 + $0x14] sm:$0xf]
    %v2696 = vld [vmem:[#allocation10 + $0x18] sm:$0xf]
    %v2697 = vld [vmem:[#allocation10 + $0x1c] sm:$0xf]
    %v2698 = vld [vmem:[#allocation10 + $0x20] sm:$0xf]
    %v2699 = vld [vmem:[#allocation10 + $0x24] sm:$0xf]
    %v2700 = vld [vmem:[#allocation10 + $0x28] sm:$0xf]
    %v2701 = vld [vmem:[#allocation10 + $0x2c] sm:$0xf]
    %v2702 = vld [vmem:[#allocation10 + $0x30] sm:$0xf]
    %v2703 = vld [vmem:[#allocation10 + $0x34] sm:$0xf]
    %v2704 = vld [vmem:[#allocation10 + $0x38] sm:$0xf]
    %v2705 = vld [vmem:[#allocation10 + $0x3c] sm:$0xf]
    %v2706 = vld [vmem:[#allocation10 + $0x40] sm:$0xf]
    %v2707 = vld [vmem:[#allocation10 + $0x44] sm:$0xf]
    %v2708 = vld [vmem:[#allocation10 + $0x48] sm:$0xf]
    %v2709 = vld [vmem:[#allocation10 + $0x4c] sm:$0xf]
    %v2710 = vld [vmem:[#allocation10 + $0x50] sm:$0xf]
    %v2711 = vld [vmem:[#allocation10 + $0x54] sm:$0xf]
    %v2712 = vld [vmem:[#allocation10 + $0x58] sm:$0xf]
    %v2713 = vld [vmem:[#allocation10 + $0x5c] sm:$0xf]
    %v2714 = vld [vmem:[#allocation10 + $0x60] sm:$0xf]
    %v2715 = vld [vmem:[#allocation10 + $0x64] sm:$0xf]
    %v2716 = vld [vmem:[#allocation10 + $0x68] sm:$0xf]
    %v2717 = vld [vmem:[#allocation10 + $0x6c] sm:$0xf]
    %v2718 = vld [vmem:[#allocation10 + $0x70] sm:$0xf]
    %v2719 = vld [vmem:[#allocation10 + $0x74] sm:$0xf]
    %v2720 = vld [vmem:[#allocation10 + $0x78] sm:$0xf]
    %v2721 = vld [vmem:[#allocation10 + $0x7c] sm:$0xf]
    %v2722 = vld [vmem:[#allocation10 + $0x80] sm:$0xf]
    %v2723 = vld [vmem:[#allocation10 + $0x84] sm:$0xf]
    %v2724 = vld [vmem:[#allocation10 + $0x88] sm:$0xf]
    %v2725 = vld [vmem:[#allocation10 + $0x8c] sm:$0xf]
    %v2726 = vld [vmem:[#allocation10 + $0x90] sm:$0xf]
    %v2727 = vld [vmem:[#allocation10 + $0x94] sm:$0xf]
    %v2728 = vld [vmem:[#allocation10 + $0x98] sm:$0xf]
    %v2729 = vld [vmem:[#allocation10 + $0x9c] sm:$0xf]
    %v2730 = vld [vmem:[#allocation10 + $0xa0] sm:$0xf]
    %v2731 = vld [vmem:[#allocation10 + $0xa4] sm:$0xf]
    %v2732 = vld [vmem:[#allocation10 + $0xa8] sm:$0xf]
    %v2733 = vld [vmem:[#allocation10 + $0xac] sm:$0xf]
    %v2734 = vld [vmem:[#allocation10 + $0xb0] sm:$0xf]
    %v2735 = vld [vmem:[#allocation10 + $0xb4] sm:$0xf]
    %v2736 = vld [vmem:[#allocation10 + $0xb8] sm:$0xf]
    %v2737 = vld [vmem:[#allocation10 + $0xbc] sm:$0xf]
    %v2738 = vld [vmem:[#allocation10 + $0xc0] sm:$0xf]
    %v2739 = vld [vmem:[#allocation10 + $0xc4] sm:$0xf]
    %v2740 = vld [vmem:[#allocation10 + $0xc8] sm:$0xf]
    %v2741 = vld [vmem:[#allocation10 + $0xcc] sm:$0xf]
    %v2742 = vld [vmem:[#allocation10 + $0xd0] sm:$0xf]
    %v2743 = vld [vmem:[#allocation10 + $0xd4] sm:$0xf]
    %v2744 = vld [vmem:[#allocation10 + $0xd8] sm:$0xf]
    %v2745 = vld [vmem:[#allocation10 + $0xdc] sm:$0xf]
    %v2746 = vld [vmem:[#allocation10 + $0xe0] sm:$0xf]
    %v2747 = vld [vmem:[#allocation10 + $0xe4] sm:$0xf]
    %v2748 = vld [vmem:[#allocation10 + $0xe8] sm:$0xf]
    %v2749 = vld [vmem:[#allocation10 + $0xec] sm:$0xf]
    %v2750 = vld [vmem:[#allocation10 + $0xf0] sm:$0xf]
    %v2751 = vld [vmem:[#allocation10 + $0xf4] sm:$0xf]
    %v2752 = vld [vmem:[#allocation10 + $0xf8] sm:$0xf]
    %v2753 = vld [vmem:[#allocation10 + $0xfc] sm:$0xf]
    %v2754 = vld [vmem:[%s7] sm:$0x1]
    %v2756 = vlaneseq
    %v2757 = vshrl.u32 %v2756, 7
    %v2758 = vsub.s32 0, %v2757
    %v2759 = vrot.slane %v2754, %v2758
    %v2825 = vunpack.c.l.b16 %v2690
    %v2826 = vunpack.c.l.b16 %v2691
    %v2827 = vunpack.c.l.b16 %v2692
    %v2828 = vunpack.c.l.b16 %v2693
    %v2829 = vunpack.c.l.b16 %v2694
    %v2830 = vunpack.c.l.b16 %v2695
    %v2831 = vunpack.c.l.b16 %v2696
    %v2832 = vunpack.c.l.b16 %v2697
    %v2833 = vunpack.c.l.b16 %v2698
    %v2834 = vunpack.c.l.b16 %v2699
    %v2835 = vunpack.c.l.b16 %v2700
    %v2836 = vunpack.c.l.b16 %v2701
    %v2837 = vunpack.c.l.b16 %v2702
    %v2838 = vunpack.c.l.b16 %v2703
    %v2839 = vunpack.c.l.b16 %v2704
    %v2840 = vunpack.c.l.b16 %v2705
    %v2841 = vunpack.c.l.b16 %v2706
    %v2842 = vunpack.c.l.b16 %v2707
    %v2843 = vunpack.c.l.b16 %v2708
    %v2844 = vunpack.c.l.b16 %v2709
    %v2845 = vunpack.c.l.b16 %v2710
    %v2846 = vunpack.c.l.b16 %v2711
    %v2847 = vunpack.c.l.b16 %v2712
    %v2848 = vunpack.c.l.b16 %v2713
    %v2849 = vunpack.c.l.b16 %v2714
    %v2850 = vunpack.c.l.b16 %v2715
    %v2851 = vunpack.c.l.b16 %v2716
    %v2852 = vunpack.c.l.b16 %v2717
    %v2853 = vunpack.c.l.b16 %v2718
    %v2854 = vunpack.c.l.b16 %v2719
    %v2855 = vunpack.c.l.b16 %v2720
    %v2856 = vunpack.c.l.b16 %v2721
    %v2857 = vunpack.c.l.b16 %v2722
    %v2858 = vunpack.c.l.b16 %v2723
    %v2859 = vunpack.c.l.b16 %v2724
    %v2860 = vunpack.c.l.b16 %v2725
    %v2861 = vunpack.c.l.b16 %v2726
    %v2862 = vunpack.c.l.b16 %v2727
    %v2863 = vunpack.c.l.b16 %v2728
    %v2864 = vunpack.c.l.b16 %v2729
    %v2865 = vunpack.c.l.b16 %v2730
    %v2866 = vunpack.c.l.b16 %v2731
    %v2867 = vunpack.c.l.b16 %v2732
    %v2868 = vunpack.c.l.b16 %v2733
    %v2869 = vunpack.c.l.b16 %v2734
    %v2870 = vunpack.c.l.b16 %v2735
    %v2871 = vunpack.c.l.b16 %v2736
    %v2872 = vunpack.c.l.b16 %v2737
    %v2873 = vunpack.c.l.b16 %v2738
    %v2874 = vunpack.c.l.b16 %v2739
    %v2875 = vunpack.c.l.b16 %v2740
    %v2876 = vunpack.c.l.b16 %v2741
    %v2877 = vunpack.c.l.b16 %v2742
    %v2878 = vunpack.c.l.b16 %v2743
    %v2879 = vunpack.c.l.b16 %v2744
    %v2880 = vunpack.c.l.b16 %v2745
    %v2881 = vunpack.c.l.b16 %v2746
    %v2882 = vunpack.c.l.b16 %v2747
    %v2883 = vunpack.c.l.b16 %v2748
    %v2884 = vunpack.c.l.b16 %v2749
    %v2885 = vunpack.c.l.b16 %v2750
    %v2886 = vunpack.c.l.b16 %v2751
    %v2887 = vunpack.c.l.b16 %v2752
    %v2888 = vunpack.c.l.b16 %v2753
    %v2889 = vpack.c.b16 %v2826, %v2825
    %v2890 = vpack.c.b16 %v2828, %v2827
    %v2891 = vpack.c.b16 %v2830, %v2829
    %v2892 = vpack.c.b16 %v2832, %v2831
    %v2893 = vpack.c.b16 %v2834, %v2833
    %v2894 = vpack.c.b16 %v2836, %v2835
    %v2895 = vpack.c.b16 %v2838, %v2837
    %v2896 = vpack.c.b16 %v2840, %v2839
    %v2897 = vpack.c.b16 %v2842, %v2841
    %v2898 = vpack.c.b16 %v2844, %v2843
    %v2899 = vpack.c.b16 %v2846, %v2845
    %v2900 = vpack.c.b16 %v2848, %v2847
    %v2901 = vpack.c.b16 %v2850, %v2849
    %v2902 = vpack.c.b16 %v2852, %v2851
    %v2903 = vpack.c.b16 %v2854, %v2853
    %v2904 = vpack.c.b16 %v2856, %v2855
    %v2905 = vpack.c.b16 %v2858, %v2857
    %v2906 = vpack.c.b16 %v2860, %v2859
    %v2907 = vpack.c.b16 %v2862, %v2861
    %v2908 = vpack.c.b16 %v2864, %v2863
    %v2909 = vpack.c.b16 %v2866, %v2865
    %v2910 = vpack.c.b16 %v2868, %v2867
    %v2911 = vpack.c.b16 %v2870, %v2869
    %v2912 = vpack.c.b16 %v2872, %v2871
    %v2913 = vpack.c.b16 %v2874, %v2873
    %v2914 = vpack.c.b16 %v2876, %v2875
    %v2915 = vpack.c.b16 %v2878, %v2877
    %v2916 = vpack.c.b16 %v2880, %v2879
    %v2917 = vpack.c.b16 %v2882, %v2881
    %v2918 = vpack.c.b16 %v2884, %v2883
    %v2919 = vpack.c.b16 %v2886, %v2885
    %v2920 = vpack.c.b16 %v2888, %v2887
    %2953 = vmatprep.subr.bf16.mxu0 0
    %2954 = vmatpush1.bf16.msra.mxu0 %v2889
    %2955 = vmatprep.subr.bf16.mxu0 0
    %2956 = vmatpush1.bf16.msra.mxu0 %v2890
    %2957 = vmatprep.subr.bf16.mxu0 0
    %2958 = vmatpush1.bf16.msra.mxu0 %v2891
    %2959 = vmatprep.subr.bf16.mxu0 0
    %2960 = vmatpush1.bf16.msra.mxu0 %v2892
    %2961 = vmatprep.subr.bf16.mxu0 0
    %2962 = vmatpush1.bf16.msra.mxu0 %v2893
    %2963 = vmatprep.subr.bf16.mxu0 0
    %2964 = vmatpush1.bf16.msra.mxu0 %v2894
    %2965 = vmatprep.subr.bf16.mxu0 0
    %2966 = vmatpush1.bf16.msra.mxu0 %v2895
    %2967 = vmatprep.subr.bf16.mxu0 0
    %2968 = vmatpush1.bf16.msra.mxu0 %v2896
    %2969 = vmatprep.subr.bf16.mxu0 0
    %2970 = vmatpush1.bf16.msra.mxu0 %v2897
    %2971 = vmatprep.subr.bf16.mxu0 0
    %2972 = vmatpush1.bf16.msra.mxu0 %v2898
    %2973 = vmatprep.subr.bf16.mxu0 0
    %2974 = vmatpush1.bf16.msra.mxu0 %v2899
    %2975 = vmatprep.subr.bf16.mxu0 0
    %2976 = vmatpush1.bf16.msra.mxu0 %v2900
    %2977 = vmatprep.subr.bf16.mxu0 0
    %2978 = vmatpush1.bf16.msra.mxu0 %v2901
    %2979 = vmatprep.subr.bf16.mxu0 0
    %2980 = vmatpush1.bf16.msra.mxu0 %v2902
    %2981 = vmatprep.subr.bf16.mxu0 0
    %2982 = vmatpush1.bf16.msra.mxu0 %v2903
    %2983 = vmatprep.subr.bf16.mxu0 0
    %2984 = vmatpush1.bf16.msra.mxu0 %v2904
    %2985 = vmatprep.mubr.bf16.mxu0 %v2687
    %2986 = vmatmul.mubr.bf16.gmra.mrb[0].mxu0 %v2686
    %v2987 = vpop.f32.mrb[0].mxu0
    %v2988 = vadd.f32 %v2759, %v2987
    %v2989 = vpop.f32.mrb[0].mxu0
    %v2990 = vpop.f32.mrb[0].mxu0
    %v2991 = vadd.f32 %v2759, %v2990
    %v2992 = vpop.f32.mrb[0].mxu0
    %2993 = vdwg.mxu0
    %2994 = vmatprep.subr.bf16.mxu0 0
    %2995 = vmatpush1.bf16.msra.mxu0 %v2905
    %2996 = vmatprep.subr.bf16.mxu0 0
    %2997 = vmatpush1.bf16.msra.mxu0 %v2906
    %2998 = vmatprep.subr.bf16.mxu0 0
    %2999 = vmatpush1.bf16.msra.mxu0 %v2907
    %3000 = vmatprep.subr.bf16.mxu0 0
    %3001 = vmatpush1.bf16.msra.mxu0 %v2908
    %3002 = vmatprep.subr.bf16.mxu0 0
    %3003 = vmatpush1.bf16.msra.mxu0 %v2909
    %3004 = vmatprep.subr.bf16.mxu0 0
    %3005 = vmatpush1.bf16.msra.mxu0 %v2910
    %3006 = vmatprep.subr.bf16.mxu0 0
    %3007 = vmatpush1.bf16.msra.mxu0 %v2911
    %3008 = vmatprep.subr.bf16.mxu0 0
    %3009 = vmatpush1.bf16.msra.mxu0 %v2912
    %3010 = vmatprep.subr.bf16.mxu0 0
    %3011 = vmatpush1.bf16.msra.mxu0 %v2913
    %3012 = vmatprep.subr.bf16.mxu0 0
    %3013 = vmatpush1.bf16.msra.mxu0 %v2914
    %3014 = vmatprep.subr.bf16.mxu0 0
    %3015 = vmatpush1.bf16.msra.mxu0 %v2915
    %3016 = vmatprep.subr.bf16.mxu0 0
    %3017 = vmatpush1.bf16.msra.mxu0 %v2916
    %3018 = vmatprep.subr.bf16.mxu0 0
    %3019 = vmatpush1.bf16.msra.mxu0 %v2917
    %3020 = vmatprep.subr.bf16.mxu0 0
    %3021 = vmatpush1.bf16.msra.mxu0 %v2918
    %3022 = vmatprep.subr.bf16.mxu0 0
    %3023 = vmatpush1.bf16.msra.mxu0 %v2919
    %3024 = vmatprep.subr.bf16.mxu0 0
    %3025 = vmatpush1.bf16.msra.mxu0 %v2920
    %3026 = vmatprep.mubr.bf16.mxu0 %v2689
    %3027 = vmatmul.mubr.bf16.gmra.mrb[0].mxu0 %v2688
    %v3028 = vpop.f32.mrb[0].mxu0
    %v3029 = vadd.f32 %v2988, %v3028
    %v3030 = vpop.f32.mrb[0].mxu0
    %v3031 = vpop.f32.mrb[0].mxu0
    %v3032 = vadd.f32 %v2991, %v3031
    %v3033 = vpop.f32.mrb[0].mxu0
    %3034 = vdwg.mxu0
    %v3035 = vadd.f32 %v2337, %v3029
    %v3036 = vadd.f32 %v2338, %v3032
    %3037 = vst [vmem:[#allocation11] sm:$0xff] %v3035
    %3038 = vst [vmem:[#allocation11 + $0x8] sm:$0xff] %v3036
    // Predicated region
    $region54: #{multi_head_attention_layer.1} parent=1 // pred_check
      _
    $region55: #{multi_head_attention_layer.1} parent=1 // pred_check_branch
      %3040 = sbr.rel (0) target = $region57
    $region56: #{multi_head_attention_layer.1} parent=1 // pred_region
      %s3042 = ssub.s32 256, 256
      %3043 = vsyncadd [#allocation4], %s3042
      %s3044 = sshll.u32 [#allocation11], 4
      %s3045 = int_to_ptr.vmem [resolvable:$true] %s3044
      %3050 = dma.vmem_to_hbm [thread:$0]  %s3045, 256, %s8, [#allocation4], 128, 128, 8
    $region57: #{multi_head_attention_layer.1} parent=1 // pred_fallthru
      _
    // Predicated region
    $region58: #{multi_head_attention_layer.1} parent=1 // pred_check
      _
    $region59: #{multi_head_attention_layer.1} parent=1 // pred_check_branch
      %3052 = sbr.rel (0) target = $region61
    $region60: #{multi_head_attention_layer.1} parent=1 // pred_region
      %3053 = dma.done [#allocation4], 256
    $region61: #{multi_head_attention_layer.1} parent=1 // pred_fallthru
      _
    %3054 = vsyncpa [#allocation3], 1
    %3055 = vsyncpa [#allocation6], 1
    %3056 = vsyncpa [#allocation9], 1
    %3057 = vsyncpa [#allocation4], 1

</llo_original>
